<compile_context>
chip_gen: v7x
topology: tpu7x:2x2x1
jax: 0.10.0
libtpu: 0.0.40
codegen_flags: <defaults>
</compile_context>

<pallas_src>
import functools

import jax
import jax.numpy as jnp
from jax import lax
from jax.experimental import pallas as pl
from jax.experimental.pallas import tpu as pltpu

WINDOW_SIZE = 11
SIGMA = 1.5
DATA_RANGE = 1.0


def gaussian_1d(window_size=WINDOW_SIZE, sigma=SIGMA):
    coords = jnp.arange(window_size, dtype=jnp.float32) - window_size // 2
    g = jnp.exp(-(coords ** 2) / (2.0 * sigma ** 2))
    return g / jnp.sum(g)


def conv_matrix(n, g, radius):
    # M[a, b] = g[b - a + radius] if |b - a| <= radius else 0  (zero "same" padding)
    idx = jnp.arange(n)
    d = idx[None, :] - idx[:, None] + radius
    valid = (d >= 0) & (d < g.shape[0])
    return jnp.where(valid, g[jnp.clip(d, 0, g.shape[0] - 1)], 0.0).astype(jnp.float32)


def composite_ssl_kernel(o_ref, t_ref, cw_ref, ch_ref, out_ref, *,
                         Bc, T, H, W, w_l1, w_ssim, w_temp, w_tvh, w_tvw):
    n_frames = Bc * T

    o = o_ref[...].astype(jnp.float32)        # (Bc, T, H, W)
    t = t_ref[...].astype(jnp.float32)
    d = o - t

    # ---- L1 / temporal-L1 / TV partial sums, pre-weighted by the static 1/count ----
    acc = w_l1 * jnp.sum(jnp.abs(d))
    if T > 1:
        acc = acc + w_temp * jnp.sum(jnp.abs(d[:, 1:] - d[:, :-1]))
    if H > 1:
        acc = acc + w_tvh * jnp.sum(jnp.abs(o[:, :, 1:, :] - o[:, :, :-1, :]))
    if W > 1:
        acc = acc + w_tvw * jnp.sum(jnp.abs(o[:, :, :, 1:] - o[:, :, :, :-1]))

    # ---- SSIM: separable 11x11 Gaussian blur of (o, t, o*o, t*t, o*t) ----
    # Stack the 5 operands of all Bc*T frames so the W-axis blur is ONE flat matmul.
    o2 = o.reshape(n_frames * H, W)
    t2 = t.reshape(n_frames * H, W)
    stk = jnp.concatenate([o2, t2, o2 * o2, t2 * t2, o2 * t2], axis=0)    # (5FH, W) f32
    yw = jnp.dot(stk, cw_ref[...], preferred_element_type=jnp.float32)    # W-axis blur

    # One minor-dim transpose of the frames so the H-axis blur is also ONE flat matmul
    # (replaces the 5*T per-frame (H,H)@(H,W) matmuls of the previous version).
    ywt = jnp.transpose(yw.reshape(5 * n_frames, H, W), (0, 2, 1))        # (5F, W, H)
    yh = jnp.dot(ywt.reshape(5 * n_frames * W, H), ch_ref[...],
                 preferred_element_type=jnp.float32)                      # (5FW, H)

    # Blurred fields, each in transposed (frame, W, H) layout — layout-irrelevant for
    # the elementwise SSIM map + global sum.
    m = n_frames * W
    mu1, mu2 = yh[0 * m:1 * m], yh[1 * m:2 * m]
    b_oo, b_tt, b_ot = yh[2 * m:3 * m], yh[3 * m:4 * m], yh[4 * m:5 * m]

    c1 = (0.01 * DATA_RANGE) ** 2
    c2 = (0.03 * DATA_RANGE) ** 2
    mu1mu2 = mu1 * mu2
    mu1sq = mu1 * mu1
    mu2sq = mu2 * mu2
    num = (2.0 * mu1mu2 + c1) * (2.0 * (b_ot - mu1mu2) + c2)
    den = (mu1sq + mu2sq + c1) * ((b_oo - mu1sq) + (b_tt - mu2sq) + c2)
    acc = acc - w_ssim * jnp.sum(num * pl.reciprocal(den, approx=True))

    # Per-block partial sum; totals are combined in the wrapper (grid axis is parallel).
    out_ref[...] = jnp.full(out_ref.shape, acc, dtype=out_ref.dtype)


def _pad_to(n, m):
    return ((n + m - 1) // m) * m


def composite_ssl_loss(output, target, *, lambda_l1=1.0, lambda_ssim=1.0,
                       lambda_temporal=0.2, lambda_tv=0.01,
                       clips_per_block=None, vmem_budget_bytes=None):
    B, C, T, H, W = output.shape
    BC = B * C
    # Free reshapes (contiguous leading-dim merge); dtype cast happens in-kernel.
    x = output.reshape(BC, T, H, W)
    y = target.reshape(BC, T, H, W)

    g = gaussian_1d()
    r = WINDOW_SIZE // 2
    cw = conv_matrix(W, g, r).T    # right factor for the W-axis blur       (W, W)
    ch = conv_matrix(H, g, r).T    # right factor for the (transposed) H-axis blur (H, H)

    # ---- choose clips-per-block so each grid step moves a sizeable chunk but the
    # ---- estimated working set still fits a generation-safe VMEM budget.
    if vmem_budget_bytes is None:
        try:
            cap = int(pltpu.get_tpu_info().vmem_capacity_bytes)
        except Exception:
            cap = 64 * 1024 * 1024            # smallest per-core VMEM (v7x)
        vmem_budget_bytes = min(int(cap * 0.6), 48 * 1024 * 1024)

    itemsize = jnp.dtype(output.dtype).itemsize
    frame_pad = _pad_to(H, 8) * _pad_to(W, 128)       # lane/sublane padded frame
    frame_pad_t = _pad_to(W, 8) * _pad_to(H, 128)     # transposed-layout frame
    clip_in = T * frame_pad * itemsize                 # one input clip in VMEM
    clip_f32 = T * max(frame_pad, frame_pad_t) * 4     # one f32 working frame unit

    def est(bc):   # 2 inputs x 2 pipeline buffers + ~28 f32 frame units of temporaries
        return 2 * 2 * bc * clip_in + 28 * bc * clip_f32

    if clips_per_block is None:
        Bc = 1
        for cand in range(1, BC + 1):
            if BC % cand == 0 and est(cand) <= vmem_budget_bytes:
                Bc = cand
    else:
        if BC % int(clips_per_block) != 0:
            raise ValueError("clips_per_block must divide B*C")
        Bc = int(clips_per_block)
    NB = BC // Bc
    vmem_limit = int(min(max(est(Bc) * 1.5, 32 * 1024 * 1024), 100 * 1024 * 1024))

    # Pre-weighted 1/count factors so the kernel emits ready-to-sum partials.
    n_all = BC * T * H * W
    kernel = functools.partial(
        composite_ssl_kernel, Bc=Bc, T=T, H=H, W=W,
        w_l1=lambda_l1 / n_all,
        w_ssim=lambda_ssim / n_all,
        w_temp=(lambda_temporal / (BC * (T - 1) * H * W)) if T > 1 else 0.0,
        w_tvh=(lambda_tv / (BC * T * (H - 1) * W)) if H > 1 else 0.0,
        w_tvw=(lambda_tv / (BC * T * H * (W - 1))) if W > 1 else 0.0)

    partials = pl.pallas_call(
        kernel,
        grid=(NB,),
        in_specs=[
            pl.BlockSpec((Bc, T, H, W), lambda i: (i, 0, 0, 0)),
            pl.BlockSpec((Bc, T, H, W), lambda i: (i, 0, 0, 0)),
            pl.BlockSpec((W, W), lambda i: (0, 0)),   # resident across the grid
            pl.BlockSpec((H, H), lambda i: (0, 0)),   # resident across the grid
        ],
        out_specs=pl.BlockSpec((1, 1, 1), lambda i: (i, 0, 0)),
        out_shape=jax.ShapeDtypeStruct((NB, 1, 1), jnp.float32),
        compiler_params=pltpu.CompilerParams(
            dimension_semantics=("parallel",),
            vmem_limit_bytes=vmem_limit),
    )(x, y, cw, ch)

    # Constant part of lambda_ssim * (1 - mean ssim) is added once here.
    return jnp.sum(partials) + jnp.float32(lambda_ssim)


def reference_loss(output, target, *, lambda_l1=1.0, lambda_ssim=1.0,
                   lambda_temporal=0.2, lambda_tv=0.01):
    """Pure-JAX mirror of the PyTorch module (lax.conv for the SSIM blur)."""
    B, C, T, H, W = output.shape
    g = gaussian_1d()
    window = jnp.outer(g, g)
    w4 = jnp.broadcast_to(window, (C, 1, WINDOW_SIZE, WINDOW_SIZE)).astype(jnp.float32)
    pad = WINDOW_SIZE // 2

    def conv(x):  # x: (B, C, H, W), depthwise conv, zero 'same' padding
        return lax.conv_general_dilated(
            x, w4, window_strides=(1, 1), padding=[(pad, pad), (pad, pad)],
            dimension_numbers=('NCHW', 'OIHW', 'NCHW'),
            feature_group_count=C, precision=lax.Precision.HIGHEST)

    loss_l1 = jnp.mean(jnp.abs(output - target))
    C1 = (0.01 * DATA_RANGE) ** 2
    C2 = (0.03 * DATA_RANGE) ** 2
    ssim_sum = 0.0
    for t in range(T):
        i1 = output[:, :, t]
        i2 = target[:, :, t]
        mu1 = conv(i1)
        mu2 = conv(i2)
        mu1_sq, mu2_sq, mu1_mu2 = mu1 * mu1, mu2 * mu2, mu1 * mu2
        s1 = conv(i1 * i1) - mu1_sq
        s2 = conv(i2 * i2) - mu2_sq
        s12 = conv(i1 * i2) - mu1_mu2
        smap = ((2 * mu1_mu2 + C1) * (2 * s12 + C2)) / (
            (mu1_sq + mu2_sq + C1) * (s1 + s2 + C2))
        ssim_sum += 1.0 - jnp.mean(smap)
    loss_ssim = ssim_sum / T

    td_o = output[:, :, 1:] - output[:, :, :-1]
    td_t = target[:, :, 1:] - target[:, :, :-1]
    loss_temporal = jnp.mean(jnp.abs(td_o - td_t))

    tv_h = jnp.mean(jnp.abs(output[:, :, :, 1:, :] - output[:, :, :, :-1, :]))
    tv_w = jnp.mean(jnp.abs(output[:, :, :, :, 1:] - output[:, :, :, :, :-1]))
    loss_tv = tv_h + tv_w

    return (lambda_l1 * loss_l1 + lambda_ssim * loss_ssim
            + lambda_temporal * loss_temporal + lambda_tv * loss_tv)


if __name__ == "__main__":
    # Shapes consistent with forward(): (B, 1, wind_video, H, W)
    B, C, T, H, W = 4, 1, 4, 16, 16
    key = jax.random.PRNGKey(0)
    k1, k2 = jax.random.split(key)
    output = jax.random.uniform(k1, (B, C, T, H, W), dtype=jnp.float32)
    target = jax.random.uniform(k2, (B, C, T, H, W), dtype=jnp.float32)

    # Multi-block path (grid of 2 steps, parallel axis) and auto-batched path.
    loss_multi = jax.block_until_ready(
        composite_ssl_loss(output, target, clips_per_block=2))
    loss_auto = jax.block_until_ready(composite_ssl_loss(output, target))
    ref = jax.block_until_ready(reference_loss(output, target))

    if not jnp.allclose(loss_multi, ref, rtol=2e-2, atol=2e-2):
        raise AssertionError(f"mismatch (multi-block): pallas={float(loss_multi)} ref={float(ref)}")
    if not jnp.allclose(loss_auto, ref, rtol=2e-2, atol=2e-2):
        raise AssertionError(f"mismatch (auto-block): pallas={float(loss_auto)} ref={float(ref)}")

    print("KERNEL_OK")
</pallas_src>

<mosaic_0001>
module attributes {stable_mosaic.version = 11 : i64} {
  func.func @composite_ssl_kernel(%arg0: i32, %arg1: memref<2x4x16x16xf32, #tpu.memory_space<vmem>>, %arg2: memref<2x4x16x16xf32, #tpu.memory_space<vmem>>, %arg3: memref<16x16xf32, #tpu.memory_space<vmem>>, %arg4: memref<16x16xf32, #tpu.memory_space<vmem>>, %arg5: memref<1x1x1xf32, #tpu.memory_space<vmem>>) attributes {dimension_semantics = [#tpu.dimension_semantics<parallel>], iteration_bounds = array<i64: 2>, scalar_prefetch = 0 : i64, scratch_operands = 0 : i64, tpu.core_type = #tpu.core_type<tc>, window_params = [{transform_indices = @transform_0, window_bounds = array<i64: 2, 4, 16, 16>}, {transform_indices = @transform_1, window_bounds = array<i64: 2, 4, 16, 16>}, {pipeline_mode = #tpu.pipeline_mode<synchronous>, transform_indices = @transform_2, window_bounds = array<i64: 16, 16>}, {pipeline_mode = #tpu.pipeline_mode<synchronous>, transform_indices = @transform_3, window_bounds = array<i64: 16, 16>}, {transform_indices = @transform_4, window_bounds = array<i64: 1, 1, 1>}]} {
    %c0 = arith.constant 0 : index
    %c0_0 = arith.constant 0 : index
    %c0_1 = arith.constant 0 : index
    %c0_2 = arith.constant 0 : index
    %0 = vector.load %arg1[%c0, %c0_0, %c0_1, %c0_2] : memref<2x4x16x16xf32, #tpu.memory_space<vmem>>, vector<2x4x16x16xf32>
    %c0_3 = arith.constant 0 : index
    %c0_4 = arith.constant 0 : index
    %c0_5 = arith.constant 0 : index
    %c0_6 = arith.constant 0 : index
    %1 = vector.load %arg2[%c0_3, %c0_4, %c0_5, %c0_6] : memref<2x4x16x16xf32, #tpu.memory_space<vmem>>, vector<2x4x16x16xf32>
    %2 = arith.subf %0, %1 : vector<2x4x16x16xf32>
    %3 = math.absf %2 : vector<2x4x16x16xf32>
    %4 = vector.shape_cast %3 : vector<2x4x16x16xf32> to vector<1x2x4x16x16xf32>
    %cst = arith.constant dense<0.000000e+00> : vector<1xf32>
    %5 = vector.multi_reduction <add>, %4, %cst [1, 2, 3, 4] : vector<1x2x4x16x16xf32> to vector<1xf32>
    %6 = vector.shape_cast %5 : vector<1xf32> to vector<1x1x1x1x1xf32>
    %7 = vector.extract %6[0, 0, 0, 0, 0] : f32 from vector<1x1x1x1x1xf32>
    %cst_7 = arith.constant 2.44140625E-4 : f32
    %8 = arith.mulf %cst_7, %7 : f32
    %9 = vector.extract_strided_slice %2 {offsets = [0, 1, 0, 0], sizes = [2, 3, 16, 16], strides = [1, 1, 1, 1]} : vector<2x4x16x16xf32> to vector<2x3x16x16xf32>
    %10 = vector.extract_strided_slice %2 {offsets = [0, 0, 0, 0], sizes = [2, 3, 16, 16], strides = [1, 1, 1, 1]} : vector<2x4x16x16xf32> to vector<2x3x16x16xf32>
    %11 = arith.subf %9, %10 : vector<2x3x16x16xf32>
    %12 = math.absf %11 : vector<2x3x16x16xf32>
    %13 = vector.shape_cast %12 : vector<2x3x16x16xf32> to vector<1x2x3x16x16xf32>
    %cst_8 = arith.constant dense<0.000000e+00> : vector<1xf32>
    %14 = vector.multi_reduction <add>, %13, %cst_8 [1, 2, 3, 4] : vector<1x2x3x16x16xf32> to vector<1xf32>
    %15 = vector.shape_cast %14 : vector<1xf32> to vector<1x1x1x1x1xf32>
    %16 = vector.extract %15[0, 0, 0, 0, 0] : f32 from vector<1x1x1x1x1xf32>
    %cst_9 = arith.constant 6.510417E-5 : f32
    %17 = arith.mulf %cst_9, %16 : f32
    %18 = arith.addf %8, %17 : f32
    %19 = vector.extract_strided_slice %0 {offsets = [0, 0, 1, 0], sizes = [2, 4, 15, 16], strides = [1, 1, 1, 1]} : vector<2x4x16x16xf32> to vector<2x4x15x16xf32>
    %20 = vector.extract_strided_slice %0 {offsets = [0, 0, 0, 0], sizes = [2, 4, 15, 16], strides = [1, 1, 1, 1]} : vector<2x4x16x16xf32> to vector<2x4x15x16xf32>
    %21 = arith.subf %19, %20 : vector<2x4x15x16xf32>
    %22 = math.absf %21 : vector<2x4x15x16xf32>
    %23 = vector.shape_cast %22 : vector<2x4x15x16xf32> to vector<1x2x4x15x16xf32>
    %cst_10 = arith.constant dense<0.000000e+00> : vector<1xf32>
    %24 = vector.multi_reduction <add>, %23, %cst_10 [1, 2, 3, 4] : vector<1x2x4x15x16xf32> to vector<1xf32>
    %25 = vector.shape_cast %24 : vector<1xf32> to vector<1x1x1x1x1xf32>
    %26 = vector.extract %25[0, 0, 0, 0, 0] : f32 from vector<1x1x1x1x1xf32>
    %cst_11 = arith.constant 2.60416664E-6 : f32
    %27 = arith.mulf %cst_11, %26 : f32
    %28 = arith.addf %18, %27 : f32
    %29 = vector.extract_strided_slice %0 {offsets = [0, 0, 0, 1], sizes = [2, 4, 16, 15], strides = [1, 1, 1, 1]} : vector<2x4x16x16xf32> to vector<2x4x16x15xf32>
    %30 = vector.extract_strided_slice %0 {offsets = [0, 0, 0, 0], sizes = [2, 4, 16, 15], strides = [1, 1, 1, 1]} : vector<2x4x16x16xf32> to vector<2x4x16x15xf32>
    %31 = arith.subf %29, %30 : vector<2x4x16x15xf32>
    %32 = math.absf %31 : vector<2x4x16x15xf32>
    %33 = vector.shape_cast %32 : vector<2x4x16x15xf32> to vector<1x2x4x16x15xf32>
    %cst_12 = arith.constant dense<0.000000e+00> : vector<1xf32>
    %34 = vector.multi_reduction <add>, %33, %cst_12 [1, 2, 3, 4] : vector<1x2x4x16x15xf32> to vector<1xf32>
    %35 = vector.shape_cast %34 : vector<1xf32> to vector<1x1x1x1x1xf32>
    %36 = vector.extract %35[0, 0, 0, 0, 0] : f32 from vector<1x1x1x1x1xf32>
    %cst_13 = arith.constant 2.60416664E-6 : f32
    %37 = arith.mulf %cst_13, %36 : f32
    %38 = arith.addf %28, %37 : f32
    %39 = vector.shape_cast %0 : vector<2x4x16x16xf32> to vector<128x16xf32>
    %40 = vector.shape_cast %1 : vector<2x4x16x16xf32> to vector<128x16xf32>
    %41 = arith.mulf %39, %39 : vector<128x16xf32>
    %42 = arith.mulf %40, %40 : vector<128x16xf32>
    %43 = arith.mulf %39, %40 : vector<128x16xf32>
    %44 = tpu.concatenate %39, %40, %41, %42, %43 in 0 : vector<128x16xf32>, vector<128x16xf32>, vector<128x16xf32>, vector<128x16xf32>, vector<128x16xf32> -> vector<640x16xf32>
    %c0_14 = arith.constant 0 : index
    %c0_15 = arith.constant 0 : index
    %45 = vector.load %arg3[%c0_14, %c0_15] : memref<16x16xf32, #tpu.memory_space<vmem>>, vector<16x16xf32>
    %cst_16 = arith.constant dense<0.000000e+00> : vector<640x16xf32>
    %46 = tpu.matmul %44, %45, %cst_16 {dimension_numbers = #tpu.dot_dimension_numbers<[1], [0], [0], [1], [0, 0, 1, 1], [], []>} : vector<640x16xf32>, vector<16x16xf32>, vector<640x16xf32> -> vector<640x16xf32>
    %47 = vector.shape_cast %46 : vector<640x16xf32> to vector<40x16x16xf32>
    %48 = tpu.transpose %47, [0, 2, 1] : vector<40x16x16xf32> -> vector<40x16x16xf32>
    %49 = vector.shape_cast %48 : vector<40x16x16xf32> to vector<640x16xf32>
    %c0_17 = arith.constant 0 : index
    %c0_18 = arith.constant 0 : index
    %50 = vector.load %arg4[%c0_17, %c0_18] : memref<16x16xf32, #tpu.memory_space<vmem>>, vector<16x16xf32>
    %cst_19 = arith.constant dense<0.000000e+00> : vector<640x16xf32>
    %51 = tpu.matmul %49, %50, %cst_19 {dimension_numbers = #tpu.dot_dimension_numbers<[1], [0], [0], [1], [0, 0, 1, 1], [], []>} : vector<640x16xf32>, vector<16x16xf32>, vector<640x16xf32> -> vector<640x16xf32>
    %52 = vector.extract_strided_slice %51 {offsets = [0, 0], sizes = [128, 16], strides = [1, 1]} : vector<640x16xf32> to vector<128x16xf32>
    %53 = vector.extract_strided_slice %51 {offsets = [128, 0], sizes = [128, 16], strides = [1, 1]} : vector<640x16xf32> to vector<128x16xf32>
    %54 = vector.extract_strided_slice %51 {offsets = [256, 0], sizes = [128, 16], strides = [1, 1]} : vector<640x16xf32> to vector<128x16xf32>
    %55 = vector.extract_strided_slice %51 {offsets = [384, 0], sizes = [128, 16], strides = [1, 1]} : vector<640x16xf32> to vector<128x16xf32>
    %56 = vector.extract_strided_slice %51 {offsets = [512, 0], sizes = [128, 16], strides = [1, 1]} : vector<640x16xf32> to vector<128x16xf32>
    %57 = arith.mulf %52, %53 : vector<128x16xf32>
    %58 = arith.mulf %52, %52 : vector<128x16xf32>
    %59 = arith.mulf %53, %53 : vector<128x16xf32>
    %cst_20 = arith.constant 2.000000e+00 : f32
    %60 = vector.broadcast %cst_20 : f32 to vector<128x16xf32>
    %61 = arith.mulf %60, %57 : vector<128x16xf32>
    %cst_21 = arith.constant 9.99999974E-5 : f32
    %62 = vector.broadcast %cst_21 : f32 to vector<128x16xf32>
    %63 = arith.addf %61, %62 : vector<128x16xf32>
    %64 = arith.subf %56, %57 : vector<128x16xf32>
    %cst_22 = arith.constant 2.000000e+00 : f32
    %65 = vector.broadcast %cst_22 : f32 to vector<128x16xf32>
    %66 = arith.mulf %65, %64 : vector<128x16xf32>
    %cst_23 = arith.constant 8.99999984E-4 : f32
    %67 = vector.broadcast %cst_23 : f32 to vector<128x16xf32>
    %68 = arith.addf %66, %67 : vector<128x16xf32>
    %69 = arith.mulf %63, %68 : vector<128x16xf32>
    %70 = arith.addf %58, %59 : vector<128x16xf32>
    %cst_24 = arith.constant 9.99999974E-5 : f32
    %71 = vector.broadcast %cst_24 : f32 to vector<128x16xf32>
    %72 = arith.addf %70, %71 : vector<128x16xf32>
    %73 = arith.subf %54, %58 : vector<128x16xf32>
    %74 = arith.subf %55, %59 : vector<128x16xf32>
    %75 = arith.addf %73, %74 : vector<128x16xf32>
    %cst_25 = arith.constant 8.99999984E-4 : f32
    %76 = vector.broadcast %cst_25 : f32 to vector<128x16xf32>
    %77 = arith.addf %75, %76 : vector<128x16xf32>
    %78 = arith.mulf %72, %77 : vector<128x16xf32>
    %79 = tpu.reciprocal %78 {approx = true} : vector<128x16xf32> -> vector<128x16xf32>
    %80 = arith.mulf %69, %79 : vector<128x16xf32>
    %81 = vector.shape_cast %80 : vector<128x16xf32> to vector<1x128x16xf32>
    %cst_26 = arith.constant dense<0.000000e+00> : vector<1xf32>
    %82 = vector.multi_reduction <add>, %81, %cst_26 [1, 2] : vector<1x128x16xf32> to vector<1xf32>
    %83 = vector.shape_cast %82 : vector<1xf32> to vector<1x1x1xf32>
    %84 = vector.extract %83[0, 0, 0] : f32 from vector<1x1x1xf32>
    %cst_27 = arith.constant 2.44140625E-4 : f32
    %85 = arith.mulf %cst_27, %84 : f32
    %86 = arith.subf %38, %85 : f32
    %87 = vector.broadcast %86 : f32 to vector<1x1x1xf32>
    %c0_28 = arith.constant 0 : index
    %c0_29 = arith.constant 0 : index
    %c0_30 = arith.constant 0 : index
    %88 = vector.load %arg5[%c0_28, %c0_29, %c0_30] : memref<1x1x1xf32, #tpu.memory_space<vmem>>, vector<1x1x1xf32>
    tpu.vector_store %arg5[%c0_28, %c0_29, %c0_30], %87 {strides = array<i32>} : memref<1x1x1xf32, #tpu.memory_space<vmem>>, vector<1x1x1xf32>,
    return
  }
  func.func @transform_0(%arg0: i32) -> (i32, i32, i32, i32) {
    %c0_i32 = arith.constant 0 : i32
    %c0_i32_0 = arith.constant 0 : i32
    %c0_i32_1 = arith.constant 0 : i32
    %c0_i32_2 = arith.constant 0 : i32
    return %arg0, %c0_i32, %c0_i32_0, %c0_i32_1 : i32, i32, i32, i32
  }
  func.func @transform_1(%arg0: i32) -> (i32, i32, i32, i32) {
    %c0_i32 = arith.constant 0 : i32
    %c0_i32_0 = arith.constant 0 : i32
    %c0_i32_1 = arith.constant 0 : i32
    %c0_i32_2 = arith.constant 0 : i32
    return %arg0, %c0_i32, %c0_i32_0, %c0_i32_1 : i32, i32, i32, i32
  }
  func.func @transform_2(%arg0: i32) -> (i32, i32) {
    %c0_i32 = arith.constant 0 : i32
    %c0_i32_0 = arith.constant 0 : i32
    %c0_i32_1 = arith.constant 0 : i32
    return %c0_i32, %c0_i32_0 : i32, i32
  }
  func.func @transform_3(%arg0: i32) -> (i32, i32) {
    %c0_i32 = arith.constant 0 : i32
    %c0_i32_0 = arith.constant 0 : i32
    %c0_i32_1 = arith.constant 0 : i32
    return %c0_i32, %c0_i32_0 : i32, i32
  }
  func.func @transform_4(%arg0: i32) -> (i32, i32, i32) {
    %c0_i32 = arith.constant 0 : i32
    %c0_i32_0 = arith.constant 0 : i32
    %c0_i32_1 = arith.constant 0 : i32
    return %arg0, %c0_i32, %c0_i32_0 : i32, i32, i32
  }
}

</mosaic_0001>

<llo_original>
// kernel: tpu_custom_call.1
$region0: #{tpu_custom_call.1}
  #allocation0 [shape = 'u32[]', space=smem, size = 0x4, offset = 0x4, fixed_abs, tag = 'smem constant byte address 0x4 - core index']
  #allocation1 [shape = 'u32[144,128]{1,0:T(1,128)}', space=vmem, size = 0x12000, scoped, tag = 'internal scratch']
  %s0 = inlined_call_operand.hbm [shape: f32[4,4,16,16], index: 0, kind: input, shape index: {}]
  %s1 = inlined_call_operand.hbm [shape: f32[4,4,16,16], index: 1, kind: input, shape index: {}]
  %s2 = inlined_call_operand.hbm [shape: f32[16,16], index: 2, kind: input, shape index: {}]
  %s3 = inlined_call_operand.hbm [shape: f32[16,16], index: 3, kind: input, shape index: {}]
  %s4 = inlined_call_operand.vmem [shape: f32[2,1,1], index: 4, kind: output, shape index: {}]
  %s5 = sld [smem:[#allocation0]]
  $region65: #{tpu_custom_call.1} parent=0
    _
  %s7 = ssub.s32 1, %s5
  %s8 = scalar_select 0, %s7, %s5
  $region1: #{tpu_custom_call.1} parent=0
    #allocation2 [shape = 'u8[131072]{0}', space=vmem, size = 0x20000, scoped, tag = 'input window, operand 0']
    #allocation3 [shape = 's32[2]{0}', space=sflag, size = 0x8, scoped, tag = 'scoped memory for tpu_custom_call.1']
    #allocation4 [shape = 'u8[131072]{0}', space=vmem, size = 0x20000, scoped, tag = 'input window, operand 1']
    #allocation5 [shape = 's32[2]{0}', space=sflag, size = 0x8, scoped, tag = 'scoped memory for tpu_custom_call.1']
    #allocation6 [shape = 'u8[8192]{0}', space=vmem, size = 0x2000, scoped, tag = 'input window, operand 2, single buffered']
    #allocation7 [shape = 'u8[8192]{0}', space=vmem, size = 0x2000, scoped, tag = 'input window, operand 3, single buffered']
    #allocation8 [shape = 's32[1]{0}', space=sflag, size = 0x4, scoped, tag = 'scoped memory for tpu_custom_call.1']
    %9 = vsyncpa [#allocation3], 0
    %s10 = scalar_lea.sflag [#allocation3], 1
    %11 = vsyncpa %s10, 0
    %12 = vsyncpa [#allocation5], 0
    %s13 = scalar_lea.sflag [#allocation5], 1
    %14 = vsyncpa %s13, 0
    %15 = vsyncpa [#allocation8], 0
    loop: start=0, step=1, limit=4
    $region2: #{tpu_custom_call.1} parent=1 // loop_pre_header
      _
    $region3: #{tpu_custom_call.1} parent=1 // loop_header
      %s17 = sphi 0, %s21
      %p18 = scmp.ge.s32.totalorder %s17, 4
      %s27 = sphi 0, %s29
      %s30 = sphi 0, %s27
      %s31 = sphi 0, %s30
      %s47 = sphi 0, %s31
      %s53 = sphi 0, %s55
      %s56 = sphi 0, %s53
      %s57 = sphi 0, %s56
      %s73 = sphi 0, %s57
      %s77 = sphi 0, %s77
      %s79 = sphi 0, %s77
      %s80 = sphi 0, %s79
      %s94 = sphi 0, %s80
      %s98 = sphi 0, %s98
      %s100 = sphi 0, %s98
      %s101 = sphi 0, %s100
      %s115 = sphi 0, %s101
      %s121 = sphi 0, %s123
      %s124 = sphi 0, %s121
      %s125 = sphi 0, %s124
      %s141 = sphi 0, %s125
    $region4: #{tpu_custom_call.1} parent=1 // loop_header_branch
      %20 = sbr.rel (%p18) target = $region8
    $region5: #{tpu_custom_call.1} parent=1 // loop_body
      %s22 = ssub.s32 %s17, 1
      %s23 = ssub.s32 %s17, 2
      %s24 = sadd.s32 %s17, 1
      %s25 = ssub.s32 %s17, %s24
      %p26 = scmp.eq.s32.totalorder %s25, 0
      %s28 = sadd.s32 %s27, 1
      %s29 = scalar_select %p26, %s27, %s28
      %p32 = pneg %p26
      %p33 = scmp.eq.s32.totalorder %s17, 1
      %p34 = por %p32, %p33
      %p35 = scmp.ne.s32.totalorder %s27, %s30
      %p36 = scmp.eq.s32.totalorder %s17, 0
      %p37 = por %p35, %p36
      %p38 = scmp.ne.s32.totalorder %s27, %s30
      %p39 = scmp.eq.s32.totalorder %s22, 1
      %p40 = por %p38, %p39
      %p41 = scmp.ne.s32.totalorder %s30, %s31
      %p42 = scmp.eq.s32.totalorder %s22, 0
      %p43 = por %p41, %p42
      %p44 = scmp.ne.s32.totalorder %s30, %s31
      %p45 = scmp.eq.s32.totalorder %s23, 1
      %p46 = por %p44, %p45
      %p48 = scmp.ne.s32.totalorder %s31, %s47
      %p49 = scmp.eq.s32.totalorder %s23, 0
      %p50 = por %p48, %p49
      %s51 = ssub.s32 %s17, %s24
      %p52 = scmp.eq.s32.totalorder %s51, 0
      %s54 = sadd.s32 %s53, 1
      %s55 = scalar_select %p52, %s53, %s54
      %p58 = pneg %p52
      %p59 = scmp.eq.s32.totalorder %s17, 1
      %p60 = por %p58, %p59
      %p61 = scmp.ne.s32.totalorder %s53, %s56
      %p62 = scmp.eq.s32.totalorder %s17, 0
      %p63 = por %p61, %p62
      %p64 = scmp.ne.s32.totalorder %s53, %s56
      %p65 = scmp.eq.s32.totalorder %s22, 1
      %p66 = por %p64, %p65
      %p67 = scmp.ne.s32.totalorder %s56, %s57
      %p68 = scmp.eq.s32.totalorder %s22, 0
      %p69 = por %p67, %p68
      %p70 = scmp.ne.s32.totalorder %s56, %s57
      %p71 = scmp.eq.s32.totalorder %s23, 1
      %p72 = por %p70, %p71
      %p74 = scmp.ne.s32.totalorder %s57, %s73
      %p75 = scmp.eq.s32.totalorder %s23, 0
      %p76 = por %p74, %p75
      %s78 = sadd.s32 %s77, 1
      %p81 = scmp.eq.s32.totalorder %s17, 1
      %p82 = scmp.ne.s32.totalorder %s77, %s79
      %p83 = scmp.eq.s32.totalorder %s17, 0
      %p84 = por %p82, %p83
      %p85 = scmp.ne.s32.totalorder %s77, %s79
      %p86 = scmp.eq.s32.totalorder %s22, 1
      %p87 = por %p85, %p86
      %p88 = scmp.ne.s32.totalorder %s79, %s80
      %p89 = scmp.eq.s32.totalorder %s22, 0
      %p90 = por %p88, %p89
      %p91 = scmp.ne.s32.totalorder %s79, %s80
      %p92 = scmp.eq.s32.totalorder %s23, 1
      %p93 = por %p91, %p92
      %p95 = scmp.ne.s32.totalorder %s80, %s94
      %p96 = scmp.eq.s32.totalorder %s23, 0
      %p97 = por %p95, %p96
      %s99 = sadd.s32 %s98, 1
      %p102 = scmp.eq.s32.totalorder %s17, 1
      %p103 = scmp.ne.s32.totalorder %s98, %s100
      %p104 = scmp.eq.s32.totalorder %s17, 0
      %p105 = por %p103, %p104
      %p106 = scmp.ne.s32.totalorder %s98, %s100
      %p107 = scmp.eq.s32.totalorder %s22, 1
      %p108 = por %p106, %p107
      %p109 = scmp.ne.s32.totalorder %s100, %s101
      %p110 = scmp.eq.s32.totalorder %s22, 0
      %p111 = por %p109, %p110
      %p112 = scmp.ne.s32.totalorder %s100, %s101
      %p113 = scmp.eq.s32.totalorder %s23, 1
      %p114 = por %p112, %p113
      %p116 = scmp.ne.s32.totalorder %s101, %s115
      %p117 = scmp.eq.s32.totalorder %s23, 0
      %p118 = por %p116, %p117
      %s119 = ssub.s32 %s17, %s24
      %p120 = scmp.eq.s32.totalorder %s119, 0
      %s122 = sadd.s32 %s121, 1
      %s123 = scalar_select %p120, %s121, %s122
      %p126 = pneg %p120
      %p127 = scmp.eq.s32.totalorder %s17, 1
      %p128 = por %p126, %p127
      %p129 = scmp.ne.s32.totalorder %s121, %s124
      %p130 = scmp.eq.s32.totalorder %s17, 0
      %p131 = por %p129, %p130
      %p132 = scmp.ne.s32.totalorder %s121, %s124
      %p133 = scmp.eq.s32.totalorder %s22, 1
      %p134 = por %p132, %p133
      %p135 = scmp.ne.s32.totalorder %s124, %s125
      %p136 = scmp.eq.s32.totalorder %s22, 0
      %p137 = por %p135, %p136
      %p138 = scmp.ne.s32.totalorder %s124, %s125
      %p139 = scmp.eq.s32.totalorder %s23, 1
      %p140 = por %p138, %p139
      %p142 = scmp.ne.s32.totalorder %s125, %s141
      %p143 = scmp.eq.s32.totalorder %s23, 0
      %p144 = por %p142, %p143
      %p145 = scmp.le.s32.totalorder 1, %s17
      %p146 = scmp.lt.s32.totalorder %s17, 3
      %p147 = pnand %p145, %p146
      %p148 = pneg %p147
      // Predicated region
      $region9: #{tpu_custom_call.1} parent=5 // pred_check
        _
      $region10: #{tpu_custom_call.1} parent=5 // pred_check_branch
        %150 = sbr.rel (%p147) target = $region12
      $region11: #{tpu_custom_call.1} parent=5 // pred_region
        %s151 = ssub.s32 %s17, 1
        // Predicated region
        $region13: #{tpu_custom_call.1} parent=11 // pred_check
          %p152 = pneg %p90
        $region14: #{tpu_custom_call.1} parent=11 // pred_check_branch
          %154 = sbr.rel (%p152) target = $region16
        $region15: #{tpu_custom_call.1} parent=11 // pred_region
          %s156 = ssub.s32 256, 256
          %157 = vsyncadd [#allocation5], %s156
          %s158 = sshll.u32 [#allocation6], 4
          %s159 = int_to_ptr.vmem [resolvable:$true] %s158
          %164 = dma.hbm_to_vmem [thread:$0]  %s2, 256, %s159, [#allocation5], 128, 128, 8
        $region16: #{tpu_custom_call.1} parent=11 // pred_fallthru
          _
        // Predicated region
        $region17: #{tpu_custom_call.1} parent=11 // pred_check
          %p165 = pneg %p111
        $region18: #{tpu_custom_call.1} parent=11 // pred_check_branch
          %167 = sbr.rel (%p165) target = $region20
        $region19: #{tpu_custom_call.1} parent=11 // pred_region
          %s169 = ssub.s32 256, 256
          %170 = vsyncadd [#allocation8], %s169
          %s171 = sshll.u32 [#allocation7], 4
          %s172 = int_to_ptr.vmem [resolvable:$true] %s171
          %177 = dma.hbm_to_vmem [thread:$0]  %s3, 256, %s172, [#allocation8], 128, 128, 8
        $region20: #{tpu_custom_call.1} parent=11 // pred_fallthru
          _
      $region12: #{tpu_custom_call.1} parent=5 // pred_fallthru
        _
      %p178 = scmp.lt.s32.totalorder %s17, 2
      // Predicated region
      $region21: #{tpu_custom_call.1} parent=5 // pred_check
        %p179 = pneg %p178
      $region22: #{tpu_custom_call.1} parent=5 // pred_check_branch
        %181 = sbr.rel (%p179) target = $region24
      $region23: #{tpu_custom_call.1} parent=5 // pred_region
        // Predicated region
        $region25: #{tpu_custom_call.1} parent=23 // pred_check
          %p182 = pneg %p37
        $region26: #{tpu_custom_call.1} parent=23 // pred_check_branch
          %184 = sbr.rel (%p182) target = $region28
        $region27: #{tpu_custom_call.1} parent=23 // pred_region
          %s185 = sand.u32 %s27, 1
          %s186 = scalar_lea.sflag [#allocation3], %s185
          %s187 = sand.u32 %s27, 1
          %s188 = smul.addr %s187, 128
          %s189 = scalar_lea.vmem [#allocation2], %s188
          %s190 = smul.u32 2, %s17
          %s192 = ssub.s32 2048, 2048
          %193 = vsyncadd %s186, %s192
          %s194 = smul.addr %s190, 8
          %s195 = smul.addr %s194, 128
          %s196 = scalar_lea.hbm %s0, %s195
          %s197 = sshll.u32 %s189, 4
          %s198 = int_to_ptr.vmem [resolvable:$true] %s197
          %203 = dma.hbm_to_vmem [thread:$0]  %s196, 2048, %s198, %s186, 128, 128, 8
        $region28: #{tpu_custom_call.1} parent=23 // pred_fallthru
          _
        // Predicated region
        $region29: #{tpu_custom_call.1} parent=23 // pred_check
          %p204 = pneg %p63
        $region30: #{tpu_custom_call.1} parent=23 // pred_check_branch
          %206 = sbr.rel (%p204) target = $region32
        $region31: #{tpu_custom_call.1} parent=23 // pred_region
          %s207 = sand.u32 %s17, 1
          %s208 = scalar_lea.sflag [#allocation5], %s207
          %s209 = sand.u32 %s53, 1
          %s210 = smul.addr %s209, 128
          %s211 = scalar_lea.vmem [#allocation4], %s210
          %s212 = smul.u32 2, %s17
          %s214 = ssub.s32 2048, 2048
          %215 = vsyncadd %s208, %s214
          %s216 = smul.addr %s212, 8
          %s217 = smul.addr %s216, 128
          %s218 = scalar_lea.hbm %s1, %s217
          %s219 = sshll.u32 %s211, 4
          %s220 = int_to_ptr.vmem [resolvable:$true] %s219
          %225 = dma.hbm_to_vmem [thread:$0]  %s218, 2048, %s220, %s208, 128, 128, 8
        $region32: #{tpu_custom_call.1} parent=23 // pred_fallthru
          _
      $region24: #{tpu_custom_call.1} parent=5 // pred_fallthru
        _
      %p226 = scmp.le.s32.totalorder 1, %s17
      %p227 = scmp.lt.s32.totalorder %s17, 3
      %p228 = pnand %p226, %p227
      %p229 = pneg %p228
      // Predicated region
      $region33: #{tpu_custom_call.1} parent=5 // pred_check
        _
      $region34: #{tpu_custom_call.1} parent=5 // pred_check_branch
        %231 = sbr.rel (%p228) target = $region36
      $region35: #{tpu_custom_call.1} parent=5 // pred_region
        %s232 = ssub.s32 %s17, 1
        %s233 = sand.u32 %s30, 1
        %s234 = scalar_lea.sflag [#allocation3], %s233
        %s235 = sand.u32 %s30, 1
        %s236 = smul.addr %s235, 128
        %s237 = scalar_lea.vmem [#allocation2], %s236
        // Predicated region
        $region37: #{tpu_custom_call.1} parent=35 // pred_check
          %p238 = pneg %p43
        $region38: #{tpu_custom_call.1} parent=35 // pred_check_branch
          %240 = sbr.rel (%p238) target = $region40
        $region39: #{tpu_custom_call.1} parent=35 // pred_region
          %241 = dma.done %s234, 2048
        $region40: #{tpu_custom_call.1} parent=35 // pred_fallthru
          _
        %s242 = sand.u32 %s22, 1
        %s243 = scalar_lea.sflag [#allocation5], %s242
        %s244 = sand.u32 %s56, 1
        %s245 = smul.addr %s244, 128
        %s246 = scalar_lea.vmem [#allocation4], %s245
        // Predicated region
        $region41: #{tpu_custom_call.1} parent=35 // pred_check
          %p247 = pneg %p69
        $region42: #{tpu_custom_call.1} parent=35 // pred_check_branch
          %249 = sbr.rel (%p247) target = $region44
        $region43: #{tpu_custom_call.1} parent=35 // pred_region
          %250 = dma.done %s243, 2048
        $region44: #{tpu_custom_call.1} parent=35 // pred_fallthru
          _
        // Predicated region
        $region45: #{tpu_custom_call.1} parent=35 // pred_check
          %p251 = pneg %p90
        $region46: #{tpu_custom_call.1} parent=35 // pred_check_branch
          %253 = sbr.rel (%p251) target = $region48
        $region47: #{tpu_custom_call.1} parent=35 // pred_region
          %254 = dma.done [#allocation5], 256
        $region48: #{tpu_custom_call.1} parent=35 // pred_fallthru
          _
        // Predicated region
        $region49: #{tpu_custom_call.1} parent=35 // pred_check
          %p255 = pneg %p111
        $region50: #{tpu_custom_call.1} parent=35 // pred_check_branch
          %257 = sbr.rel (%p255) target = $region52
        $region51: #{tpu_custom_call.1} parent=35 // pred_region
          %258 = dma.done [#allocation8], 256
        $region52: #{tpu_custom_call.1} parent=35 // pred_fallthru
          _
        %s259 = sand.u32 %s30, 1
        %s260 = scalar_lea.sflag [#allocation3], %s259
        %s261 = sand.u32 %s30, 1
        %s262 = smul.addr %s261, 128
        %s263 = scalar_lea.vmem [#allocation2], %s262
        %p264 = pneg %p43
        %p265 = pneg %p40
        %s266 = sand.u32 %s22, 1
        %s267 = scalar_lea.sflag [#allocation5], %s266
        %s268 = sand.u32 %s56, 1
        %s269 = smul.addr %s268, 128
        %s270 = scalar_lea.vmem [#allocation4], %s269
        %p271 = pneg %p69
        %p272 = pneg %p66
        %p273 = pneg %p90
        %p274 = pneg %p87
        %p275 = pneg %p111
        %p276 = pneg %p108
        %p277 = pneg %p137
        %p278 = pneg %p134
        %p279 = scmp.lt.s32.totalorder %s22, 1
        %s280 = scalar_select %p279, %s22, 1
        %s281 = scalar_lea.vmem %s4, %s280
        %s282 = smul.u32 2, %s22
        %s283 = smul.u32 2, %s22
        %p284 = scmp.lt.s32.totalorder %s22, 1
        %s285 = scalar_select %p284, %s22, 1
        %s286 = scalar_lea.vmem %s4, %s285
        %v287 = vld [vmem:[%s237] sm:$0xff]
        %v288 = vld [vmem:[%s237 + $0x8] sm:$0xff]
        %v289 = vld [vmem:[%s237 + $0x10] sm:$0xff]
        %v290 = vld [vmem:[%s237 + $0x18] sm:$0xff]
        %v291 = vld [vmem:[%s237 + $0x20] sm:$0xff]
        %v292 = vld [vmem:[%s237 + $0x28] sm:$0xff]
        %v293 = vld [vmem:[%s237 + $0x30] sm:$0xff]
        %v294 = vld [vmem:[%s237 + $0x38] sm:$0xff]
        %v295 = vld [vmem:[%s237 + $0x40] sm:$0xff]
        %v296 = vld [vmem:[%s237 + $0x48] sm:$0xff]
        %v297 = vld [vmem:[%s237 + $0x50] sm:$0xff]
        %v298 = vld [vmem:[%s237 + $0x58] sm:$0xff]
        %v299 = vld [vmem:[%s237 + $0x60] sm:$0xff]
        %v300 = vld [vmem:[%s237 + $0x68] sm:$0xff]
        %v301 = vld [vmem:[%s237 + $0x70] sm:$0xff]
        %v302 = vld [vmem:[%s237 + $0x78] sm:$0xff]
        %v303 = vld [vmem:[%s246] sm:$0xff]
        %v304 = vld [vmem:[%s246 + $0x8] sm:$0xff]
        %v305 = vld [vmem:[%s246 + $0x10] sm:$0xff]
        %v306 = vld [vmem:[%s246 + $0x18] sm:$0xff]
        %v307 = vld [vmem:[%s246 + $0x20] sm:$0xff]
        %v308 = vld [vmem:[%s246 + $0x28] sm:$0xff]
        %v309 = vld [vmem:[%s246 + $0x30] sm:$0xff]
        %v310 = vld [vmem:[%s246 + $0x38] sm:$0xff]
        %v311 = vld [vmem:[%s246 + $0x40] sm:$0xff]
        %v312 = vld [vmem:[%s246 + $0x48] sm:$0xff]
        %v313 = vld [vmem:[%s246 + $0x50] sm:$0xff]
        %v314 = vld [vmem:[%s246 + $0x58] sm:$0xff]
        %v315 = vld [vmem:[%s246 + $0x60] sm:$0xff]
        %v316 = vld [vmem:[%s246 + $0x68] sm:$0xff]
        %v317 = vld [vmem:[%s246 + $0x70] sm:$0xff]
        %v318 = vld [vmem:[%s246 + $0x78] sm:$0xff]
        %v319 = vsub.f32 %v287, %v303
        %v320 = vsub.f32 %v288, %v304
        %v321 = vsub.f32 %v289, %v305
        %v322 = vsub.f32 %v290, %v306
        %v323 = vsub.f32 %v291, %v307
        %v324 = vsub.f32 %v292, %v308
        %v325 = vsub.f32 %v293, %v309
        %v326 = vsub.f32 %v294, %v310
        %v327 = vsub.f32 %v295, %v311
        %v328 = vsub.f32 %v296, %v312
        %v329 = vsub.f32 %v297, %v313
        %v330 = vsub.f32 %v298, %v314
        %v331 = vsub.f32 %v299, %v315
        %v332 = vsub.f32 %v300, %v316
        %v333 = vsub.f32 %v301, %v317
        %v334 = vsub.f32 %v302, %v318
        %v335 = vand.u32 2147483647, %v319
        %v336 = vand.u32 2147483647, %v320
        %v337 = vand.u32 2147483647, %v321
        %v338 = vand.u32 2147483647, %v322
        %v339 = vand.u32 2147483647, %v323
        %v340 = vand.u32 2147483647, %v324
        %v341 = vand.u32 2147483647, %v325
        %v342 = vand.u32 2147483647, %v326
        %v343 = vand.u32 2147483647, %v327
        %v344 = vand.u32 2147483647, %v328
        %v345 = vand.u32 2147483647, %v329
        %v346 = vand.u32 2147483647, %v330
        %v347 = vand.u32 2147483647, %v331
        %v348 = vand.u32 2147483647, %v332
        %v349 = vand.u32 2147483647, %v333
        %v350 = vand.u32 2147483647, %v334
        %vm351 = vcmask 130048
        %v352 = vsel %vm351, %v335, 0.0
        %v353 = vsel %vm351, %v336, 0.0
        %v354 = vadd.f32 %v352, %v353
        %v355 = vsel %vm351, %v337, 0.0
        %v356 = vadd.f32 %v354, %v355
        %v357 = vsel %vm351, %v338, 0.0
        %v358 = vadd.f32 %v356, %v357
        %v359 = vsel %vm351, %v339, 0.0
        %v360 = vadd.f32 %v358, %v359
        %v361 = vsel %vm351, %v340, 0.0
        %v362 = vadd.f32 %v360, %v361
        %v363 = vsel %vm351, %v341, 0.0
        %v364 = vadd.f32 %v362, %v363
        %v365 = vsel %vm351, %v342, 0.0
        %v366 = vadd.f32 %v364, %v365
        %v367 = vsel %vm351, %v343, 0.0
        %v368 = vadd.f32 %v366, %v367
        %v369 = vsel %vm351, %v344, 0.0
        %v370 = vadd.f32 %v368, %v369
        %v371 = vsel %vm351, %v345, 0.0
        %v372 = vadd.f32 %v370, %v371
        %v373 = vsel %vm351, %v346, 0.0
        %v374 = vadd.f32 %v372, %v373
        %v375 = vsel %vm351, %v347, 0.0
        %v376 = vadd.f32 %v374, %v375
        %v377 = vsel %vm351, %v348, 0.0
        %v378 = vadd.f32 %v376, %v377
        %v379 = vsel %vm351, %v349, 0.0
        %v380 = vadd.f32 %v378, %v379
        %v381 = vsel %vm351, %v350, 0.0
        %v382 = vadd.f32 %v380, %v381
        %383 = vadd.xlane.f32.xlu0 %v382
        %v384 = vpop.xlane.xlu0 %383
        %v385 = vrot.slane %v384, 4
        %v386 = vadd.f32 %v384, %v385
        %v387 = vrot.slane %v386, 2
        %v388 = vadd.f32 %v386, %v387
        %v389 = vrot.slane %v388, 1
        %v390 = vadd.f32 %v388, %v389
        %s391 = vtos %v390
        %s392 = smul.f32 %s391, 0.00024414063
        %v393 = vsub.f32 %v321, %v319
        %v394 = vsub.f32 %v322, %v320
        %v395 = vsub.f32 %v323, %v321
        %v396 = vsub.f32 %v324, %v322
        %v397 = vsub.f32 %v325, %v323
        %v398 = vsub.f32 %v326, %v324
        %v399 = vsub.f32 %v329, %v327
        %v400 = vsub.f32 %v330, %v328
        %v401 = vsub.f32 %v331, %v329
        %v402 = vsub.f32 %v332, %v330
        %v403 = vsub.f32 %v333, %v331
        %v404 = vsub.f32 %v334, %v332
        %v405 = vand.u32 2147483647, %v393
        %v406 = vand.u32 2147483647, %v394
        %v407 = vand.u32 2147483647, %v395
        %v408 = vand.u32 2147483647, %v396
        %v409 = vand.u32 2147483647, %v397
        %v410 = vand.u32 2147483647, %v398
        %v411 = vand.u32 2147483647, %v399
        %v412 = vand.u32 2147483647, %v400
        %v413 = vand.u32 2147483647, %v401
        %v414 = vand.u32 2147483647, %v402
        %v415 = vand.u32 2147483647, %v403
        %v416 = vand.u32 2147483647, %v404
        %v417 = vsel %vm351, %v405, 0.0
        %v418 = vsel %vm351, %v406, 0.0
        %v419 = vadd.f32 %v417, %v418
        %v420 = vsel %vm351, %v407, 0.0
        %v421 = vadd.f32 %v419, %v420
        %v422 = vsel %vm351, %v408, 0.0
        %v423 = vadd.f32 %v421, %v422
        %v424 = vsel %vm351, %v409, 0.0
        %v425 = vadd.f32 %v423, %v424
        %v426 = vsel %vm351, %v410, 0.0
        %v427 = vadd.f32 %v425, %v426
        %v428 = vsel %vm351, %v411, 0.0
        %v429 = vadd.f32 %v427, %v428
        %v430 = vsel %vm351, %v412, 0.0
        %v431 = vadd.f32 %v429, %v430
        %v432 = vsel %vm351, %v413, 0.0
        %v433 = vadd.f32 %v431, %v432
        %v434 = vsel %vm351, %v414, 0.0
        %v435 = vadd.f32 %v433, %v434
        %v436 = vsel %vm351, %v415, 0.0
        %v437 = vadd.f32 %v435, %v436
        %v438 = vsel %vm351, %v416, 0.0
        %v439 = vadd.f32 %v437, %v438
        %440 = vadd.xlane.f32.xlu0 %v439
        %v441 = vpop.xlane.xlu0 %440
        %v442 = vrot.slane %v441, 4
        %v443 = vadd.f32 %v441, %v442
        %v444 = vrot.slane %v443, 2
        %v445 = vadd.f32 %v443, %v444
        %v446 = vrot.slane %v445, 1
        %v447 = vadd.f32 %v445, %v446
        %s448 = vtos %v447
        %s449 = smul.f32 %s448, 6.510417e-05
        %s450 = sadd.f32 %s392, %s449
        %vm467 = vcmask 1040384
        %v468 = vrot.slane %v287, 7
        %v469 = vrot.slane %v288, 7
        %v470 = vsel %vm467, %v468, %v469
        %v471 = vrot.slane %v289, 7
        %v472 = vrot.slane %v290, 7
        %v473 = vsel %vm467, %v471, %v472
        %v474 = vrot.slane %v291, 7
        %v475 = vrot.slane %v292, 7
        %v476 = vsel %vm467, %v474, %v475
        %v477 = vrot.slane %v293, 7
        %v478 = vrot.slane %v294, 7
        %v479 = vsel %vm467, %v477, %v478
        %v480 = vrot.slane %v295, 7
        %v481 = vrot.slane %v296, 7
        %v482 = vsel %vm467, %v480, %v481
        %v483 = vrot.slane %v297, 7
        %v484 = vrot.slane %v298, 7
        %v485 = vsel %vm467, %v483, %v484
        %v486 = vrot.slane %v299, 7
        %v487 = vrot.slane %v300, 7
        %v488 = vsel %vm467, %v486, %v487
        %v489 = vrot.slane %v301, 7
        %v490 = vrot.slane %v302, 7
        %v491 = vsel %vm467, %v489, %v490
        %v508 = vsub.f32 %v287, %v468
        %v509 = vsub.f32 %v288, %v470
        %v510 = vsub.f32 %v289, %v471
        %v511 = vsub.f32 %v290, %v473
        %v512 = vsub.f32 %v291, %v474
        %v513 = vsub.f32 %v292, %v476
        %v514 = vsub.f32 %v293, %v477
        %v515 = vsub.f32 %v294, %v479
        %v516 = vsub.f32 %v295, %v480
        %v517 = vsub.f32 %v296, %v482
        %v518 = vsub.f32 %v297, %v483
        %v519 = vsub.f32 %v298, %v485
        %v520 = vsub.f32 %v299, %v486
        %v521 = vsub.f32 %v300, %v488
        %v522 = vsub.f32 %v301, %v489
        %v523 = vsub.f32 %v302, %v491
        %v524 = vand.u32 2147483647, %v508
        %v525 = vand.u32 2147483647, %v509
        %v526 = vand.u32 2147483647, %v510
        %v527 = vand.u32 2147483647, %v511
        %v528 = vand.u32 2147483647, %v512
        %v529 = vand.u32 2147483647, %v513
        %v530 = vand.u32 2147483647, %v514
        %v531 = vand.u32 2147483647, %v515
        %v532 = vand.u32 2147483647, %v516
        %v533 = vand.u32 2147483647, %v517
        %v534 = vand.u32 2147483647, %v518
        %v535 = vand.u32 2147483647, %v519
        %v536 = vand.u32 2147483647, %v520
        %v537 = vand.u32 2147483647, %v521
        %v538 = vand.u32 2147483647, %v522
        %v539 = vand.u32 2147483647, %v523
        %vm556 = vcmask 1046528
        %v557 = vrot.slane %v524, 1
        %v558 = vrot.slane %v525, 1
        %v559 = vsel %vm556, %v557, %v558
        %v560 = vrot.slane %v526, 1
        %v561 = vrot.slane %v527, 1
        %v562 = vsel %vm556, %v560, %v561
        %v563 = vrot.slane %v528, 1
        %v564 = vrot.slane %v529, 1
        %v565 = vsel %vm556, %v563, %v564
        %v566 = vrot.slane %v530, 1
        %v567 = vrot.slane %v531, 1
        %v568 = vsel %vm556, %v566, %v567
        %v569 = vrot.slane %v532, 1
        %v570 = vrot.slane %v533, 1
        %v571 = vsel %vm556, %v569, %v570
        %v572 = vrot.slane %v534, 1
        %v573 = vrot.slane %v535, 1
        %v574 = vsel %vm556, %v572, %v573
        %v575 = vrot.slane %v536, 1
        %v576 = vrot.slane %v537, 1
        %v577 = vsel %vm556, %v575, %v576
        %v578 = vrot.slane %v538, 1
        %v579 = vrot.slane %v539, 1
        %v580 = vsel %vm556, %v578, %v579
        %v597 = vsel %vm351, %v559, 0.0
        %vm598 = vcmask 129024
        %v599 = vsel %vm598, %v558, 0.0
        %v600 = vadd.f32 %v597, %v599
        %v601 = vsel %vm351, %v562, 0.0
        %v602 = vadd.f32 %v600, %v601
        %v603 = vsel %vm598, %v561, 0.0
        %v604 = vadd.f32 %v602, %v603
        %v605 = vsel %vm351, %v565, 0.0
        %v606 = vadd.f32 %v604, %v605
        %v607 = vsel %vm598, %v564, 0.0
        %v608 = vadd.f32 %v606, %v607
        %v609 = vsel %vm351, %v568, 0.0
        %v610 = vadd.f32 %v608, %v609
        %v611 = vsel %vm598, %v567, 0.0
        %v612 = vadd.f32 %v610, %v611
        %v613 = vsel %vm351, %v571, 0.0
        %v614 = vadd.f32 %v612, %v613
        %v615 = vsel %vm598, %v570, 0.0
        %v616 = vadd.f32 %v614, %v615
        %v617 = vsel %vm351, %v574, 0.0
        %v618 = vadd.f32 %v616, %v617
        %v619 = vsel %vm598, %v573, 0.0
        %v620 = vadd.f32 %v618, %v619
        %v621 = vsel %vm351, %v577, 0.0
        %v622 = vadd.f32 %v620, %v621
        %v623 = vsel %vm598, %v576, 0.0
        %v624 = vadd.f32 %v622, %v623
        %v625 = vsel %vm351, %v580, 0.0
        %v626 = vadd.f32 %v624, %v625
        %v627 = vsel %vm598, %v579, 0.0
        %v628 = vadd.f32 %v626, %v627
        %629 = vadd.xlane.f32.xlu0 %v628
        %v630 = vpop.xlane.xlu0 %629
        %v631 = vrot.slane %v630, 4
        %v632 = vadd.f32 %v630, %v631
        %v633 = vrot.slane %v632, 2
        %v634 = vadd.f32 %v632, %v633
        %v635 = vrot.slane %v634, 1
        %v636 = vadd.f32 %v634, %v635
        %s637 = vtos %v636
        %s638 = smul.f32 %s637, 2.6041666e-06
        %s639 = sadd.f32 %s450, %s638
        %640 = vrot.lane.b32.xlu0 %v287, 1
        %v641 = vpop.permute.xlu0 %640
        %642 = vrot.lane.b32.xlu0 %v288, 1
        %v643 = vpop.permute.xlu0 %642
        %644 = vrot.lane.b32.xlu0 %v289, 1
        %v645 = vpop.permute.xlu0 %644
        %646 = vrot.lane.b32.xlu0 %v290, 1
        %v647 = vpop.permute.xlu0 %646
        %648 = vrot.lane.b32.xlu0 %v291, 1
        %v649 = vpop.permute.xlu0 %648
        %650 = vrot.lane.b32.xlu0 %v292, 1
        %v651 = vpop.permute.xlu0 %650
        %652 = vrot.lane.b32.xlu0 %v293, 1
        %v653 = vpop.permute.xlu0 %652
        %654 = vrot.lane.b32.xlu0 %v294, 1
        %v655 = vpop.permute.xlu0 %654
        %656 = vrot.lane.b32.xlu0 %v295, 1
        %v657 = vpop.permute.xlu0 %656
        %658 = vrot.lane.b32.xlu0 %v296, 1
        %v659 = vpop.permute.xlu0 %658
        %660 = vrot.lane.b32.xlu0 %v297, 1
        %v661 = vpop.permute.xlu0 %660
        %662 = vrot.lane.b32.xlu0 %v298, 1
        %v663 = vpop.permute.xlu0 %662
        %664 = vrot.lane.b32.xlu0 %v299, 1
        %v665 = vpop.permute.xlu0 %664
        %666 = vrot.lane.b32.xlu0 %v300, 1
        %v667 = vpop.permute.xlu0 %666
        %668 = vrot.lane.b32.xlu0 %v301, 1
        %v669 = vpop.permute.xlu0 %668
        %670 = vrot.lane.b32.xlu0 %v302, 1
        %v671 = vpop.permute.xlu0 %670
        %v688 = vsub.f32 %v287, %v641
        %v689 = vsub.f32 %v288, %v643
        %v690 = vsub.f32 %v289, %v645
        %v691 = vsub.f32 %v290, %v647
        %v692 = vsub.f32 %v291, %v649
        %v693 = vsub.f32 %v292, %v651
        %v694 = vsub.f32 %v293, %v653
        %v695 = vsub.f32 %v294, %v655
        %v696 = vsub.f32 %v295, %v657
        %v697 = vsub.f32 %v296, %v659
        %v698 = vsub.f32 %v297, %v661
        %v699 = vsub.f32 %v298, %v663
        %v700 = vsub.f32 %v299, %v665
        %v701 = vsub.f32 %v300, %v667
        %v702 = vsub.f32 %v301, %v669
        %v703 = vsub.f32 %v302, %v671
        %v704 = vand.u32 2147483647, %v688
        %v705 = vand.u32 2147483647, %v689
        %v706 = vand.u32 2147483647, %v690
        %v707 = vand.u32 2147483647, %v691
        %v708 = vand.u32 2147483647, %v692
        %v709 = vand.u32 2147483647, %v693
        %v710 = vand.u32 2147483647, %v694
        %v711 = vand.u32 2147483647, %v695
        %v712 = vand.u32 2147483647, %v696
        %v713 = vand.u32 2147483647, %v697
        %v714 = vand.u32 2147483647, %v698
        %v715 = vand.u32 2147483647, %v699
        %v716 = vand.u32 2147483647, %v700
        %v717 = vand.u32 2147483647, %v701
        %v718 = vand.u32 2147483647, %v702
        %v719 = vand.u32 2147483647, %v703
        %736 = vrot.lane.b32.xlu0 %v704, 127
        %v737 = vpop.permute.xlu0 %736
        %738 = vrot.lane.b32.xlu0 %v705, 127
        %v739 = vpop.permute.xlu0 %738
        %740 = vrot.lane.b32.xlu0 %v706, 127
        %v741 = vpop.permute.xlu0 %740
        %742 = vrot.lane.b32.xlu0 %v707, 127
        %v743 = vpop.permute.xlu0 %742
        %744 = vrot.lane.b32.xlu0 %v708, 127
        %v745 = vpop.permute.xlu0 %744
        %746 = vrot.lane.b32.xlu0 %v709, 127
        %v747 = vpop.permute.xlu0 %746
        %748 = vrot.lane.b32.xlu0 %v710, 127
        %v749 = vpop.permute.xlu0 %748
        %750 = vrot.lane.b32.xlu0 %v711, 127
        %v751 = vpop.permute.xlu0 %750
        %752 = vrot.lane.b32.xlu0 %v712, 127
        %v753 = vpop.permute.xlu0 %752
        %754 = vrot.lane.b32.xlu0 %v713, 127
        %v755 = vpop.permute.xlu0 %754
        %756 = vrot.lane.b32.xlu0 %v714, 127
        %v757 = vpop.permute.xlu0 %756
        %758 = vrot.lane.b32.xlu0 %v715, 127
        %v759 = vpop.permute.xlu0 %758
        %760 = vrot.lane.b32.xlu0 %v716, 127
        %v761 = vpop.permute.xlu0 %760
        %762 = vrot.lane.b32.xlu0 %v717, 127
        %v763 = vpop.permute.xlu0 %762
        %764 = vrot.lane.b32.xlu0 %v718, 127
        %v765 = vpop.permute.xlu0 %764
        %766 = vrot.lane.b32.xlu0 %v719, 127
        %v767 = vpop.permute.xlu0 %766
        %vm784 = vcmask 121856
        %v785 = vsel %vm784, %v737, 0.0
        %v786 = vsel %vm784, %v739, 0.0
        %v787 = vadd.f32 %v785, %v786
        %v788 = vsel %vm784, %v741, 0.0
        %v789 = vadd.f32 %v787, %v788
        %v790 = vsel %vm784, %v743, 0.0
        %v791 = vadd.f32 %v789, %v790
        %v792 = vsel %vm784, %v745, 0.0
        %v793 = vadd.f32 %v791, %v792
        %v794 = vsel %vm784, %v747, 0.0
        %v795 = vadd.f32 %v793, %v794
        %v796 = vsel %vm784, %v749, 0.0
        %v797 = vadd.f32 %v795, %v796
        %v798 = vsel %vm784, %v751, 0.0
        %v799 = vadd.f32 %v797, %v798
        %v800 = vsel %vm784, %v753, 0.0
        %v801 = vadd.f32 %v799, %v800
        %v802 = vsel %vm784, %v755, 0.0
        %v803 = vadd.f32 %v801, %v802
        %v804 = vsel %vm784, %v757, 0.0
        %v805 = vadd.f32 %v803, %v804
        %v806 = vsel %vm784, %v759, 0.0
        %v807 = vadd.f32 %v805, %v806
        %v808 = vsel %vm784, %v761, 0.0
        %v809 = vadd.f32 %v807, %v808
        %v810 = vsel %vm784, %v763, 0.0
        %v811 = vadd.f32 %v809, %v810
        %v812 = vsel %vm784, %v765, 0.0
        %v813 = vadd.f32 %v811, %v812
        %v814 = vsel %vm784, %v767, 0.0
        %v815 = vadd.f32 %v813, %v814
        %816 = vadd.xlane.f32.xlu0 %v815
        %v817 = vpop.xlane.xlu0 %816
        %v818 = vrot.slane %v817, 4
        %v819 = vadd.f32 %v817, %v818
        %v820 = vrot.slane %v819, 2
        %v821 = vadd.f32 %v819, %v820
        %v822 = vrot.slane %v821, 1
        %v823 = vadd.f32 %v821, %v822
        %s824 = vtos %v823
        %s825 = smul.f32 %s824, 2.6041666e-06
        %s826 = sadd.f32 %s639, %s825
        %v827 = vmul.f32 %v287, %v287
        %v828 = vmul.f32 %v288, %v288
        %v829 = vmul.f32 %v289, %v289
        %v830 = vmul.f32 %v290, %v290
        %v831 = vmul.f32 %v291, %v291
        %v832 = vmul.f32 %v292, %v292
        %v833 = vmul.f32 %v293, %v293
        %v834 = vmul.f32 %v294, %v294
        %v835 = vmul.f32 %v295, %v295
        %v836 = vmul.f32 %v296, %v296
        %v837 = vmul.f32 %v297, %v297
        %v838 = vmul.f32 %v298, %v298
        %v839 = vmul.f32 %v299, %v299
        %v840 = vmul.f32 %v300, %v300
        %v841 = vmul.f32 %v301, %v301
        %v842 = vmul.f32 %v302, %v302
        %v843 = vmul.f32 %v303, %v303
        %v844 = vmul.f32 %v304, %v304
        %v845 = vmul.f32 %v305, %v305
        %v846 = vmul.f32 %v306, %v306
        %v847 = vmul.f32 %v307, %v307
        %v848 = vmul.f32 %v308, %v308
        %v849 = vmul.f32 %v309, %v309
        %v850 = vmul.f32 %v310, %v310
        %v851 = vmul.f32 %v311, %v311
        %v852 = vmul.f32 %v312, %v312
        %v853 = vmul.f32 %v313, %v313
        %v854 = vmul.f32 %v314, %v314
        %v855 = vmul.f32 %v315, %v315
        %v856 = vmul.f32 %v316, %v316
        %v857 = vmul.f32 %v317, %v317
        %v858 = vmul.f32 %v318, %v318
        %v859 = vmul.f32 %v287, %v303
        %v860 = vmul.f32 %v288, %v304
        %v861 = vmul.f32 %v289, %v305
        %v862 = vmul.f32 %v290, %v306
        %v863 = vmul.f32 %v291, %v307
        %v864 = vmul.f32 %v292, %v308
        %v865 = vmul.f32 %v293, %v309
        %v866 = vmul.f32 %v294, %v310
        %v867 = vmul.f32 %v295, %v311
        %v868 = vmul.f32 %v296, %v312
        %v869 = vmul.f32 %v297, %v313
        %v870 = vmul.f32 %v298, %v314
        %v871 = vmul.f32 %v299, %v315
        %v872 = vmul.f32 %v300, %v316
        %v873 = vmul.f32 %v301, %v317
        %v874 = vmul.f32 %v302, %v318
        %v875 = vld [vmem:[#allocation6] sm:$0xff]
        %v876 = vld [vmem:[#allocation6 + $0x8] sm:$0xff]
        %v877 = vsel %vm351, %v287, 0
        %v879 = vsel %vm351, %v288, 0
        %v881 = vsel %vm351, %v289, 0
        %v883 = vsel %vm351, %v290, 0
        %v885 = vsel %vm351, %v291, 0
        %v887 = vsel %vm351, %v292, 0
        %v889 = vsel %vm351, %v293, 0
        %v891 = vsel %vm351, %v294, 0
        %v893 = vsel %vm351, %v295, 0
        %v895 = vsel %vm351, %v296, 0
        %v897 = vsel %vm351, %v297, 0
        %v899 = vsel %vm351, %v298, 0
        %v901 = vsel %vm351, %v299, 0
        %v903 = vsel %vm351, %v300, 0
        %v905 = vsel %vm351, %v301, 0
        %v907 = vsel %vm351, %v302, 0
        %v910 = vsel %vm351, %v303, 0
        %v913 = vsel %vm351, %v304, 0
        %v916 = vsel %vm351, %v305, 0
        %v919 = vsel %vm351, %v306, 0
        %v922 = vsel %vm351, %v307, 0
        %v925 = vsel %vm351, %v308, 0
        %v928 = vsel %vm351, %v309, 0
        %v931 = vsel %vm351, %v310, 0
        %v934 = vsel %vm351, %v311, 0
        %v937 = vsel %vm351, %v312, 0
        %v940 = vsel %vm351, %v313, 0
        %v943 = vsel %vm351, %v314, 0
        %v946 = vsel %vm351, %v315, 0
        %v949 = vsel %vm351, %v316, 0
        %v952 = vsel %vm351, %v317, 0
        %v955 = vsel %vm351, %v318, 0
        %v958 = vsel %vm351, %v827, 0
        %v961 = vsel %vm351, %v828, 0
        %v964 = vsel %vm351, %v829, 0
        %v967 = vsel %vm351, %v830, 0
        %v970 = vsel %vm351, %v831, 0
        %v973 = vsel %vm351, %v832, 0
        %v976 = vsel %vm351, %v833, 0
        %v979 = vsel %vm351, %v834, 0
        %v982 = vsel %vm351, %v835, 0
        %v985 = vsel %vm351, %v836, 0
        %v988 = vsel %vm351, %v837, 0
        %v991 = vsel %vm351, %v838, 0
        %v994 = vsel %vm351, %v839, 0
        %v997 = vsel %vm351, %v840, 0
        %v1000 = vsel %vm351, %v841, 0
        %v1003 = vsel %vm351, %v842, 0
        %v1006 = vsel %vm351, %v843, 0
        %v1009 = vsel %vm351, %v844, 0
        %v1012 = vsel %vm351, %v845, 0
        %v1015 = vsel %vm351, %v846, 0
        %v1018 = vsel %vm351, %v847, 0
        %v1021 = vsel %vm351, %v848, 0
        %v1024 = vsel %vm351, %v849, 0
        %v1027 = vsel %vm351, %v850, 0
        %v1030 = vsel %vm351, %v851, 0
        %v1033 = vsel %vm351, %v852, 0
        %v1036 = vsel %vm351, %v853, 0
        %v1039 = vsel %vm351, %v854, 0
        %v1042 = vsel %vm351, %v855, 0
        %v1045 = vsel %vm351, %v856, 0
        %v1048 = vsel %vm351, %v857, 0
        %v1051 = vsel %vm351, %v858, 0
        %v1054 = vsel %vm351, %v859, 0
        %v1057 = vsel %vm351, %v860, 0
        %v1060 = vsel %vm351, %v861, 0
        %v1063 = vsel %vm351, %v862, 0
        %v1066 = vsel %vm351, %v863, 0
        %v1069 = vsel %vm351, %v864, 0
        %v1072 = vsel %vm351, %v865, 0
        %v1075 = vsel %vm351, %v866, 0
        %v1078 = vsel %vm351, %v867, 0
        %v1081 = vsel %vm351, %v868, 0
        %v1084 = vsel %vm351, %v869, 0
        %v1087 = vsel %vm351, %v870, 0
        %v1090 = vsel %vm351, %v871, 0
        %v1093 = vsel %vm351, %v872, 0
        %v1096 = vsel %vm351, %v873, 0
        %v1099 = vsel %vm351, %v874, 0
        %1101 = vmatprep.subr.mxu0 0.0
        %1102 = vmatpush1.msra.mxu0 %v875
        %1103 = vmatprep.subr.mxu0 0.0
        %1104 = vmatpush1.msra.mxu0 %v876
        %1105 = vmatprep.subr.mxu0 0.0
        %1106 = vmatpush1.msra.mxu0 0.0
        %1107 = vmatprep.subr.mxu0 0.0
        %1108 = vmatpush1.msra.mxu0 0.0
        %1109 = vmatprep.subr.mxu0 0.0
        %1110 = vmatpush1.msra.mxu0 0.0
        %1111 = vmatprep.subr.mxu0 0.0
        %1112 = vmatpush1.msra.mxu0 0.0
        %1113 = vmatprep.subr.mxu0 0.0
        %1114 = vmatpush1.msra.mxu0 0.0
        %1115 = vmatprep.subr.mxu0 0.0
        %1116 = vmatpush1.msra.mxu0 0.0
        %1117 = vmatprep.subr.mxu0 0.0
        %1118 = vmatpush1.msra.mxu0 0.0
        %1119 = vmatprep.subr.mxu0 0.0
        %1120 = vmatpush1.msra.mxu0 0.0
        %1121 = vmatprep.subr.mxu0 0.0
        %1122 = vmatpush1.msra.mxu0 0.0
        %1123 = vmatprep.subr.mxu0 0.0
        %1124 = vmatpush1.msra.mxu0 0.0
        %1125 = vmatprep.subr.mxu0 0.0
        %1126 = vmatpush1.msra.mxu0 0.0
        %1127 = vmatprep.subr.mxu0 0.0
        %1128 = vmatpush1.msra.mxu0 0.0
        %1129 = vmatprep.subr.mxu0 0.0
        %1130 = vmatpush1.msra.mxu0 0.0
        %1131 = vmatprep.subr.mxu0 0.0
        %1132 = vmatpush1.msra.mxu0 0.0
        %1133 = vmatprep.subr.mxu0 0.0
        %1134 = vmatpush1.msra.mxu0 0.0
        %1135 = vmatprep.subr.mxu0 0.0
        %1136 = vmatpush1.msra.mxu0 0.0
        %1137 = vmatprep.subr.mxu0 0.0
        %1138 = vmatpush1.msra.mxu0 0.0
        %1139 = vmatprep.subr.mxu0 0.0
        %1140 = vmatpush1.msra.mxu0 0.0
        %1141 = vmatprep.subr.mxu0 0.0
        %1142 = vmatpush1.msra.mxu0 0.0
        %1143 = vmatprep.subr.mxu0 0.0
        %1144 = vmatpush1.msra.mxu0 0.0
        %1145 = vmatprep.subr.mxu0 0.0
        %1146 = vmatpush1.msra.mxu0 0.0
        %1147 = vmatprep.subr.mxu0 0.0
        %1148 = vmatpush1.msra.mxu0 0.0
        %1149 = vmatprep.subr.mxu0 0.0
        %1150 = vmatpush1.msra.mxu0 0.0
        %1151 = vmatprep.subr.mxu0 0.0
        %1152 = vmatpush1.msra.mxu0 0.0
        %1153 = vmatprep.subr.mxu0 0.0
        %1154 = vmatpush1.msra.mxu0 0.0
        %1155 = vmatprep.subr.mxu0 0.0
        %1156 = vmatpush1.msra.mxu0 0.0
        %1157 = vmatprep.subr.mxu0 0.0
        %1158 = vmatpush1.msra.mxu0 0.0
        %1159 = vmatprep.subr.mxu0 0.0
        %1160 = vmatpush1.msra.mxu0 0.0
        %1161 = vmatprep.subr.mxu0 0.0
        %1162 = vmatpush1.msra.mxu0 0.0
        %1163 = vmatprep.subr.mxu0 0.0
        %1164 = vmatpush1.msra.mxu0 0.0
        %1165 = vmatprep.mubr.f32.mxu0 0.0
        %1166 = vmatmul.mubr.f32.gmra.mrb[0].mxu0 %v877
        %v1167 = vpop.f32.mrb[0].mxu0
        %v1168 = vadd.f32 0.0, %v1167
        %v1169 = vpop.f32.mrb[0].mxu0
        %1170 = vmatprep.mubr.f32.mxu0 0.0
        %1171 = vmatmul.mubr.f32.gmra.mrb[0].mxu0 %v879
        %v1172 = vpop.f32.mrb[0].mxu0
        %v1173 = vadd.f32 0.0, %v1172
        %v1174 = vpop.f32.mrb[0].mxu0
        %1175 = vmatprep.mubr.f32.mxu0 0.0
        %1176 = vmatmul.mubr.f32.gmra.mrb[0].mxu0 %v881
        %v1177 = vpop.f32.mrb[0].mxu0
        %v1178 = vadd.f32 0.0, %v1177
        %v1179 = vpop.f32.mrb[0].mxu0
        %1180 = vmatprep.mubr.f32.mxu0 0.0
        %1181 = vmatmul.mubr.f32.gmra.mrb[0].mxu0 %v883
        %v1182 = vpop.f32.mrb[0].mxu0
        %v1183 = vadd.f32 0.0, %v1182
        %v1184 = vpop.f32.mrb[0].mxu0
        %1185 = vmatprep.mubr.f32.mxu0 0.0
        %1186 = vmatmul.mubr.f32.gmra.mrb[0].mxu0 %v885
        %v1187 = vpop.f32.mrb[0].mxu0
        %v1188 = vadd.f32 0.0, %v1187
        %v1189 = vpop.f32.mrb[0].mxu0
        %1190 = vmatprep.mubr.f32.mxu0 0.0
        %1191 = vmatmul.mubr.f32.gmra.mrb[0].mxu0 %v887
        %v1192 = vpop.f32.mrb[0].mxu0
        %v1193 = vadd.f32 0.0, %v1192
        %v1194 = vpop.f32.mrb[0].mxu0
        %1195 = vmatprep.mubr.f32.mxu0 0.0
        %1196 = vmatmul.mubr.f32.gmra.mrb[0].mxu0 %v889
        %v1197 = vpop.f32.mrb[0].mxu0
        %v1198 = vadd.f32 0.0, %v1197
        %v1199 = vpop.f32.mrb[0].mxu0
        %1200 = vmatprep.mubr.f32.mxu0 0.0
        %1201 = vmatmul.mubr.f32.gmra.mrb[0].mxu0 %v891
        %v1202 = vpop.f32.mrb[0].mxu0
        %v1203 = vadd.f32 0.0, %v1202
        %v1204 = vpop.f32.mrb[0].mxu0
        %1205 = vmatprep.mubr.f32.mxu0 0.0
        %1206 = vmatmul.mubr.f32.gmra.mrb[0].mxu0 %v893
        %v1207 = vpop.f32.mrb[0].mxu0
        %v1208 = vadd.f32 0.0, %v1207
        %v1209 = vpop.f32.mrb[0].mxu0
        %1210 = vmatprep.mubr.f32.mxu0 0.0
        %1211 = vmatmul.mubr.f32.gmra.mrb[0].mxu0 %v895
        %v1212 = vpop.f32.mrb[0].mxu0
        %v1213 = vadd.f32 0.0, %v1212
        %v1214 = vpop.f32.mrb[0].mxu0
        %1215 = vmatprep.mubr.f32.mxu0 0.0
        %1216 = vmatmul.mubr.f32.gmra.mrb[0].mxu0 %v897
        %v1217 = vpop.f32.mrb[0].mxu0
        %v1218 = vadd.f32 0.0, %v1217
        %v1219 = vpop.f32.mrb[0].mxu0
        %1220 = vmatprep.mubr.f32.mxu0 0.0
        %1221 = vmatmul.mubr.f32.gmra.mrb[0].mxu0 %v899
        %v1222 = vpop.f32.mrb[0].mxu0
        %v1223 = vadd.f32 0.0, %v1222
        %v1224 = vpop.f32.mrb[0].mxu0
        %1225 = vmatprep.mubr.f32.mxu0 0.0
        %1226 = vmatmul.mubr.f32.gmra.mrb[0].mxu0 %v901
        %v1227 = vpop.f32.mrb[0].mxu0
        %v1228 = vadd.f32 0.0, %v1227
        %v1229 = vpop.f32.mrb[0].mxu0
        %1230 = vmatprep.mubr.f32.mxu0 0.0
        %1231 = vmatmul.mubr.f32.gmra.mrb[0].mxu0 %v903
        %v1232 = vpop.f32.mrb[0].mxu0
        %v1233 = vadd.f32 0.0, %v1232
        %v1234 = vpop.f32.mrb[0].mxu0
        %1235 = vmatprep.mubr.f32.mxu0 0.0
        %1236 = vmatmul.mubr.f32.gmra.mrb[0].mxu0 %v905
        %v1237 = vpop.f32.mrb[0].mxu0
        %v1238 = vadd.f32 0.0, %v1237
        %v1239 = vpop.f32.mrb[0].mxu0
        %1240 = vmatprep.mubr.f32.mxu0 0.0
        %1241 = vmatmul.mubr.f32.gmra.mrb[0].mxu0 %v907
        %v1242 = vpop.f32.mrb[0].mxu0
        %v1243 = vadd.f32 0.0, %v1242
        %v1244 = vpop.f32.mrb[0].mxu0
        %1245 = vmatprep.mubr.f32.mxu0 0.0
        %1246 = vmatmul.mubr.f32.gmra.mrb[0].mxu0 %v910
        %v1247 = vpop.f32.mrb[0].mxu0
        %v1248 = vadd.f32 0.0, %v1247
        %v1249 = vpop.f32.mrb[0].mxu0
        %1250 = vmatprep.mubr.f32.mxu0 0.0
        %1251 = vmatmul.mubr.f32.gmra.mrb[0].mxu0 %v913
        %v1252 = vpop.f32.mrb[0].mxu0
        %v1253 = vadd.f32 0.0, %v1252
        %v1254 = vpop.f32.mrb[0].mxu0
        %1255 = vmatprep.mubr.f32.mxu0 0.0
        %1256 = vmatmul.mubr.f32.gmra.mrb[0].mxu0 %v916
        %v1257 = vpop.f32.mrb[0].mxu0
        %v1258 = vadd.f32 0.0, %v1257
        %v1259 = vpop.f32.mrb[0].mxu0
        %1260 = vmatprep.mubr.f32.mxu0 0.0
        %1261 = vmatmul.mubr.f32.gmra.mrb[0].mxu0 %v919
        %v1262 = vpop.f32.mrb[0].mxu0
        %v1263 = vadd.f32 0.0, %v1262
        %v1264 = vpop.f32.mrb[0].mxu0
        %1265 = vmatprep.mubr.f32.mxu0 0.0
        %1266 = vmatmul.mubr.f32.gmra.mrb[0].mxu0 %v922
        %v1267 = vpop.f32.mrb[0].mxu0
        %v1268 = vadd.f32 0.0, %v1267
        %v1269 = vpop.f32.mrb[0].mxu0
        %1270 = vmatprep.mubr.f32.mxu0 0.0
        %1271 = vmatmul.mubr.f32.gmra.mrb[0].mxu0 %v925
        %v1272 = vpop.f32.mrb[0].mxu0
        %v1273 = vadd.f32 0.0, %v1272
        %v1274 = vpop.f32.mrb[0].mxu0
        %1275 = vmatprep.mubr.f32.mxu0 0.0
        %1276 = vmatmul.mubr.f32.gmra.mrb[0].mxu0 %v928
        %v1277 = vpop.f32.mrb[0].mxu0
        %v1278 = vadd.f32 0.0, %v1277
        %v1279 = vpop.f32.mrb[0].mxu0
        %1280 = vmatprep.mubr.f32.mxu0 0.0
        %1281 = vmatmul.mubr.f32.gmra.mrb[0].mxu0 %v931
        %v1282 = vpop.f32.mrb[0].mxu0
        %v1283 = vadd.f32 0.0, %v1282
        %v1284 = vpop.f32.mrb[0].mxu0
        %1285 = vmatprep.mubr.f32.mxu0 0.0
        %1286 = vmatmul.mubr.f32.gmra.mrb[0].mxu0 %v934
        %v1287 = vpop.f32.mrb[0].mxu0
        %v1288 = vadd.f32 0.0, %v1287
        %v1289 = vpop.f32.mrb[0].mxu0
        %1290 = vmatprep.mubr.f32.mxu0 0.0
        %1291 = vmatmul.mubr.f32.gmra.mrb[0].mxu0 %v937
        %v1292 = vpop.f32.mrb[0].mxu0
        %v1293 = vadd.f32 0.0, %v1292
        %v1294 = vpop.f32.mrb[0].mxu0
        %1295 = vmatprep.mubr.f32.mxu0 0.0
        %1296 = vmatmul.mubr.f32.gmra.mrb[0].mxu0 %v940
        %v1297 = vpop.f32.mrb[0].mxu0
        %v1298 = vadd.f32 0.0, %v1297
        %v1299 = vpop.f32.mrb[0].mxu0
        %1300 = vmatprep.mubr.f32.mxu0 0.0
        %1301 = vmatmul.mubr.f32.gmra.mrb[0].mxu0 %v943
        %v1302 = vpop.f32.mrb[0].mxu0
        %v1303 = vadd.f32 0.0, %v1302
        %v1304 = vpop.f32.mrb[0].mxu0
        %1305 = vmatprep.mubr.f32.mxu0 0.0
        %1306 = vmatmul.mubr.f32.gmra.mrb[0].mxu0 %v946
        %v1307 = vpop.f32.mrb[0].mxu0
        %v1308 = vadd.f32 0.0, %v1307
        %v1309 = vpop.f32.mrb[0].mxu0
        %1310 = vmatprep.mubr.f32.mxu0 0.0
        %1311 = vmatmul.mubr.f32.gmra.mrb[0].mxu0 %v949
        %v1312 = vpop.f32.mrb[0].mxu0
        %v1313 = vadd.f32 0.0, %v1312
        %v1314 = vpop.f32.mrb[0].mxu0
        %1315 = vmatprep.mubr.f32.mxu0 0.0
        %1316 = vmatmul.mubr.f32.gmra.mrb[0].mxu0 %v952
        %v1317 = vpop.f32.mrb[0].mxu0
        %v1318 = vadd.f32 0.0, %v1317
        %v1319 = vpop.f32.mrb[0].mxu0
        %1320 = vmatprep.mubr.f32.mxu0 0.0
        %1321 = vmatmul.mubr.f32.gmra.mrb[0].mxu0 %v955
        %v1322 = vpop.f32.mrb[0].mxu0
        %v1323 = vadd.f32 0.0, %v1322
        %v1324 = vpop.f32.mrb[0].mxu0
        %1325 = vmatprep.mubr.f32.mxu0 0.0
        %1326 = vmatmul.mubr.f32.gmra.mrb[0].mxu0 %v958
        %v1327 = vpop.f32.mrb[0].mxu0
        %v1328 = vadd.f32 0.0, %v1327
        %v1329 = vpop.f32.mrb[0].mxu0
        %1330 = vmatprep.mubr.f32.mxu0 0.0
        %1331 = vmatmul.mubr.f32.gmra.mrb[0].mxu0 %v961
        %v1332 = vpop.f32.mrb[0].mxu0
        %v1333 = vadd.f32 0.0, %v1332
        %v1334 = vpop.f32.mrb[0].mxu0
        %1335 = vmatprep.mubr.f32.mxu0 0.0
        %1336 = vmatmul.mubr.f32.gmra.mrb[0].mxu0 %v964
        %v1337 = vpop.f32.mrb[0].mxu0
        %v1338 = vadd.f32 0.0, %v1337
        %v1339 = vpop.f32.mrb[0].mxu0
        %1340 = vmatprep.mubr.f32.mxu0 0.0
        %1341 = vmatmul.mubr.f32.gmra.mrb[0].mxu0 %v967
        %v1342 = vpop.f32.mrb[0].mxu0
        %v1343 = vadd.f32 0.0, %v1342
        %v1344 = vpop.f32.mrb[0].mxu0
        %1345 = vmatprep.mubr.f32.mxu0 0.0
        %1346 = vmatmul.mubr.f32.gmra.mrb[0].mxu0 %v970
        %v1347 = vpop.f32.mrb[0].mxu0
        %v1348 = vadd.f32 0.0, %v1347
        %v1349 = vpop.f32.mrb[0].mxu0
        %1350 = vmatprep.mubr.f32.mxu0 0.0
        %1351 = vmatmul.mubr.f32.gmra.mrb[0].mxu0 %v973
        %v1352 = vpop.f32.mrb[0].mxu0
        %v1353 = vadd.f32 0.0, %v1352
        %v1354 = vpop.f32.mrb[0].mxu0
        %1355 = vmatprep.mubr.f32.mxu0 0.0
        %1356 = vmatmul.mubr.f32.gmra.mrb[0].mxu0 %v976
        %v1357 = vpop.f32.mrb[0].mxu0
        %v1358 = vadd.f32 0.0, %v1357
        %v1359 = vpop.f32.mrb[0].mxu0
        %1360 = vmatprep.mubr.f32.mxu0 0.0
        %1361 = vmatmul.mubr.f32.gmra.mrb[0].mxu0 %v979
        %v1362 = vpop.f32.mrb[0].mxu0
        %v1363 = vadd.f32 0.0, %v1362
        %v1364 = vpop.f32.mrb[0].mxu0
        %1365 = vmatprep.mubr.f32.mxu0 0.0
        %1366 = vmatmul.mubr.f32.gmra.mrb[0].mxu0 %v982
        %v1367 = vpop.f32.mrb[0].mxu0
        %v1368 = vadd.f32 0.0, %v1367
        %v1369 = vpop.f32.mrb[0].mxu0
        %1370 = vmatprep.mubr.f32.mxu0 0.0
        %1371 = vmatmul.mubr.f32.gmra.mrb[0].mxu0 %v985
        %v1372 = vpop.f32.mrb[0].mxu0
        %v1373 = vadd.f32 0.0, %v1372
        %v1374 = vpop.f32.mrb[0].mxu0
        %1375 = vmatprep.mubr.f32.mxu0 0.0
        %1376 = vmatmul.mubr.f32.gmra.mrb[0].mxu0 %v988
        %v1377 = vpop.f32.mrb[0].mxu0
        %v1378 = vadd.f32 0.0, %v1377
        %v1379 = vpop.f32.mrb[0].mxu0
        %1380 = vmatprep.mubr.f32.mxu0 0.0
        %1381 = vmatmul.mubr.f32.gmra.mrb[0].mxu0 %v991
        %v1382 = vpop.f32.mrb[0].mxu0
        %v1383 = vadd.f32 0.0, %v1382
        %v1384 = vpop.f32.mrb[0].mxu0
        %1385 = vmatprep.mubr.f32.mxu0 0.0
        %1386 = vmatmul.mubr.f32.gmra.mrb[0].mxu0 %v994
        %v1387 = vpop.f32.mrb[0].mxu0
        %v1388 = vadd.f32 0.0, %v1387
        %v1389 = vpop.f32.mrb[0].mxu0
        %1390 = vmatprep.mubr.f32.mxu0 0.0
        %1391 = vmatmul.mubr.f32.gmra.mrb[0].mxu0 %v997
        %v1392 = vpop.f32.mrb[0].mxu0
        %v1393 = vadd.f32 0.0, %v1392
        %v1394 = vpop.f32.mrb[0].mxu0
        %1395 = vmatprep.mubr.f32.mxu0 0.0
        %1396 = vmatmul.mubr.f32.gmra.mrb[0].mxu0 %v1000
        %v1397 = vpop.f32.mrb[0].mxu0
        %v1398 = vadd.f32 0.0, %v1397
        %v1399 = vpop.f32.mrb[0].mxu0
        %1400 = vmatprep.mubr.f32.mxu0 0.0
        %1401 = vmatmul.mubr.f32.gmra.mrb[0].mxu0 %v1003
        %v1402 = vpop.f32.mrb[0].mxu0
        %v1403 = vadd.f32 0.0, %v1402
        %v1404 = vpop.f32.mrb[0].mxu0
        %1405 = vmatprep.mubr.f32.mxu0 0.0
        %1406 = vmatmul.mubr.f32.gmra.mrb[0].mxu0 %v1006
        %v1407 = vpop.f32.mrb[0].mxu0
        %v1408 = vadd.f32 0.0, %v1407
        %v1409 = vpop.f32.mrb[0].mxu0
        %1410 = vmatprep.mubr.f32.mxu0 0.0
        %1411 = vmatmul.mubr.f32.gmra.mrb[0].mxu0 %v1009
        %v1412 = vpop.f32.mrb[0].mxu0
        %v1413 = vadd.f32 0.0, %v1412
        %v1414 = vpop.f32.mrb[0].mxu0
        %1415 = vmatprep.mubr.f32.mxu0 0.0
        %1416 = vmatmul.mubr.f32.gmra.mrb[0].mxu0 %v1012
        %v1417 = vpop.f32.mrb[0].mxu0
        %v1418 = vadd.f32 0.0, %v1417
        %v1419 = vpop.f32.mrb[0].mxu0
        %1420 = vmatprep.mubr.f32.mxu0 0.0
        %1421 = vmatmul.mubr.f32.gmra.mrb[0].mxu0 %v1015
        %v1422 = vpop.f32.mrb[0].mxu0
        %v1423 = vadd.f32 0.0, %v1422
        %v1424 = vpop.f32.mrb[0].mxu0
        %1425 = vmatprep.mubr.f32.mxu0 0.0
        %1426 = vmatmul.mubr.f32.gmra.mrb[0].mxu0 %v1018
        %v1427 = vpop.f32.mrb[0].mxu0
        %v1428 = vadd.f32 0.0, %v1427
        %v1429 = vpop.f32.mrb[0].mxu0
        %1430 = vmatprep.mubr.f32.mxu0 0.0
        %1431 = vmatmul.mubr.f32.gmra.mrb[0].mxu0 %v1021
        %v1432 = vpop.f32.mrb[0].mxu0
        %v1433 = vadd.f32 0.0, %v1432
        %v1434 = vpop.f32.mrb[0].mxu0
        %1435 = vmatprep.mubr.f32.mxu0 0.0
        %1436 = vmatmul.mubr.f32.gmra.mrb[0].mxu0 %v1024
        %v1437 = vpop.f32.mrb[0].mxu0
        %v1438 = vadd.f32 0.0, %v1437
        %v1439 = vpop.f32.mrb[0].mxu0
        %1440 = vmatprep.mubr.f32.mxu0 0.0
        %1441 = vmatmul.mubr.f32.gmra.mrb[0].mxu0 %v1027
        %v1442 = vpop.f32.mrb[0].mxu0
        %v1443 = vadd.f32 0.0, %v1442
        %v1444 = vpop.f32.mrb[0].mxu0
        %1445 = vmatprep.mubr.f32.mxu0 0.0
        %1446 = vmatmul.mubr.f32.gmra.mrb[0].mxu0 %v1030
        %v1447 = vpop.f32.mrb[0].mxu0
        %v1448 = vadd.f32 0.0, %v1447
        %v1449 = vpop.f32.mrb[0].mxu0
        %1450 = vmatprep.mubr.f32.mxu0 0.0
        %1451 = vmatmul.mubr.f32.gmra.mrb[0].mxu0 %v1033
        %v1452 = vpop.f32.mrb[0].mxu0
        %v1453 = vadd.f32 0.0, %v1452
        %v1454 = vpop.f32.mrb[0].mxu0
        %1455 = vmatprep.mubr.f32.mxu0 0.0
        %1456 = vmatmul.mubr.f32.gmra.mrb[0].mxu0 %v1036
        %v1457 = vpop.f32.mrb[0].mxu0
        %v1458 = vadd.f32 0.0, %v1457
        %v1459 = vpop.f32.mrb[0].mxu0
        %1460 = vmatprep.mubr.f32.mxu0 0.0
        %1461 = vmatmul.mubr.f32.gmra.mrb[0].mxu0 %v1039
        %v1462 = vpop.f32.mrb[0].mxu0
        %v1463 = vadd.f32 0.0, %v1462
        %v1464 = vpop.f32.mrb[0].mxu0
        %1465 = vmatprep.mubr.f32.mxu0 0.0
        %1466 = vmatmul.mubr.f32.gmra.mrb[0].mxu0 %v1042
        %v1467 = vpop.f32.mrb[0].mxu0
        %v1468 = vadd.f32 0.0, %v1467
        %v1469 = vpop.f32.mrb[0].mxu0
        %1470 = vmatprep.mubr.f32.mxu0 0.0
        %1471 = vmatmul.mubr.f32.gmra.mrb[0].mxu0 %v1045
        %v1472 = vpop.f32.mrb[0].mxu0
        %v1473 = vadd.f32 0.0, %v1472
        %v1474 = vpop.f32.mrb[0].mxu0
        %1475 = vmatprep.mubr.f32.mxu0 0.0
        %1476 = vmatmul.mubr.f32.gmra.mrb[0].mxu0 %v1048
        %v1477 = vpop.f32.mrb[0].mxu0
        %v1478 = vadd.f32 0.0, %v1477
        %v1479 = vpop.f32.mrb[0].mxu0
        %1480 = vmatprep.mubr.f32.mxu0 0.0
        %1481 = vmatmul.mubr.f32.gmra.mrb[0].mxu0 %v1051
        %v1482 = vpop.f32.mrb[0].mxu0
        %v1483 = vadd.f32 0.0, %v1482
        %v1484 = vpop.f32.mrb[0].mxu0
        %1485 = vmatprep.mubr.f32.mxu0 0.0
        %1486 = vmatmul.mubr.f32.gmra.mrb[0].mxu0 %v1054
        %v1487 = vpop.f32.mrb[0].mxu0
        %v1488 = vadd.f32 0.0, %v1487
        %v1489 = vpop.f32.mrb[0].mxu0
        %1490 = vmatprep.mubr.f32.mxu0 0.0
        %1491 = vmatmul.mubr.f32.gmra.mrb[0].mxu0 %v1057
        %v1492 = vpop.f32.mrb[0].mxu0
        %v1493 = vadd.f32 0.0, %v1492
        %v1494 = vpop.f32.mrb[0].mxu0
        %1495 = vmatprep.mubr.f32.mxu0 0.0
        %1496 = vmatmul.mubr.f32.gmra.mrb[0].mxu0 %v1060
        %v1497 = vpop.f32.mrb[0].mxu0
        %v1498 = vadd.f32 0.0, %v1497
        %v1499 = vpop.f32.mrb[0].mxu0
        %1500 = vmatprep.mubr.f32.mxu0 0.0
        %1501 = vmatmul.mubr.f32.gmra.mrb[0].mxu0 %v1063
        %v1502 = vpop.f32.mrb[0].mxu0
        %v1503 = vadd.f32 0.0, %v1502
        %v1504 = vpop.f32.mrb[0].mxu0
        %1505 = vmatprep.mubr.f32.mxu0 0.0
        %1506 = vmatmul.mubr.f32.gmra.mrb[0].mxu0 %v1066
        %v1507 = vpop.f32.mrb[0].mxu0
        %v1508 = vadd.f32 0.0, %v1507
        %v1509 = vpop.f32.mrb[0].mxu0
        %1510 = vmatprep.mubr.f32.mxu0 0.0
        %1511 = vmatmul.mubr.f32.gmra.mrb[0].mxu0 %v1069
        %v1512 = vpop.f32.mrb[0].mxu0
        %v1513 = vadd.f32 0.0, %v1512
        %v1514 = vpop.f32.mrb[0].mxu0
        %1515 = vmatprep.mubr.f32.mxu0 0.0
        %1516 = vmatmul.mubr.f32.gmra.mrb[0].mxu0 %v1072
        %v1517 = vpop.f32.mrb[0].mxu0
        %v1518 = vadd.f32 0.0, %v1517
        %v1519 = vpop.f32.mrb[0].mxu0
        %1520 = vmatprep.mubr.f32.mxu0 0.0
        %1521 = vmatmul.mubr.f32.gmra.mrb[0].mxu0 %v1075
        %v1522 = vpop.f32.mrb[0].mxu0
        %v1523 = vadd.f32 0.0, %v1522
        %v1524 = vpop.f32.mrb[0].mxu0
        %1525 = vmatprep.mubr.f32.mxu0 0.0
        %1526 = vmatmul.mubr.f32.gmra.mrb[0].mxu0 %v1078
        %v1527 = vpop.f32.mrb[0].mxu0
        %v1528 = vadd.f32 0.0, %v1527
        %v1529 = vpop.f32.mrb[0].mxu0
        %1530 = vmatprep.mubr.f32.mxu0 0.0
        %1531 = vmatmul.mubr.f32.gmra.mrb[0].mxu0 %v1081
        %v1532 = vpop.f32.mrb[0].mxu0
        %v1533 = vadd.f32 0.0, %v1532
        %v1534 = vpop.f32.mrb[0].mxu0
        %1535 = vmatprep.mubr.f32.mxu0 0.0
        %1536 = vmatmul.mubr.f32.gmra.mrb[0].mxu0 %v1084
        %v1537 = vpop.f32.mrb[0].mxu0
        %v1538 = vadd.f32 0.0, %v1537
        %v1539 = vpop.f32.mrb[0].mxu0
        %1540 = vmatprep.mubr.f32.mxu0 0.0
        %1541 = vmatmul.mubr.f32.gmra.mrb[0].mxu0 %v1087
        %v1542 = vpop.f32.mrb[0].mxu0
        %v1543 = vadd.f32 0.0, %v1542
        %v1544 = vpop.f32.mrb[0].mxu0
        %1545 = vmatprep.mubr.f32.mxu0 0.0
        %1546 = vmatmul.mubr.f32.gmra.mrb[0].mxu0 %v1090
        %v1547 = vpop.f32.mrb[0].mxu0
        %v1548 = vadd.f32 0.0, %v1547
        %v1549 = vpop.f32.mrb[0].mxu0
        %1550 = vmatprep.mubr.f32.mxu0 0.0
        %1551 = vmatmul.mubr.f32.gmra.mrb[0].mxu0 %v1093
        %v1552 = vpop.f32.mrb[0].mxu0
        %v1553 = vadd.f32 0.0, %v1552
        %v1554 = vpop.f32.mrb[0].mxu0
        %1555 = vmatprep.mubr.f32.mxu0 0.0
        %1556 = vmatmul.mubr.f32.gmra.mrb[0].mxu0 %v1096
        %v1557 = vpop.f32.mrb[0].mxu0
        %v1558 = vadd.f32 0.0, %v1557
        %v1559 = vpop.f32.mrb[0].mxu0
        %1560 = vmatprep.mubr.f32.mxu0 0.0
        %1561 = vmatmul.mubr.f32.gmra.mrb[0].mxu0 %v1099
        %v1562 = vpop.f32.mrb[0].mxu0
        %v1563 = vadd.f32 0.0, %v1562
        %v1564 = vpop.f32.mrb[0].mxu0
        %1565 = vdwg.mxu0
        %1566 = vxpose.xlu0.b32.start [1/16] %v1168, 128
        %1567 = vxpose.xlu0.b32.cont [2/16] %v1173, 128
        %1568 = vxpose.xlu0.b32.cont [3/16] 0.0, 128
        %1569 = vxpose.xlu0.b32.cont [4/16] 0.0, 128
        %1570 = vxpose.xlu0.b32.cont [5/16] 0.0, 128
        %1571 = vxpose.xlu0.b32.cont [6/16] 0.0, 128
        %1572 = vxpose.xlu0.b32.cont [7/16] 0.0, 128
        %1573 = vxpose.xlu0.b32.cont [8/16] 0.0, 128
        %1574 = vxpose.xlu0.b32.cont [9/16] 0.0, 128
        %1575 = vxpose.xlu0.b32.cont [10/16] 0.0, 128
        %1576 = vxpose.xlu0.b32.cont [11/16] 0.0, 128
        %1577 = vxpose.xlu0.b32.cont [12/16] 0.0, 128
        %1578 = vxpose.xlu0.b32.cont [13/16] 0.0, 128
        %1579 = vxpose.xlu0.b32.cont [14/16] 0.0, 128
        %1580 = vxpose.xlu0.b32.cont [15/16] 0.0, 128
        %1581 = vxpose.xlu0.b32.end [16/16] 0.0, 128
        %v1582 = vpop.trf.xlu0
        %v1583 = vpop.trf.xlu0
        %v1584 = vpop.trf.xlu0
        %v1585 = vpop.trf.xlu0
        %v1586 = vpop.trf.xlu0
        %v1587 = vpop.trf.xlu0
        %v1588 = vpop.trf.xlu0
        %v1589 = vpop.trf.xlu0
        %v1590 = vpop.trf.xlu0
        %v1591 = vpop.trf.xlu0
        %v1592 = vpop.trf.xlu0
        %v1593 = vpop.trf.xlu0
        %v1594 = vpop.trf.xlu0
        %v1595 = vpop.trf.xlu0
        %v1596 = vpop.trf.xlu0
        %v1597 = vpop.trf.xlu0
        %1598 = vxpose.xlu0.b32.start [1/16] %v1178, 128
        %1599 = vxpose.xlu0.b32.cont [2/16] %v1183, 128
        %1600 = vxpose.xlu0.b32.cont [3/16] 0.0, 128
        %1601 = vxpose.xlu0.b32.cont [4/16] 0.0, 128
        %1602 = vxpose.xlu0.b32.cont [5/16] 0.0, 128
        %1603 = vxpose.xlu0.b32.cont [6/16] 0.0, 128
        %1604 = vxpose.xlu0.b32.cont [7/16] 0.0, 128
        %1605 = vxpose.xlu0.b32.cont [8/16] 0.0, 128
        %1606 = vxpose.xlu0.b32.cont [9/16] 0.0, 128
        %1607 = vxpose.xlu0.b32.cont [10/16] 0.0, 128
        %1608 = vxpose.xlu0.b32.cont [11/16] 0.0, 128
        %1609 = vxpose.xlu0.b32.cont [12/16] 0.0, 128
        %1610 = vxpose.xlu0.b32.cont [13/16] 0.0, 128
        %1611 = vxpose.xlu0.b32.cont [14/16] 0.0, 128
        %1612 = vxpose.xlu0.b32.cont [15/16] 0.0, 128
        %1613 = vxpose.xlu0.b32.end [16/16] 0.0, 128
        %v1614 = vpop.trf.xlu0
        %v1615 = vpop.trf.xlu0
        %v1616 = vpop.trf.xlu0
        %v1617 = vpop.trf.xlu0
        %v1618 = vpop.trf.xlu0
        %v1619 = vpop.trf.xlu0
        %v1620 = vpop.trf.xlu0
        %v1621 = vpop.trf.xlu0
        %v1622 = vpop.trf.xlu0
        %v1623 = vpop.trf.xlu0
        %v1624 = vpop.trf.xlu0
        %v1625 = vpop.trf.xlu0
        %v1626 = vpop.trf.xlu0
        %v1627 = vpop.trf.xlu0
        %v1628 = vpop.trf.xlu0
        %v1629 = vpop.trf.xlu0
        %1630 = vxpose.xlu0.b32.start [1/16] %v1188, 128
        %1631 = vxpose.xlu0.b32.cont [2/16] %v1193, 128
        %1632 = vxpose.xlu0.b32.cont [3/16] 0.0, 128
        %1633 = vxpose.xlu0.b32.cont [4/16] 0.0, 128
        %1634 = vxpose.xlu0.b32.cont [5/16] 0.0, 128
        %1635 = vxpose.xlu0.b32.cont [6/16] 0.0, 128
        %1636 = vxpose.xlu0.b32.cont [7/16] 0.0, 128
        %1637 = vxpose.xlu0.b32.cont [8/16] 0.0, 128
        %1638 = vxpose.xlu0.b32.cont [9/16] 0.0, 128
        %1639 = vxpose.xlu0.b32.cont [10/16] 0.0, 128
        %1640 = vxpose.xlu0.b32.cont [11/16] 0.0, 128
        %1641 = vxpose.xlu0.b32.cont [12/16] 0.0, 128
        %1642 = vxpose.xlu0.b32.cont [13/16] 0.0, 128
        %1643 = vxpose.xlu0.b32.cont [14/16] 0.0, 128
        %1644 = vxpose.xlu0.b32.cont [15/16] 0.0, 128
        %1645 = vxpose.xlu0.b32.end [16/16] 0.0, 128
        %v1646 = vpop.trf.xlu0
        %v1647 = vpop.trf.xlu0
        %v1648 = vpop.trf.xlu0
        %v1649 = vpop.trf.xlu0
        %v1650 = vpop.trf.xlu0
        %v1651 = vpop.trf.xlu0
        %v1652 = vpop.trf.xlu0
        %v1653 = vpop.trf.xlu0
        %v1654 = vpop.trf.xlu0
        %v1655 = vpop.trf.xlu0
        %v1656 = vpop.trf.xlu0
        %v1657 = vpop.trf.xlu0
        %v1658 = vpop.trf.xlu0
        %v1659 = vpop.trf.xlu0
        %v1660 = vpop.trf.xlu0
        %v1661 = vpop.trf.xlu0
        %1662 = vxpose.xlu0.b32.start [1/16] %v1198, 128
        %1663 = vxpose.xlu0.b32.cont [2/16] %v1203, 128
        %1664 = vxpose.xlu0.b32.cont [3/16] 0.0, 128
        %1665 = vxpose.xlu0.b32.cont [4/16] 0.0, 128
        %1666 = vxpose.xlu0.b32.cont [5/16] 0.0, 128
        %1667 = vxpose.xlu0.b32.cont [6/16] 0.0, 128
        %1668 = vxpose.xlu0.b32.cont [7/16] 0.0, 128
        %1669 = vxpose.xlu0.b32.cont [8/16] 0.0, 128
        %1670 = vxpose.xlu0.b32.cont [9/16] 0.0, 128
        %1671 = vxpose.xlu0.b32.cont [10/16] 0.0, 128
        %1672 = vxpose.xlu0.b32.cont [11/16] 0.0, 128
        %1673 = vxpose.xlu0.b32.cont [12/16] 0.0, 128
        %1674 = vxpose.xlu0.b32.cont [13/16] 0.0, 128
        %1675 = vxpose.xlu0.b32.cont [14/16] 0.0, 128
        %1676 = vxpose.xlu0.b32.cont [15/16] 0.0, 128
        %1677 = vxpose.xlu0.b32.end [16/16] 0.0, 128
        %v1678 = vpop.trf.xlu0
        %v1679 = vpop.trf.xlu0
        %v1680 = vpop.trf.xlu0
        %v1681 = vpop.trf.xlu0
        %v1682 = vpop.trf.xlu0
        %v1683 = vpop.trf.xlu0
        %v1684 = vpop.trf.xlu0
        %v1685 = vpop.trf.xlu0
        %v1686 = vpop.trf.xlu0
        %v1687 = vpop.trf.xlu0
        %v1688 = vpop.trf.xlu0
        %v1689 = vpop.trf.xlu0
        %v1690 = vpop.trf.xlu0
        %v1691 = vpop.trf.xlu0
        %v1692 = vpop.trf.xlu0
        %v1693 = vpop.trf.xlu0
        %1694 = vxpose.xlu0.b32.start [1/16] %v1208, 128
        %1695 = vxpose.xlu0.b32.cont [2/16] %v1213, 128
        %1696 = vxpose.xlu0.b32.cont [3/16] 0.0, 128
        %1697 = vxpose.xlu0.b32.cont [4/16] 0.0, 128
        %1698 = vxpose.xlu0.b32.cont [5/16] 0.0, 128
        %1699 = vxpose.xlu0.b32.cont [6/16] 0.0, 128
        %1700 = vxpose.xlu0.b32.cont [7/16] 0.0, 128
        %1701 = vxpose.xlu0.b32.cont [8/16] 0.0, 128
        %1702 = vxpose.xlu0.b32.cont [9/16] 0.0, 128
        %1703 = vxpose.xlu0.b32.cont [10/16] 0.0, 128
        %1704 = vxpose.xlu0.b32.cont [11/16] 0.0, 128
        %1705 = vxpose.xlu0.b32.cont [12/16] 0.0, 128
        %1706 = vxpose.xlu0.b32.cont [13/16] 0.0, 128
        %1707 = vxpose.xlu0.b32.cont [14/16] 0.0, 128
        %1708 = vxpose.xlu0.b32.cont [15/16] 0.0, 128
        %1709 = vxpose.xlu0.b32.end [16/16] 0.0, 128
        %v1710 = vpop.trf.xlu0
        %v1711 = vpop.trf.xlu0
        %v1712 = vpop.trf.xlu0
        %v1713 = vpop.trf.xlu0
        %v1714 = vpop.trf.xlu0
        %v1715 = vpop.trf.xlu0
        %v1716 = vpop.trf.xlu0
        %v1717 = vpop.trf.xlu0
        %v1718 = vpop.trf.xlu0
        %v1719 = vpop.trf.xlu0
        %v1720 = vpop.trf.xlu0
        %v1721 = vpop.trf.xlu0
        %v1722 = vpop.trf.xlu0
        %v1723 = vpop.trf.xlu0
        %v1724 = vpop.trf.xlu0
        %v1725 = vpop.trf.xlu0
        %1726 = vxpose.xlu0.b32.start [1/16] %v1218, 128
        %1727 = vxpose.xlu0.b32.cont [2/16] %v1223, 128
        %1728 = vxpose.xlu0.b32.cont [3/16] 0.0, 128
        %1729 = vxpose.xlu0.b32.cont [4/16] 0.0, 128
        %1730 = vxpose.xlu0.b32.cont [5/16] 0.0, 128
        %1731 = vxpose.xlu0.b32.cont [6/16] 0.0, 128
        %1732 = vxpose.xlu0.b32.cont [7/16] 0.0, 128
        %1733 = vxpose.xlu0.b32.cont [8/16] 0.0, 128
        %1734 = vxpose.xlu0.b32.cont [9/16] 0.0, 128
        %1735 = vxpose.xlu0.b32.cont [10/16] 0.0, 128
        %1736 = vxpose.xlu0.b32.cont [11/16] 0.0, 128
        %1737 = vxpose.xlu0.b32.cont [12/16] 0.0, 128
        %1738 = vxpose.xlu0.b32.cont [13/16] 0.0, 128
        %1739 = vxpose.xlu0.b32.cont [14/16] 0.0, 128
        %1740 = vxpose.xlu0.b32.cont [15/16] 0.0, 128
        %1741 = vxpose.xlu0.b32.end [16/16] 0.0, 128
        %v1742 = vpop.trf.xlu0
        %v1743 = vpop.trf.xlu0
        %v1744 = vpop.trf.xlu0
        %v1745 = vpop.trf.xlu0
        %v1746 = vpop.trf.xlu0
        %v1747 = vpop.trf.xlu0
        %v1748 = vpop.trf.xlu0
        %v1749 = vpop.trf.xlu0
        %v1750 = vpop.trf.xlu0
        %v1751 = vpop.trf.xlu0
        %v1752 = vpop.trf.xlu0
        %v1753 = vpop.trf.xlu0
        %v1754 = vpop.trf.xlu0
        %v1755 = vpop.trf.xlu0
        %v1756 = vpop.trf.xlu0
        %v1757 = vpop.trf.xlu0
        %1758 = vxpose.xlu0.b32.start [1/16] %v1228, 128
        %1759 = vxpose.xlu0.b32.cont [2/16] %v1233, 128
        %1760 = vxpose.xlu0.b32.cont [3/16] 0.0, 128
        %1761 = vxpose.xlu0.b32.cont [4/16] 0.0, 128
        %1762 = vxpose.xlu0.b32.cont [5/16] 0.0, 128
        %1763 = vxpose.xlu0.b32.cont [6/16] 0.0, 128
        %1764 = vxpose.xlu0.b32.cont [7/16] 0.0, 128
        %1765 = vxpose.xlu0.b32.cont [8/16] 0.0, 128
        %1766 = vxpose.xlu0.b32.cont [9/16] 0.0, 128
        %1767 = vxpose.xlu0.b32.cont [10/16] 0.0, 128
        %1768 = vxpose.xlu0.b32.cont [11/16] 0.0, 128
        %1769 = vxpose.xlu0.b32.cont [12/16] 0.0, 128
        %1770 = vxpose.xlu0.b32.cont [13/16] 0.0, 128
        %1771 = vxpose.xlu0.b32.cont [14/16] 0.0, 128
        %1772 = vxpose.xlu0.b32.cont [15/16] 0.0, 128
        %1773 = vxpose.xlu0.b32.end [16/16] 0.0, 128
        %v1774 = vpop.trf.xlu0
        %v1775 = vpop.trf.xlu0
        %v1776 = vpop.trf.xlu0
        %v1777 = vpop.trf.xlu0
        %v1778 = vpop.trf.xlu0
        %v1779 = vpop.trf.xlu0
        %v1780 = vpop.trf.xlu0
        %v1781 = vpop.trf.xlu0
        %v1782 = vpop.trf.xlu0
        %v1783 = vpop.trf.xlu0
        %v1784 = vpop.trf.xlu0
        %v1785 = vpop.trf.xlu0
        %v1786 = vpop.trf.xlu0
        %v1787 = vpop.trf.xlu0
        %v1788 = vpop.trf.xlu0
        %v1789 = vpop.trf.xlu0
        %1790 = vxpose.xlu0.b32.start [1/16] %v1238, 128
        %1791 = vxpose.xlu0.b32.cont [2/16] %v1243, 128
        %1792 = vxpose.xlu0.b32.cont [3/16] 0.0, 128
        %1793 = vxpose.xlu0.b32.cont [4/16] 0.0, 128
        %1794 = vxpose.xlu0.b32.cont [5/16] 0.0, 128
        %1795 = vxpose.xlu0.b32.cont [6/16] 0.0, 128
        %1796 = vxpose.xlu0.b32.cont [7/16] 0.0, 128
        %1797 = vxpose.xlu0.b32.cont [8/16] 0.0, 128
        %1798 = vxpose.xlu0.b32.cont [9/16] 0.0, 128
        %1799 = vxpose.xlu0.b32.cont [10/16] 0.0, 128
        %1800 = vxpose.xlu0.b32.cont [11/16] 0.0, 128
        %1801 = vxpose.xlu0.b32.cont [12/16] 0.0, 128
        %1802 = vxpose.xlu0.b32.cont [13/16] 0.0, 128
        %1803 = vxpose.xlu0.b32.cont [14/16] 0.0, 128
        %1804 = vxpose.xlu0.b32.cont [15/16] 0.0, 128
        %1805 = vxpose.xlu0.b32.end [16/16] 0.0, 128
        %v1806 = vpop.trf.xlu0
        %v1807 = vpop.trf.xlu0
        %v1808 = vpop.trf.xlu0
        %v1809 = vpop.trf.xlu0
        %v1810 = vpop.trf.xlu0
        %v1811 = vpop.trf.xlu0
        %v1812 = vpop.trf.xlu0
        %v1813 = vpop.trf.xlu0
        %v1814 = vpop.trf.xlu0
        %v1815 = vpop.trf.xlu0
        %v1816 = vpop.trf.xlu0
        %v1817 = vpop.trf.xlu0
        %v1818 = vpop.trf.xlu0
        %v1819 = vpop.trf.xlu0
        %v1820 = vpop.trf.xlu0
        %v1821 = vpop.trf.xlu0
        %1822 = vxpose.xlu0.b32.start [1/16] %v1248, 128
        %1823 = vxpose.xlu0.b32.cont [2/16] %v1253, 128
        %1824 = vxpose.xlu0.b32.cont [3/16] 0.0, 128
        %1825 = vxpose.xlu0.b32.cont [4/16] 0.0, 128
        %1826 = vxpose.xlu0.b32.cont [5/16] 0.0, 128
        %1827 = vxpose.xlu0.b32.cont [6/16] 0.0, 128
        %1828 = vxpose.xlu0.b32.cont [7/16] 0.0, 128
        %1829 = vxpose.xlu0.b32.cont [8/16] 0.0, 128
        %1830 = vxpose.xlu0.b32.cont [9/16] 0.0, 128
        %1831 = vxpose.xlu0.b32.cont [10/16] 0.0, 128
        %1832 = vxpose.xlu0.b32.cont [11/16] 0.0, 128
        %1833 = vxpose.xlu0.b32.cont [12/16] 0.0, 128
        %1834 = vxpose.xlu0.b32.cont [13/16] 0.0, 128
        %1835 = vxpose.xlu0.b32.cont [14/16] 0.0, 128
        %1836 = vxpose.xlu0.b32.cont [15/16] 0.0, 128
        %1837 = vxpose.xlu0.b32.end [16/16] 0.0, 128
        %v1838 = vpop.trf.xlu0
        %v1839 = vpop.trf.xlu0
        %v1840 = vpop.trf.xlu0
        %v1841 = vpop.trf.xlu0
        %v1842 = vpop.trf.xlu0
        %v1843 = vpop.trf.xlu0
        %v1844 = vpop.trf.xlu0
        %v1845 = vpop.trf.xlu0
        %v1846 = vpop.trf.xlu0
        %v1847 = vpop.trf.xlu0
        %v1848 = vpop.trf.xlu0
        %v1849 = vpop.trf.xlu0
        %v1850 = vpop.trf.xlu0
        %v1851 = vpop.trf.xlu0
        %v1852 = vpop.trf.xlu0
        %v1853 = vpop.trf.xlu0
        %1854 = vxpose.xlu0.b32.start [1/16] %v1258, 128
        %1855 = vxpose.xlu0.b32.cont [2/16] %v1263, 128
        %1856 = vxpose.xlu0.b32.cont [3/16] 0.0, 128
        %1857 = vxpose.xlu0.b32.cont [4/16] 0.0, 128
        %1858 = vxpose.xlu0.b32.cont [5/16] 0.0, 128
        %1859 = vxpose.xlu0.b32.cont [6/16] 0.0, 128
        %1860 = vxpose.xlu0.b32.cont [7/16] 0.0, 128
        %1861 = vxpose.xlu0.b32.cont [8/16] 0.0, 128
        %1862 = vxpose.xlu0.b32.cont [9/16] 0.0, 128
        %1863 = vxpose.xlu0.b32.cont [10/16] 0.0, 128
        %1864 = vxpose.xlu0.b32.cont [11/16] 0.0, 128
        %1865 = vxpose.xlu0.b32.cont [12/16] 0.0, 128
        %1866 = vxpose.xlu0.b32.cont [13/16] 0.0, 128
        %1867 = vxpose.xlu0.b32.cont [14/16] 0.0, 128
        %1868 = vxpose.xlu0.b32.cont [15/16] 0.0, 128
        %1869 = vxpose.xlu0.b32.end [16/16] 0.0, 128
        %v1870 = vpop.trf.xlu0
        %v1871 = vpop.trf.xlu0
        %v1872 = vpop.trf.xlu0
        %v1873 = vpop.trf.xlu0
        %v1874 = vpop.trf.xlu0
        %v1875 = vpop.trf.xlu0
        %v1876 = vpop.trf.xlu0
        %v1877 = vpop.trf.xlu0
        %v1878 = vpop.trf.xlu0
        %v1879 = vpop.trf.xlu0
        %v1880 = vpop.trf.xlu0
        %v1881 = vpop.trf.xlu0
        %v1882 = vpop.trf.xlu0
        %v1883 = vpop.trf.xlu0
        %v1884 = vpop.trf.xlu0
        %v1885 = vpop.trf.xlu0
        %1886 = vxpose.xlu0.b32.start [1/16] %v1268, 128
        %1887 = vxpose.xlu0.b32.cont [2/16] %v1273, 128
        %1888 = vxpose.xlu0.b32.cont [3/16] 0.0, 128
        %1889 = vxpose.xlu0.b32.cont [4/16] 0.0, 128
        %1890 = vxpose.xlu0.b32.cont [5/16] 0.0, 128
        %1891 = vxpose.xlu0.b32.cont [6/16] 0.0, 128
        %1892 = vxpose.xlu0.b32.cont [7/16] 0.0, 128
        %1893 = vxpose.xlu0.b32.cont [8/16] 0.0, 128
        %1894 = vxpose.xlu0.b32.cont [9/16] 0.0, 128
        %1895 = vxpose.xlu0.b32.cont [10/16] 0.0, 128
        %1896 = vxpose.xlu0.b32.cont [11/16] 0.0, 128
        %1897 = vxpose.xlu0.b32.cont [12/16] 0.0, 128
        %1898 = vxpose.xlu0.b32.cont [13/16] 0.0, 128
        %1899 = vxpose.xlu0.b32.cont [14/16] 0.0, 128
        %1900 = vxpose.xlu0.b32.cont [15/16] 0.0, 128
        %1901 = vxpose.xlu0.b32.end [16/16] 0.0, 128
        %v1902 = vpop.trf.xlu0
        %v1903 = vpop.trf.xlu0
        %v1904 = vpop.trf.xlu0
        %v1905 = vpop.trf.xlu0
        %v1906 = vpop.trf.xlu0
        %v1907 = vpop.trf.xlu0
        %v1908 = vpop.trf.xlu0
        %v1909 = vpop.trf.xlu0
        %v1910 = vpop.trf.xlu0
        %v1911 = vpop.trf.xlu0
        %v1912 = vpop.trf.xlu0
        %v1913 = vpop.trf.xlu0
        %v1914 = vpop.trf.xlu0
        %v1915 = vpop.trf.xlu0
        %v1916 = vpop.trf.xlu0
        %v1917 = vpop.trf.xlu0
        %1918 = vxpose.xlu0.b32.start [1/16] %v1278, 128
        %1919 = vxpose.xlu0.b32.cont [2/16] %v1283, 128
        %1920 = vxpose.xlu0.b32.cont [3/16] 0.0, 128
        %1921 = vxpose.xlu0.b32.cont [4/16] 0.0, 128
        %1922 = vxpose.xlu0.b32.cont [5/16] 0.0, 128
        %1923 = vxpose.xlu0.b32.cont [6/16] 0.0, 128
        %1924 = vxpose.xlu0.b32.cont [7/16] 0.0, 128
        %1925 = vxpose.xlu0.b32.cont [8/16] 0.0, 128
        %1926 = vxpose.xlu0.b32.cont [9/16] 0.0, 128
        %1927 = vxpose.xlu0.b32.cont [10/16] 0.0, 128
        %1928 = vxpose.xlu0.b32.cont [11/16] 0.0, 128
        %1929 = vxpose.xlu0.b32.cont [12/16] 0.0, 128
        %1930 = vxpose.xlu0.b32.cont [13/16] 0.0, 128
        %1931 = vxpose.xlu0.b32.cont [14/16] 0.0, 128
        %1932 = vxpose.xlu0.b32.cont [15/16] 0.0, 128
        %1933 = vxpose.xlu0.b32.end [16/16] 0.0, 128
        %v1934 = vpop.trf.xlu0
        %v1935 = vpop.trf.xlu0
        %v1936 = vpop.trf.xlu0
        %v1937 = vpop.trf.xlu0
        %v1938 = vpop.trf.xlu0
        %v1939 = vpop.trf.xlu0
        %v1940 = vpop.trf.xlu0
        %v1941 = vpop.trf.xlu0
        %v1942 = vpop.trf.xlu0
        %v1943 = vpop.trf.xlu0
        %v1944 = vpop.trf.xlu0
        %v1945 = vpop.trf.xlu0
        %v1946 = vpop.trf.xlu0
        %v1947 = vpop.trf.xlu0
        %v1948 = vpop.trf.xlu0
        %v1949 = vpop.trf.xlu0
        %1950 = vxpose.xlu0.b32.start [1/16] %v1288, 128
        %1951 = vxpose.xlu0.b32.cont [2/16] %v1293, 128
        %1952 = vxpose.xlu0.b32.cont [3/16] 0.0, 128
        %1953 = vxpose.xlu0.b32.cont [4/16] 0.0, 128
        %1954 = vxpose.xlu0.b32.cont [5/16] 0.0, 128
        %1955 = vxpose.xlu0.b32.cont [6/16] 0.0, 128
        %1956 = vxpose.xlu0.b32.cont [7/16] 0.0, 128
        %1957 = vxpose.xlu0.b32.cont [8/16] 0.0, 128
        %1958 = vxpose.xlu0.b32.cont [9/16] 0.0, 128
        %1959 = vxpose.xlu0.b32.cont [10/16] 0.0, 128
        %1960 = vxpose.xlu0.b32.cont [11/16] 0.0, 128
        %1961 = vxpose.xlu0.b32.cont [12/16] 0.0, 128
        %1962 = vxpose.xlu0.b32.cont [13/16] 0.0, 128
        %1963 = vxpose.xlu0.b32.cont [14/16] 0.0, 128
        %1964 = vxpose.xlu0.b32.cont [15/16] 0.0, 128
        %1965 = vxpose.xlu0.b32.end [16/16] 0.0, 128
        %v1966 = vpop.trf.xlu0
        %v1967 = vpop.trf.xlu0
        %v1968 = vpop.trf.xlu0
        %v1969 = vpop.trf.xlu0
        %v1970 = vpop.trf.xlu0
        %v1971 = vpop.trf.xlu0
        %v1972 = vpop.trf.xlu0
        %v1973 = vpop.trf.xlu0
        %v1974 = vpop.trf.xlu0
        %v1975 = vpop.trf.xlu0
        %v1976 = vpop.trf.xlu0
        %v1977 = vpop.trf.xlu0
        %v1978 = vpop.trf.xlu0
        %v1979 = vpop.trf.xlu0
        %v1980 = vpop.trf.xlu0
        %v1981 = vpop.trf.xlu0
        %1982 = vxpose.xlu0.b32.start [1/16] %v1298, 128
        %1983 = vxpose.xlu0.b32.cont [2/16] %v1303, 128
        %1984 = vxpose.xlu0.b32.cont [3/16] 0.0, 128
        %1985 = vxpose.xlu0.b32.cont [4/16] 0.0, 128
        %1986 = vxpose.xlu0.b32.cont [5/16] 0.0, 128
        %1987 = vxpose.xlu0.b32.cont [6/16] 0.0, 128
        %1988 = vxpose.xlu0.b32.cont [7/16] 0.0, 128
        %1989 = vxpose.xlu0.b32.cont [8/16] 0.0, 128
        %1990 = vxpose.xlu0.b32.cont [9/16] 0.0, 128
        %1991 = vxpose.xlu0.b32.cont [10/16] 0.0, 128
        %1992 = vxpose.xlu0.b32.cont [11/16] 0.0, 128
        %1993 = vxpose.xlu0.b32.cont [12/16] 0.0, 128
        %1994 = vxpose.xlu0.b32.cont [13/16] 0.0, 128
        %1995 = vxpose.xlu0.b32.cont [14/16] 0.0, 128
        %1996 = vxpose.xlu0.b32.cont [15/16] 0.0, 128
        %1997 = vxpose.xlu0.b32.end [16/16] 0.0, 128
        %v1998 = vpop.trf.xlu0
        %v1999 = vpop.trf.xlu0
        %v2000 = vpop.trf.xlu0
        %v2001 = vpop.trf.xlu0
        %v2002 = vpop.trf.xlu0
        %v2003 = vpop.trf.xlu0
        %v2004 = vpop.trf.xlu0
        %v2005 = vpop.trf.xlu0
        %v2006 = vpop.trf.xlu0
        %v2007 = vpop.trf.xlu0
        %v2008 = vpop.trf.xlu0
        %v2009 = vpop.trf.xlu0
        %v2010 = vpop.trf.xlu0
        %v2011 = vpop.trf.xlu0
        %v2012 = vpop.trf.xlu0
        %v2013 = vpop.trf.xlu0
        %2014 = vxpose.xlu0.b32.start [1/16] %v1308, 128
        %2015 = vxpose.xlu0.b32.cont [2/16] %v1313, 128
        %2016 = vxpose.xlu0.b32.cont [3/16] 0.0, 128
        %2017 = vxpose.xlu0.b32.cont [4/16] 0.0, 128
        %2018 = vxpose.xlu0.b32.cont [5/16] 0.0, 128
        %2019 = vxpose.xlu0.b32.cont [6/16] 0.0, 128
        %2020 = vxpose.xlu0.b32.cont [7/16] 0.0, 128
        %2021 = vxpose.xlu0.b32.cont [8/16] 0.0, 128
        %2022 = vxpose.xlu0.b32.cont [9/16] 0.0, 128
        %2023 = vxpose.xlu0.b32.cont [10/16] 0.0, 128
        %2024 = vxpose.xlu0.b32.cont [11/16] 0.0, 128
        %2025 = vxpose.xlu0.b32.cont [12/16] 0.0, 128
        %2026 = vxpose.xlu0.b32.cont [13/16] 0.0, 128
        %2027 = vxpose.xlu0.b32.cont [14/16] 0.0, 128
        %2028 = vxpose.xlu0.b32.cont [15/16] 0.0, 128
        %2029 = vxpose.xlu0.b32.end [16/16] 0.0, 128
        %v2030 = vpop.trf.xlu0
        %v2031 = vpop.trf.xlu0
        %v2032 = vpop.trf.xlu0
        %v2033 = vpop.trf.xlu0
        %v2034 = vpop.trf.xlu0
        %v2035 = vpop.trf.xlu0
        %v2036 = vpop.trf.xlu0
        %v2037 = vpop.trf.xlu0
        %v2038 = vpop.trf.xlu0
        %v2039 = vpop.trf.xlu0
        %v2040 = vpop.trf.xlu0
        %v2041 = vpop.trf.xlu0
        %v2042 = vpop.trf.xlu0
        %v2043 = vpop.trf.xlu0
        %v2044 = vpop.trf.xlu0
        %v2045 = vpop.trf.xlu0
        %2046 = vxpose.xlu0.b32.start [1/16] %v1318, 128
        %2047 = vxpose.xlu0.b32.cont [2/16] %v1323, 128
        %2048 = vxpose.xlu0.b32.cont [3/16] 0.0, 128
        %2049 = vxpose.xlu0.b32.cont [4/16] 0.0, 128
        %2050 = vxpose.xlu0.b32.cont [5/16] 0.0, 128
        %2051 = vxpose.xlu0.b32.cont [6/16] 0.0, 128
        %2052 = vxpose.xlu0.b32.cont [7/16] 0.0, 128
        %2053 = vxpose.xlu0.b32.cont [8/16] 0.0, 128
        %2054 = vxpose.xlu0.b32.cont [9/16] 0.0, 128
        %2055 = vxpose.xlu0.b32.cont [10/16] 0.0, 128
        %2056 = vxpose.xlu0.b32.cont [11/16] 0.0, 128
        %2057 = vxpose.xlu0.b32.cont [12/16] 0.0, 128
        %2058 = vxpose.xlu0.b32.cont [13/16] 0.0, 128
        %2059 = vxpose.xlu0.b32.cont [14/16] 0.0, 128
        %2060 = vxpose.xlu0.b32.cont [15/16] 0.0, 128
        %2061 = vxpose.xlu0.b32.end [16/16] 0.0, 128
        %v2062 = vpop.trf.xlu0
        %v2063 = vpop.trf.xlu0
        %v2064 = vpop.trf.xlu0
        %v2065 = vpop.trf.xlu0
        %v2066 = vpop.trf.xlu0
        %v2067 = vpop.trf.xlu0
        %v2068 = vpop.trf.xlu0
        %v2069 = vpop.trf.xlu0
        %v2070 = vpop.trf.xlu0
        %v2071 = vpop.trf.xlu0
        %v2072 = vpop.trf.xlu0
        %v2073 = vpop.trf.xlu0
        %v2074 = vpop.trf.xlu0
        %v2075 = vpop.trf.xlu0
        %v2076 = vpop.trf.xlu0
        %v2077 = vpop.trf.xlu0
        %2078 = vxpose.xlu0.b32.start [1/16] %v1328, 128
        %2079 = vxpose.xlu0.b32.cont [2/16] %v1333, 128
        %2080 = vxpose.xlu0.b32.cont [3/16] 0.0, 128
        %2081 = vxpose.xlu0.b32.cont [4/16] 0.0, 128
        %2082 = vxpose.xlu0.b32.cont [5/16] 0.0, 128
        %2083 = vxpose.xlu0.b32.cont [6/16] 0.0, 128
        %2084 = vxpose.xlu0.b32.cont [7/16] 0.0, 128
        %2085 = vxpose.xlu0.b32.cont [8/16] 0.0, 128
        %2086 = vxpose.xlu0.b32.cont [9/16] 0.0, 128
        %2087 = vxpose.xlu0.b32.cont [10/16] 0.0, 128
        %2088 = vxpose.xlu0.b32.cont [11/16] 0.0, 128
        %2089 = vxpose.xlu0.b32.cont [12/16] 0.0, 128
        %2090 = vxpose.xlu0.b32.cont [13/16] 0.0, 128
        %2091 = vxpose.xlu0.b32.cont [14/16] 0.0, 128
        %2092 = vxpose.xlu0.b32.cont [15/16] 0.0, 128
        %2093 = vxpose.xlu0.b32.end [16/16] 0.0, 128
        %v2094 = vpop.trf.xlu0
        %v2095 = vpop.trf.xlu0
        %v2096 = vpop.trf.xlu0
        %v2097 = vpop.trf.xlu0
        %v2098 = vpop.trf.xlu0
        %v2099 = vpop.trf.xlu0
        %v2100 = vpop.trf.xlu0
        %v2101 = vpop.trf.xlu0
        %v2102 = vpop.trf.xlu0
        %v2103 = vpop.trf.xlu0
        %v2104 = vpop.trf.xlu0
        %v2105 = vpop.trf.xlu0
        %v2106 = vpop.trf.xlu0
        %v2107 = vpop.trf.xlu0
        %v2108 = vpop.trf.xlu0
        %v2109 = vpop.trf.xlu0
        %2110 = vxpose.xlu0.b32.start [1/16] %v1338, 128
        %2111 = vxpose.xlu0.b32.cont [2/16] %v1343, 128
        %2112 = vxpose.xlu0.b32.cont [3/16] 0.0, 128
        %2113 = vxpose.xlu0.b32.cont [4/16] 0.0, 128
        %2114 = vxpose.xlu0.b32.cont [5/16] 0.0, 128
        %2115 = vxpose.xlu0.b32.cont [6/16] 0.0, 128
        %2116 = vxpose.xlu0.b32.cont [7/16] 0.0, 128
        %2117 = vxpose.xlu0.b32.cont [8/16] 0.0, 128
        %2118 = vxpose.xlu0.b32.cont [9/16] 0.0, 128
        %2119 = vxpose.xlu0.b32.cont [10/16] 0.0, 128
        %2120 = vxpose.xlu0.b32.cont [11/16] 0.0, 128
        %2121 = vxpose.xlu0.b32.cont [12/16] 0.0, 128
        %2122 = vxpose.xlu0.b32.cont [13/16] 0.0, 128
        %2123 = vxpose.xlu0.b32.cont [14/16] 0.0, 128
        %2124 = vxpose.xlu0.b32.cont [15/16] 0.0, 128
        %2125 = vxpose.xlu0.b32.end [16/16] 0.0, 128
        %v2126 = vpop.trf.xlu0
        %v2127 = vpop.trf.xlu0
        %v2128 = vpop.trf.xlu0
        %v2129 = vpop.trf.xlu0
        %v2130 = vpop.trf.xlu0
        %v2131 = vpop.trf.xlu0
        %v2132 = vpop.trf.xlu0
        %v2133 = vpop.trf.xlu0
        %v2134 = vpop.trf.xlu0
        %v2135 = vpop.trf.xlu0
        %v2136 = vpop.trf.xlu0
        %v2137 = vpop.trf.xlu0
        %v2138 = vpop.trf.xlu0
        %v2139 = vpop.trf.xlu0
        %v2140 = vpop.trf.xlu0
        %v2141 = vpop.trf.xlu0
        %2142 = vxpose.xlu0.b32.start [1/16] %v1348, 128
        %2143 = vxpose.xlu0.b32.cont [2/16] %v1353, 128
        %2144 = vxpose.xlu0.b32.cont [3/16] 0.0, 128
        %2145 = vxpose.xlu0.b32.cont [4/16] 0.0, 128
        %2146 = vxpose.xlu0.b32.cont [5/16] 0.0, 128
        %2147 = vxpose.xlu0.b32.cont [6/16] 0.0, 128
        %2148 = vxpose.xlu0.b32.cont [7/16] 0.0, 128
        %2149 = vxpose.xlu0.b32.cont [8/16] 0.0, 128
        %2150 = vxpose.xlu0.b32.cont [9/16] 0.0, 128
        %2151 = vxpose.xlu0.b32.cont [10/16] 0.0, 128
        %2152 = vxpose.xlu0.b32.cont [11/16] 0.0, 128
        %2153 = vxpose.xlu0.b32.cont [12/16] 0.0, 128
        %2154 = vxpose.xlu0.b32.cont [13/16] 0.0, 128
        %2155 = vxpose.xlu0.b32.cont [14/16] 0.0, 128
        %2156 = vxpose.xlu0.b32.cont [15/16] 0.0, 128
        %2157 = vxpose.xlu0.b32.end [16/16] 0.0, 128
        %v2158 = vpop.trf.xlu0
        %v2159 = vpop.trf.xlu0
        %v2160 = vpop.trf.xlu0
        %v2161 = vpop.trf.xlu0
        %v2162 = vpop.trf.xlu0
        %v2163 = vpop.trf.xlu0
        %v2164 = vpop.trf.xlu0
        %v2165 = vpop.trf.xlu0
        %v2166 = vpop.trf.xlu0
        %v2167 = vpop.trf.xlu0
        %v2168 = vpop.trf.xlu0
        %v2169 = vpop.trf.xlu0
        %v2170 = vpop.trf.xlu0
        %v2171 = vpop.trf.xlu0
        %v2172 = vpop.trf.xlu0
        %v2173 = vpop.trf.xlu0
        %2174 = vxpose.xlu0.b32.start [1/16] %v1358, 128
        %2175 = vxpose.xlu0.b32.cont [2/16] %v1363, 128
        %2176 = vxpose.xlu0.b32.cont [3/16] 0.0, 128
        %2177 = vxpose.xlu0.b32.cont [4/16] 0.0, 128
        %2178 = vxpose.xlu0.b32.cont [5/16] 0.0, 128
        %2179 = vxpose.xlu0.b32.cont [6/16] 0.0, 128
        %2180 = vxpose.xlu0.b32.cont [7/16] 0.0, 128
        %2181 = vxpose.xlu0.b32.cont [8/16] 0.0, 128
        %2182 = vxpose.xlu0.b32.cont [9/16] 0.0, 128
        %2183 = vxpose.xlu0.b32.cont [10/16] 0.0, 128
        %2184 = vxpose.xlu0.b32.cont [11/16] 0.0, 128
        %2185 = vxpose.xlu0.b32.cont [12/16] 0.0, 128
        %2186 = vxpose.xlu0.b32.cont [13/16] 0.0, 128
        %2187 = vxpose.xlu0.b32.cont [14/16] 0.0, 128
        %2188 = vxpose.xlu0.b32.cont [15/16] 0.0, 128
        %2189 = vxpose.xlu0.b32.end [16/16] 0.0, 128
        %v2190 = vpop.trf.xlu0
        %v2191 = vpop.trf.xlu0
        %v2192 = vpop.trf.xlu0
        %v2193 = vpop.trf.xlu0
        %v2194 = vpop.trf.xlu0
        %v2195 = vpop.trf.xlu0
        %v2196 = vpop.trf.xlu0
        %v2197 = vpop.trf.xlu0
        %v2198 = vpop.trf.xlu0
        %v2199 = vpop.trf.xlu0
        %v2200 = vpop.trf.xlu0
        %v2201 = vpop.trf.xlu0
        %v2202 = vpop.trf.xlu0
        %v2203 = vpop.trf.xlu0
        %v2204 = vpop.trf.xlu0
        %v2205 = vpop.trf.xlu0
        %2206 = vxpose.xlu0.b32.start [1/16] %v1368, 128
        %2207 = vxpose.xlu0.b32.cont [2/16] %v1373, 128
        %2208 = vxpose.xlu0.b32.cont [3/16] 0.0, 128
        %2209 = vxpose.xlu0.b32.cont [4/16] 0.0, 128
        %2210 = vxpose.xlu0.b32.cont [5/16] 0.0, 128
        %2211 = vxpose.xlu0.b32.cont [6/16] 0.0, 128
        %2212 = vxpose.xlu0.b32.cont [7/16] 0.0, 128
        %2213 = vxpose.xlu0.b32.cont [8/16] 0.0, 128
        %2214 = vxpose.xlu0.b32.cont [9/16] 0.0, 128
        %2215 = vxpose.xlu0.b32.cont [10/16] 0.0, 128
        %2216 = vxpose.xlu0.b32.cont [11/16] 0.0, 128
        %2217 = vxpose.xlu0.b32.cont [12/16] 0.0, 128
        %2218 = vxpose.xlu0.b32.cont [13/16] 0.0, 128
        %2219 = vxpose.xlu0.b32.cont [14/16] 0.0, 128
        %2220 = vxpose.xlu0.b32.cont [15/16] 0.0, 128
        %2221 = vxpose.xlu0.b32.end [16/16] 0.0, 128
        %v2222 = vpop.trf.xlu0
        %v2223 = vpop.trf.xlu0
        %v2224 = vpop.trf.xlu0
        %v2225 = vpop.trf.xlu0
        %v2226 = vpop.trf.xlu0
        %v2227 = vpop.trf.xlu0
        %v2228 = vpop.trf.xlu0
        %v2229 = vpop.trf.xlu0
        %v2230 = vpop.trf.xlu0
        %v2231 = vpop.trf.xlu0
        %v2232 = vpop.trf.xlu0
        %v2233 = vpop.trf.xlu0
        %v2234 = vpop.trf.xlu0
        %v2235 = vpop.trf.xlu0
        %v2236 = vpop.trf.xlu0
        %v2237 = vpop.trf.xlu0
        %2238 = vxpose.xlu0.b32.start [1/16] %v1378, 128
        %2239 = vxpose.xlu0.b32.cont [2/16] %v1383, 128
        %2240 = vxpose.xlu0.b32.cont [3/16] 0.0, 128
        %2241 = vxpose.xlu0.b32.cont [4/16] 0.0, 128
        %2242 = vxpose.xlu0.b32.cont [5/16] 0.0, 128
        %2243 = vxpose.xlu0.b32.cont [6/16] 0.0, 128
        %2244 = vxpose.xlu0.b32.cont [7/16] 0.0, 128
        %2245 = vxpose.xlu0.b32.cont [8/16] 0.0, 128
        %2246 = vxpose.xlu0.b32.cont [9/16] 0.0, 128
        %2247 = vxpose.xlu0.b32.cont [10/16] 0.0, 128
        %2248 = vxpose.xlu0.b32.cont [11/16] 0.0, 128
        %2249 = vxpose.xlu0.b32.cont [12/16] 0.0, 128
        %2250 = vxpose.xlu0.b32.cont [13/16] 0.0, 128
        %2251 = vxpose.xlu0.b32.cont [14/16] 0.0, 128
        %2252 = vxpose.xlu0.b32.cont [15/16] 0.0, 128
        %2253 = vxpose.xlu0.b32.end [16/16] 0.0, 128
        %v2254 = vpop.trf.xlu0
        %v2255 = vpop.trf.xlu0
        %v2256 = vpop.trf.xlu0
        %v2257 = vpop.trf.xlu0
        %v2258 = vpop.trf.xlu0
        %v2259 = vpop.trf.xlu0
        %v2260 = vpop.trf.xlu0
        %v2261 = vpop.trf.xlu0
        %v2262 = vpop.trf.xlu0
        %v2263 = vpop.trf.xlu0
        %v2264 = vpop.trf.xlu0
        %v2265 = vpop.trf.xlu0
        %v2266 = vpop.trf.xlu0
        %v2267 = vpop.trf.xlu0
        %v2268 = vpop.trf.xlu0
        %v2269 = vpop.trf.xlu0
        %2270 = vxpose.xlu0.b32.start [1/16] %v1388, 128
        %2271 = vxpose.xlu0.b32.cont [2/16] %v1393, 128
        %2272 = vxpose.xlu0.b32.cont [3/16] 0.0, 128
        %2273 = vxpose.xlu0.b32.cont [4/16] 0.0, 128
        %2274 = vxpose.xlu0.b32.cont [5/16] 0.0, 128
        %2275 = vxpose.xlu0.b32.cont [6/16] 0.0, 128
        %2276 = vxpose.xlu0.b32.cont [7/16] 0.0, 128
        %2277 = vxpose.xlu0.b32.cont [8/16] 0.0, 128
        %2278 = vxpose.xlu0.b32.cont [9/16] 0.0, 128
        %2279 = vxpose.xlu0.b32.cont [10/16] 0.0, 128
        %2280 = vxpose.xlu0.b32.cont [11/16] 0.0, 128
        %2281 = vxpose.xlu0.b32.cont [12/16] 0.0, 128
        %2282 = vxpose.xlu0.b32.cont [13/16] 0.0, 128
        %2283 = vxpose.xlu0.b32.cont [14/16] 0.0, 128
        %2284 = vxpose.xlu0.b32.cont [15/16] 0.0, 128
        %2285 = vxpose.xlu0.b32.end [16/16] 0.0, 128
        %v2286 = vpop.trf.xlu0
        %v2287 = vpop.trf.xlu0
        %v2288 = vpop.trf.xlu0
        %v2289 = vpop.trf.xlu0
        %v2290 = vpop.trf.xlu0
        %v2291 = vpop.trf.xlu0
        %v2292 = vpop.trf.xlu0
        %v2293 = vpop.trf.xlu0
        %v2294 = vpop.trf.xlu0
        %v2295 = vpop.trf.xlu0
        %v2296 = vpop.trf.xlu0
        %v2297 = vpop.trf.xlu0
        %v2298 = vpop.trf.xlu0
        %v2299 = vpop.trf.xlu0
        %v2300 = vpop.trf.xlu0
        %v2301 = vpop.trf.xlu0
        %2302 = vxpose.xlu0.b32.start [1/16] %v1398, 128
        %2303 = vxpose.xlu0.b32.cont [2/16] %v1403, 128
        %2304 = vxpose.xlu0.b32.cont [3/16] 0.0, 128
        %2305 = vxpose.xlu0.b32.cont [4/16] 0.0, 128
        %2306 = vxpose.xlu0.b32.cont [5/16] 0.0, 128
        %2307 = vxpose.xlu0.b32.cont [6/16] 0.0, 128
        %2308 = vxpose.xlu0.b32.cont [7/16] 0.0, 128
        %2309 = vxpose.xlu0.b32.cont [8/16] 0.0, 128
        %2310 = vxpose.xlu0.b32.cont [9/16] 0.0, 128
        %2311 = vxpose.xlu0.b32.cont [10/16] 0.0, 128
        %2312 = vxpose.xlu0.b32.cont [11/16] 0.0, 128
        %2313 = vxpose.xlu0.b32.cont [12/16] 0.0, 128
        %2314 = vxpose.xlu0.b32.cont [13/16] 0.0, 128
        %2315 = vxpose.xlu0.b32.cont [14/16] 0.0, 128
        %2316 = vxpose.xlu0.b32.cont [15/16] 0.0, 128
        %2317 = vxpose.xlu0.b32.end [16/16] 0.0, 128
        %v2318 = vpop.trf.xlu0
        %v2319 = vpop.trf.xlu0
        %v2320 = vpop.trf.xlu0
        %v2321 = vpop.trf.xlu0
        %v2322 = vpop.trf.xlu0
        %v2323 = vpop.trf.xlu0
        %v2324 = vpop.trf.xlu0
        %v2325 = vpop.trf.xlu0
        %v2326 = vpop.trf.xlu0
        %v2327 = vpop.trf.xlu0
        %v2328 = vpop.trf.xlu0
        %v2329 = vpop.trf.xlu0
        %v2330 = vpop.trf.xlu0
        %v2331 = vpop.trf.xlu0
        %v2332 = vpop.trf.xlu0
        %v2333 = vpop.trf.xlu0
        %2334 = vxpose.xlu0.b32.start [1/16] %v1408, 128
        %2335 = vxpose.xlu0.b32.cont [2/16] %v1413, 128
        %2336 = vxpose.xlu0.b32.cont [3/16] 0.0, 128
        %2337 = vxpose.xlu0.b32.cont [4/16] 0.0, 128
        %2338 = vxpose.xlu0.b32.cont [5/16] 0.0, 128
        %2339 = vxpose.xlu0.b32.cont [6/16] 0.0, 128
        %2340 = vxpose.xlu0.b32.cont [7/16] 0.0, 128
        %2341 = vxpose.xlu0.b32.cont [8/16] 0.0, 128
        %2342 = vxpose.xlu0.b32.cont [9/16] 0.0, 128
        %2343 = vxpose.xlu0.b32.cont [10/16] 0.0, 128
        %2344 = vxpose.xlu0.b32.cont [11/16] 0.0, 128
        %2345 = vxpose.xlu0.b32.cont [12/16] 0.0, 128
        %2346 = vxpose.xlu0.b32.cont [13/16] 0.0, 128
        %2347 = vxpose.xlu0.b32.cont [14/16] 0.0, 128
        %2348 = vxpose.xlu0.b32.cont [15/16] 0.0, 128
        %2349 = vxpose.xlu0.b32.end [16/16] 0.0, 128
        %v2350 = vpop.trf.xlu0
        %v2351 = vpop.trf.xlu0
        %v2352 = vpop.trf.xlu0
        %v2353 = vpop.trf.xlu0
        %v2354 = vpop.trf.xlu0
        %v2355 = vpop.trf.xlu0
        %v2356 = vpop.trf.xlu0
        %v2357 = vpop.trf.xlu0
        %v2358 = vpop.trf.xlu0
        %v2359 = vpop.trf.xlu0
        %v2360 = vpop.trf.xlu0
        %v2361 = vpop.trf.xlu0
        %v2362 = vpop.trf.xlu0
        %v2363 = vpop.trf.xlu0
        %v2364 = vpop.trf.xlu0
        %v2365 = vpop.trf.xlu0
        %2366 = vxpose.xlu0.b32.start [1/16] %v1418, 128
        %2367 = vxpose.xlu0.b32.cont [2/16] %v1423, 128
        %2368 = vxpose.xlu0.b32.cont [3/16] 0.0, 128
        %2369 = vxpose.xlu0.b32.cont [4/16] 0.0, 128
        %2370 = vxpose.xlu0.b32.cont [5/16] 0.0, 128
        %2371 = vxpose.xlu0.b32.cont [6/16] 0.0, 128
        %2372 = vxpose.xlu0.b32.cont [7/16] 0.0, 128
        %2373 = vxpose.xlu0.b32.cont [8/16] 0.0, 128
        %2374 = vxpose.xlu0.b32.cont [9/16] 0.0, 128
        %2375 = vxpose.xlu0.b32.cont [10/16] 0.0, 128
        %2376 = vxpose.xlu0.b32.cont [11/16] 0.0, 128
        %2377 = vxpose.xlu0.b32.cont [12/16] 0.0, 128
        %2378 = vxpose.xlu0.b32.cont [13/16] 0.0, 128
        %2379 = vxpose.xlu0.b32.cont [14/16] 0.0, 128
        %2380 = vxpose.xlu0.b32.cont [15/16] 0.0, 128
        %2381 = vxpose.xlu0.b32.end [16/16] 0.0, 128
        %v2382 = vpop.trf.xlu0
        %v2383 = vpop.trf.xlu0
        %v2384 = vpop.trf.xlu0
        %v2385 = vpop.trf.xlu0
        %v2386 = vpop.trf.xlu0
        %v2387 = vpop.trf.xlu0
        %v2388 = vpop.trf.xlu0
        %v2389 = vpop.trf.xlu0
        %v2390 = vpop.trf.xlu0
        %v2391 = vpop.trf.xlu0
        %v2392 = vpop.trf.xlu0
        %v2393 = vpop.trf.xlu0
        %v2394 = vpop.trf.xlu0
        %v2395 = vpop.trf.xlu0
        %v2396 = vpop.trf.xlu0
        %v2397 = vpop.trf.xlu0
        %2398 = vxpose.xlu0.b32.start [1/16] %v1428, 128
        %2399 = vxpose.xlu0.b32.cont [2/16] %v1433, 128
        %2400 = vxpose.xlu0.b32.cont [3/16] 0.0, 128
        %2401 = vxpose.xlu0.b32.cont [4/16] 0.0, 128
        %2402 = vxpose.xlu0.b32.cont [5/16] 0.0, 128
        %2403 = vxpose.xlu0.b32.cont [6/16] 0.0, 128
        %2404 = vxpose.xlu0.b32.cont [7/16] 0.0, 128
        %2405 = vxpose.xlu0.b32.cont [8/16] 0.0, 128
        %2406 = vxpose.xlu0.b32.cont [9/16] 0.0, 128
        %2407 = vxpose.xlu0.b32.cont [10/16] 0.0, 128
        %2408 = vxpose.xlu0.b32.cont [11/16] 0.0, 128
        %2409 = vxpose.xlu0.b32.cont [12/16] 0.0, 128
        %2410 = vxpose.xlu0.b32.cont [13/16] 0.0, 128
        %2411 = vxpose.xlu0.b32.cont [14/16] 0.0, 128
        %2412 = vxpose.xlu0.b32.cont [15/16] 0.0, 128
        %2413 = vxpose.xlu0.b32.end [16/16] 0.0, 128
        %v2414 = vpop.trf.xlu0
        %v2415 = vpop.trf.xlu0
        %v2416 = vpop.trf.xlu0
        %v2417 = vpop.trf.xlu0
        %v2418 = vpop.trf.xlu0
        %v2419 = vpop.trf.xlu0
        %v2420 = vpop.trf.xlu0
        %v2421 = vpop.trf.xlu0
        %v2422 = vpop.trf.xlu0
        %v2423 = vpop.trf.xlu0
        %v2424 = vpop.trf.xlu0
        %v2425 = vpop.trf.xlu0
        %v2426 = vpop.trf.xlu0
        %v2427 = vpop.trf.xlu0
        %v2428 = vpop.trf.xlu0
        %v2429 = vpop.trf.xlu0
        %2430 = vxpose.xlu0.b32.start [1/16] %v1438, 128
        %2431 = vxpose.xlu0.b32.cont [2/16] %v1443, 128
        %2432 = vxpose.xlu0.b32.cont [3/16] 0.0, 128
        %2433 = vxpose.xlu0.b32.cont [4/16] 0.0, 128
        %2434 = vxpose.xlu0.b32.cont [5/16] 0.0, 128
        %2435 = vxpose.xlu0.b32.cont [6/16] 0.0, 128
        %2436 = vxpose.xlu0.b32.cont [7/16] 0.0, 128
        %2437 = vxpose.xlu0.b32.cont [8/16] 0.0, 128
        %2438 = vxpose.xlu0.b32.cont [9/16] 0.0, 128
        %2439 = vxpose.xlu0.b32.cont [10/16] 0.0, 128
        %2440 = vxpose.xlu0.b32.cont [11/16] 0.0, 128
        %2441 = vxpose.xlu0.b32.cont [12/16] 0.0, 128
        %2442 = vxpose.xlu0.b32.cont [13/16] 0.0, 128
        %2443 = vxpose.xlu0.b32.cont [14/16] 0.0, 128
        %2444 = vxpose.xlu0.b32.cont [15/16] 0.0, 128
        %2445 = vxpose.xlu0.b32.end [16/16] 0.0, 128
        %v2446 = vpop.trf.xlu0
        %v2447 = vpop.trf.xlu0
        %v2448 = vpop.trf.xlu0
        %v2449 = vpop.trf.xlu0
        %v2450 = vpop.trf.xlu0
        %v2451 = vpop.trf.xlu0
        %v2452 = vpop.trf.xlu0
        %v2453 = vpop.trf.xlu0
        %v2454 = vpop.trf.xlu0
        %v2455 = vpop.trf.xlu0
        %v2456 = vpop.trf.xlu0
        %v2457 = vpop.trf.xlu0
        %v2458 = vpop.trf.xlu0
        %v2459 = vpop.trf.xlu0
        %v2460 = vpop.trf.xlu0
        %v2461 = vpop.trf.xlu0
        %2462 = vxpose.xlu0.b32.start [1/16] %v1448, 128
        %2463 = vxpose.xlu0.b32.cont [2/16] %v1453, 128
        %2464 = vxpose.xlu0.b32.cont [3/16] 0.0, 128
        %2465 = vxpose.xlu0.b32.cont [4/16] 0.0, 128
        %2466 = vxpose.xlu0.b32.cont [5/16] 0.0, 128
        %2467 = vxpose.xlu0.b32.cont [6/16] 0.0, 128
        %2468 = vxpose.xlu0.b32.cont [7/16] 0.0, 128
        %2469 = vxpose.xlu0.b32.cont [8/16] 0.0, 128
        %2470 = vxpose.xlu0.b32.cont [9/16] 0.0, 128
        %2471 = vxpose.xlu0.b32.cont [10/16] 0.0, 128
        %2472 = vxpose.xlu0.b32.cont [11/16] 0.0, 128
        %2473 = vxpose.xlu0.b32.cont [12/16] 0.0, 128
        %2474 = vxpose.xlu0.b32.cont [13/16] 0.0, 128
        %2475 = vxpose.xlu0.b32.cont [14/16] 0.0, 128
        %2476 = vxpose.xlu0.b32.cont [15/16] 0.0, 128
        %2477 = vxpose.xlu0.b32.end [16/16] 0.0, 128
        %v2478 = vpop.trf.xlu0
        %v2479 = vpop.trf.xlu0
        %v2480 = vpop.trf.xlu0
        %v2481 = vpop.trf.xlu0
        %v2482 = vpop.trf.xlu0
        %v2483 = vpop.trf.xlu0
        %v2484 = vpop.trf.xlu0
        %v2485 = vpop.trf.xlu0
        %v2486 = vpop.trf.xlu0
        %v2487 = vpop.trf.xlu0
        %v2488 = vpop.trf.xlu0
        %v2489 = vpop.trf.xlu0
        %v2490 = vpop.trf.xlu0
        %v2491 = vpop.trf.xlu0
        %v2492 = vpop.trf.xlu0
        %v2493 = vpop.trf.xlu0
        %2494 = vxpose.xlu0.b32.start [1/16] %v1458, 128
        %2495 = vxpose.xlu0.b32.cont [2/16] %v1463, 128
        %2496 = vxpose.xlu0.b32.cont [3/16] 0.0, 128
        %2497 = vxpose.xlu0.b32.cont [4/16] 0.0, 128
        %2498 = vxpose.xlu0.b32.cont [5/16] 0.0, 128
        %2499 = vxpose.xlu0.b32.cont [6/16] 0.0, 128
        %2500 = vxpose.xlu0.b32.cont [7/16] 0.0, 128
        %2501 = vxpose.xlu0.b32.cont [8/16] 0.0, 128
        %2502 = vxpose.xlu0.b32.cont [9/16] 0.0, 128
        %2503 = vxpose.xlu0.b32.cont [10/16] 0.0, 128
        %2504 = vxpose.xlu0.b32.cont [11/16] 0.0, 128
        %2505 = vxpose.xlu0.b32.cont [12/16] 0.0, 128
        %2506 = vxpose.xlu0.b32.cont [13/16] 0.0, 128
        %2507 = vxpose.xlu0.b32.cont [14/16] 0.0, 128
        %2508 = vxpose.xlu0.b32.cont [15/16] 0.0, 128
        %2509 = vxpose.xlu0.b32.end [16/16] 0.0, 128
        %v2510 = vpop.trf.xlu0
        %v2511 = vpop.trf.xlu0
        %v2512 = vpop.trf.xlu0
        %v2513 = vpop.trf.xlu0
        %v2514 = vpop.trf.xlu0
        %v2515 = vpop.trf.xlu0
        %v2516 = vpop.trf.xlu0
        %v2517 = vpop.trf.xlu0
        %v2518 = vpop.trf.xlu0
        %v2519 = vpop.trf.xlu0
        %v2520 = vpop.trf.xlu0
        %v2521 = vpop.trf.xlu0
        %v2522 = vpop.trf.xlu0
        %v2523 = vpop.trf.xlu0
        %v2524 = vpop.trf.xlu0
        %v2525 = vpop.trf.xlu0
        %2526 = vxpose.xlu0.b32.start [1/16] %v1468, 128
        %2527 = vxpose.xlu0.b32.cont [2/16] %v1473, 128
        %2528 = vxpose.xlu0.b32.cont [3/16] 0.0, 128
        %2529 = vxpose.xlu0.b32.cont [4/16] 0.0, 128
        %2530 = vxpose.xlu0.b32.cont [5/16] 0.0, 128
        %2531 = vxpose.xlu0.b32.cont [6/16] 0.0, 128
        %2532 = vxpose.xlu0.b32.cont [7/16] 0.0, 128
        %2533 = vxpose.xlu0.b32.cont [8/16] 0.0, 128
        %2534 = vxpose.xlu0.b32.cont [9/16] 0.0, 128
        %2535 = vxpose.xlu0.b32.cont [10/16] 0.0, 128
        %2536 = vxpose.xlu0.b32.cont [11/16] 0.0, 128
        %2537 = vxpose.xlu0.b32.cont [12/16] 0.0, 128
        %2538 = vxpose.xlu0.b32.cont [13/16] 0.0, 128
        %2539 = vxpose.xlu0.b32.cont [14/16] 0.0, 128
        %2540 = vxpose.xlu0.b32.cont [15/16] 0.0, 128
        %2541 = vxpose.xlu0.b32.end [16/16] 0.0, 128
        %v2542 = vpop.trf.xlu0
        %v2543 = vpop.trf.xlu0
        %v2544 = vpop.trf.xlu0
        %v2545 = vpop.trf.xlu0
        %v2546 = vpop.trf.xlu0
        %v2547 = vpop.trf.xlu0
        %v2548 = vpop.trf.xlu0
        %v2549 = vpop.trf.xlu0
        %v2550 = vpop.trf.xlu0
        %v2551 = vpop.trf.xlu0
        %v2552 = vpop.trf.xlu0
        %v2553 = vpop.trf.xlu0
        %v2554 = vpop.trf.xlu0
        %v2555 = vpop.trf.xlu0
        %v2556 = vpop.trf.xlu0
        %v2557 = vpop.trf.xlu0
        %2558 = vxpose.xlu0.b32.start [1/16] %v1478, 128
        %2559 = vxpose.xlu0.b32.cont [2/16] %v1483, 128
        %2560 = vxpose.xlu0.b32.cont [3/16] 0.0, 128
        %2561 = vxpose.xlu0.b32.cont [4/16] 0.0, 128
        %2562 = vxpose.xlu0.b32.cont [5/16] 0.0, 128
        %2563 = vxpose.xlu0.b32.cont [6/16] 0.0, 128
        %2564 = vxpose.xlu0.b32.cont [7/16] 0.0, 128
        %2565 = vxpose.xlu0.b32.cont [8/16] 0.0, 128
        %2566 = vxpose.xlu0.b32.cont [9/16] 0.0, 128
        %2567 = vxpose.xlu0.b32.cont [10/16] 0.0, 128
        %2568 = vxpose.xlu0.b32.cont [11/16] 0.0, 128
        %2569 = vxpose.xlu0.b32.cont [12/16] 0.0, 128
        %2570 = vxpose.xlu0.b32.cont [13/16] 0.0, 128
        %2571 = vxpose.xlu0.b32.cont [14/16] 0.0, 128
        %2572 = vxpose.xlu0.b32.cont [15/16] 0.0, 128
        %2573 = vxpose.xlu0.b32.end [16/16] 0.0, 128
        %v2574 = vpop.trf.xlu0
        %v2575 = vpop.trf.xlu0
        %v2576 = vpop.trf.xlu0
        %v2577 = vpop.trf.xlu0
        %v2578 = vpop.trf.xlu0
        %v2579 = vpop.trf.xlu0
        %v2580 = vpop.trf.xlu0
        %v2581 = vpop.trf.xlu0
        %v2582 = vpop.trf.xlu0
        %v2583 = vpop.trf.xlu0
        %v2584 = vpop.trf.xlu0
        %v2585 = vpop.trf.xlu0
        %v2586 = vpop.trf.xlu0
        %v2587 = vpop.trf.xlu0
        %v2588 = vpop.trf.xlu0
        %v2589 = vpop.trf.xlu0
        %2590 = vxpose.xlu0.b32.start [1/16] %v1488, 128
        %2591 = vxpose.xlu0.b32.cont [2/16] %v1493, 128
        %2592 = vxpose.xlu0.b32.cont [3/16] 0.0, 128
        %2593 = vxpose.xlu0.b32.cont [4/16] 0.0, 128
        %2594 = vxpose.xlu0.b32.cont [5/16] 0.0, 128
        %2595 = vxpose.xlu0.b32.cont [6/16] 0.0, 128
        %2596 = vxpose.xlu0.b32.cont [7/16] 0.0, 128
        %2597 = vxpose.xlu0.b32.cont [8/16] 0.0, 128
        %2598 = vxpose.xlu0.b32.cont [9/16] 0.0, 128
        %2599 = vxpose.xlu0.b32.cont [10/16] 0.0, 128
        %2600 = vxpose.xlu0.b32.cont [11/16] 0.0, 128
        %2601 = vxpose.xlu0.b32.cont [12/16] 0.0, 128
        %2602 = vxpose.xlu0.b32.cont [13/16] 0.0, 128
        %2603 = vxpose.xlu0.b32.cont [14/16] 0.0, 128
        %2604 = vxpose.xlu0.b32.cont [15/16] 0.0, 128
        %2605 = vxpose.xlu0.b32.end [16/16] 0.0, 128
        %v2606 = vpop.trf.xlu0
        %v2607 = vpop.trf.xlu0
        %v2608 = vpop.trf.xlu0
        %v2609 = vpop.trf.xlu0
        %v2610 = vpop.trf.xlu0
        %v2611 = vpop.trf.xlu0
        %v2612 = vpop.trf.xlu0
        %v2613 = vpop.trf.xlu0
        %v2614 = vpop.trf.xlu0
        %v2615 = vpop.trf.xlu0
        %v2616 = vpop.trf.xlu0
        %v2617 = vpop.trf.xlu0
        %v2618 = vpop.trf.xlu0
        %v2619 = vpop.trf.xlu0
        %v2620 = vpop.trf.xlu0
        %v2621 = vpop.trf.xlu0
        %2622 = vxpose.xlu0.b32.start [1/16] %v1498, 128
        %2623 = vxpose.xlu0.b32.cont [2/16] %v1503, 128
        %2624 = vxpose.xlu0.b32.cont [3/16] 0.0, 128
        %2625 = vxpose.xlu0.b32.cont [4/16] 0.0, 128
        %2626 = vxpose.xlu0.b32.cont [5/16] 0.0, 128
        %2627 = vxpose.xlu0.b32.cont [6/16] 0.0, 128
        %2628 = vxpose.xlu0.b32.cont [7/16] 0.0, 128
        %2629 = vxpose.xlu0.b32.cont [8/16] 0.0, 128
        %2630 = vxpose.xlu0.b32.cont [9/16] 0.0, 128
        %2631 = vxpose.xlu0.b32.cont [10/16] 0.0, 128
        %2632 = vxpose.xlu0.b32.cont [11/16] 0.0, 128
        %2633 = vxpose.xlu0.b32.cont [12/16] 0.0, 128
        %2634 = vxpose.xlu0.b32.cont [13/16] 0.0, 128
        %2635 = vxpose.xlu0.b32.cont [14/16] 0.0, 128
        %2636 = vxpose.xlu0.b32.cont [15/16] 0.0, 128
        %2637 = vxpose.xlu0.b32.end [16/16] 0.0, 128
        %v2638 = vpop.trf.xlu0
        %v2639 = vpop.trf.xlu0
        %v2640 = vpop.trf.xlu0
        %v2641 = vpop.trf.xlu0
        %v2642 = vpop.trf.xlu0
        %v2643 = vpop.trf.xlu0
        %v2644 = vpop.trf.xlu0
        %v2645 = vpop.trf.xlu0
        %v2646 = vpop.trf.xlu0
        %v2647 = vpop.trf.xlu0
        %v2648 = vpop.trf.xlu0
        %v2649 = vpop.trf.xlu0
        %v2650 = vpop.trf.xlu0
        %v2651 = vpop.trf.xlu0
        %v2652 = vpop.trf.xlu0
        %v2653 = vpop.trf.xlu0
        %2654 = vxpose.xlu0.b32.start [1/16] %v1508, 128
        %2655 = vxpose.xlu0.b32.cont [2/16] %v1513, 128
        %2656 = vxpose.xlu0.b32.cont [3/16] 0.0, 128
        %2657 = vxpose.xlu0.b32.cont [4/16] 0.0, 128
        %2658 = vxpose.xlu0.b32.cont [5/16] 0.0, 128
        %2659 = vxpose.xlu0.b32.cont [6/16] 0.0, 128
        %2660 = vxpose.xlu0.b32.cont [7/16] 0.0, 128
        %2661 = vxpose.xlu0.b32.cont [8/16] 0.0, 128
        %2662 = vxpose.xlu0.b32.cont [9/16] 0.0, 128
        %2663 = vxpose.xlu0.b32.cont [10/16] 0.0, 128
        %2664 = vxpose.xlu0.b32.cont [11/16] 0.0, 128
        %2665 = vxpose.xlu0.b32.cont [12/16] 0.0, 128
        %2666 = vxpose.xlu0.b32.cont [13/16] 0.0, 128
        %2667 = vxpose.xlu0.b32.cont [14/16] 0.0, 128
        %2668 = vxpose.xlu0.b32.cont [15/16] 0.0, 128
        %2669 = vxpose.xlu0.b32.end [16/16] 0.0, 128
        %v2670 = vpop.trf.xlu0
        %v2671 = vpop.trf.xlu0
        %v2672 = vpop.trf.xlu0
        %v2673 = vpop.trf.xlu0
        %v2674 = vpop.trf.xlu0
        %v2675 = vpop.trf.xlu0
        %v2676 = vpop.trf.xlu0
        %v2677 = vpop.trf.xlu0
        %v2678 = vpop.trf.xlu0
        %v2679 = vpop.trf.xlu0
        %v2680 = vpop.trf.xlu0
        %v2681 = vpop.trf.xlu0
        %v2682 = vpop.trf.xlu0
        %v2683 = vpop.trf.xlu0
        %v2684 = vpop.trf.xlu0
        %v2685 = vpop.trf.xlu0
        %2686 = vxpose.xlu0.b32.start [1/16] %v1518, 128
        %2687 = vxpose.xlu0.b32.cont [2/16] %v1523, 128
        %2688 = vxpose.xlu0.b32.cont [3/16] 0.0, 128
        %2689 = vxpose.xlu0.b32.cont [4/16] 0.0, 128
        %2690 = vxpose.xlu0.b32.cont [5/16] 0.0, 128
        %2691 = vxpose.xlu0.b32.cont [6/16] 0.0, 128
        %2692 = vxpose.xlu0.b32.cont [7/16] 0.0, 128
        %2693 = vxpose.xlu0.b32.cont [8/16] 0.0, 128
        %2694 = vxpose.xlu0.b32.cont [9/16] 0.0, 128
        %2695 = vxpose.xlu0.b32.cont [10/16] 0.0, 128
        %2696 = vxpose.xlu0.b32.cont [11/16] 0.0, 128
        %2697 = vxpose.xlu0.b32.cont [12/16] 0.0, 128
        %2698 = vxpose.xlu0.b32.cont [13/16] 0.0, 128
        %2699 = vxpose.xlu0.b32.cont [14/16] 0.0, 128
        %2700 = vxpose.xlu0.b32.cont [15/16] 0.0, 128
        %2701 = vxpose.xlu0.b32.end [16/16] 0.0, 128
        %v2702 = vpop.trf.xlu0
        %v2703 = vpop.trf.xlu0
        %v2704 = vpop.trf.xlu0
        %v2705 = vpop.trf.xlu0
        %v2706 = vpop.trf.xlu0
        %v2707 = vpop.trf.xlu0
        %v2708 = vpop.trf.xlu0
        %v2709 = vpop.trf.xlu0
        %v2710 = vpop.trf.xlu0
        %v2711 = vpop.trf.xlu0
        %v2712 = vpop.trf.xlu0
        %v2713 = vpop.trf.xlu0
        %v2714 = vpop.trf.xlu0
        %v2715 = vpop.trf.xlu0
        %v2716 = vpop.trf.xlu0
        %v2717 = vpop.trf.xlu0
        %2718 = vxpose.xlu0.b32.start [1/16] %v1528, 128
        %2719 = vxpose.xlu0.b32.cont [2/16] %v1533, 128
        %2720 = vxpose.xlu0.b32.cont [3/16] 0.0, 128
        %2721 = vxpose.xlu0.b32.cont [4/16] 0.0, 128
        %2722 = vxpose.xlu0.b32.cont [5/16] 0.0, 128
        %2723 = vxpose.xlu0.b32.cont [6/16] 0.0, 128
        %2724 = vxpose.xlu0.b32.cont [7/16] 0.0, 128
        %2725 = vxpose.xlu0.b32.cont [8/16] 0.0, 128
        %2726 = vxpose.xlu0.b32.cont [9/16] 0.0, 128
        %2727 = vxpose.xlu0.b32.cont [10/16] 0.0, 128
        %2728 = vxpose.xlu0.b32.cont [11/16] 0.0, 128
        %2729 = vxpose.xlu0.b32.cont [12/16] 0.0, 128
        %2730 = vxpose.xlu0.b32.cont [13/16] 0.0, 128
        %2731 = vxpose.xlu0.b32.cont [14/16] 0.0, 128
        %2732 = vxpose.xlu0.b32.cont [15/16] 0.0, 128
        %2733 = vxpose.xlu0.b32.end [16/16] 0.0, 128
        %v2734 = vpop.trf.xlu0
        %v2735 = vpop.trf.xlu0
        %v2736 = vpop.trf.xlu0
        %v2737 = vpop.trf.xlu0
        %v2738 = vpop.trf.xlu0
        %v2739 = vpop.trf.xlu0
        %v2740 = vpop.trf.xlu0
        %v2741 = vpop.trf.xlu0
        %v2742 = vpop.trf.xlu0
        %v2743 = vpop.trf.xlu0
        %v2744 = vpop.trf.xlu0
        %v2745 = vpop.trf.xlu0
        %v2746 = vpop.trf.xlu0
        %v2747 = vpop.trf.xlu0
        %v2748 = vpop.trf.xlu0
        %v2749 = vpop.trf.xlu0
        %2750 = vxpose.xlu0.b32.start [1/16] %v1538, 128
        %2751 = vxpose.xlu0.b32.cont [2/16] %v1543, 128
        %2752 = vxpose.xlu0.b32.cont [3/16] 0.0, 128
        %2753 = vxpose.xlu0.b32.cont [4/16] 0.0, 128
        %2754 = vxpose.xlu0.b32.cont [5/16] 0.0, 128
        %2755 = vxpose.xlu0.b32.cont [6/16] 0.0, 128
        %2756 = vxpose.xlu0.b32.cont [7/16] 0.0, 128
        %2757 = vxpose.xlu0.b32.cont [8/16] 0.0, 128
        %2758 = vxpose.xlu0.b32.cont [9/16] 0.0, 128
        %2759 = vxpose.xlu0.b32.cont [10/16] 0.0, 128
        %2760 = vxpose.xlu0.b32.cont [11/16] 0.0, 128
        %2761 = vxpose.xlu0.b32.cont [12/16] 0.0, 128
        %2762 = vxpose.xlu0.b32.cont [13/16] 0.0, 128
        %2763 = vxpose.xlu0.b32.cont [14/16] 0.0, 128
        %2764 = vxpose.xlu0.b32.cont [15/16] 0.0, 128
        %2765 = vxpose.xlu0.b32.end [16/16] 0.0, 128
        %v2766 = vpop.trf.xlu0
        %v2767 = vpop.trf.xlu0
        %v2768 = vpop.trf.xlu0
        %v2769 = vpop.trf.xlu0
        %v2770 = vpop.trf.xlu0
        %v2771 = vpop.trf.xlu0
        %v2772 = vpop.trf.xlu0
        %v2773 = vpop.trf.xlu0
        %v2774 = vpop.trf.xlu0
        %v2775 = vpop.trf.xlu0
        %v2776 = vpop.trf.xlu0
        %v2777 = vpop.trf.xlu0
        %v2778 = vpop.trf.xlu0
        %v2779 = vpop.trf.xlu0
        %v2780 = vpop.trf.xlu0
        %v2781 = vpop.trf.xlu0
        %2782 = vxpose.xlu0.b32.start [1/16] %v1548, 128
        %2783 = vxpose.xlu0.b32.cont [2/16] %v1553, 128
        %2784 = vxpose.xlu0.b32.cont [3/16] 0.0, 128
        %2785 = vxpose.xlu0.b32.cont [4/16] 0.0, 128
        %2786 = vxpose.xlu0.b32.cont [5/16] 0.0, 128
        %2787 = vxpose.xlu0.b32.cont [6/16] 0.0, 128
        %2788 = vxpose.xlu0.b32.cont [7/16] 0.0, 128
        %2789 = vxpose.xlu0.b32.cont [8/16] 0.0, 128
        %2790 = vxpose.xlu0.b32.cont [9/16] 0.0, 128
        %2791 = vxpose.xlu0.b32.cont [10/16] 0.0, 128
        %2792 = vxpose.xlu0.b32.cont [11/16] 0.0, 128
        %2793 = vxpose.xlu0.b32.cont [12/16] 0.0, 128
        %2794 = vxpose.xlu0.b32.cont [13/16] 0.0, 128
        %2795 = vxpose.xlu0.b32.cont [14/16] 0.0, 128
        %2796 = vxpose.xlu0.b32.cont [15/16] 0.0, 128
        %2797 = vxpose.xlu0.b32.end [16/16] 0.0, 128
        %v2798 = vpop.trf.xlu0
        %v2799 = vpop.trf.xlu0
        %v2800 = vpop.trf.xlu0
        %v2801 = vpop.trf.xlu0
        %v2802 = vpop.trf.xlu0
        %v2803 = vpop.trf.xlu0
        %v2804 = vpop.trf.xlu0
        %v2805 = vpop.trf.xlu0
        %v2806 = vpop.trf.xlu0
        %v2807 = vpop.trf.xlu0
        %v2808 = vpop.trf.xlu0
        %v2809 = vpop.trf.xlu0
        %v2810 = vpop.trf.xlu0
        %v2811 = vpop.trf.xlu0
        %v2812 = vpop.trf.xlu0
        %v2813 = vpop.trf.xlu0
        %2814 = vxpose.xlu0.b32.start [1/16] %v1558, 128
        %2815 = vxpose.xlu0.b32.cont [2/16] %v1563, 128
        %2816 = vxpose.xlu0.b32.cont [3/16] 0.0, 128
        %2817 = vxpose.xlu0.b32.cont [4/16] 0.0, 128
        %2818 = vxpose.xlu0.b32.cont [5/16] 0.0, 128
        %2819 = vxpose.xlu0.b32.cont [6/16] 0.0, 128
        %2820 = vxpose.xlu0.b32.cont [7/16] 0.0, 128
        %2821 = vxpose.xlu0.b32.cont [8/16] 0.0, 128
        %2822 = vxpose.xlu0.b32.cont [9/16] 0.0, 128
        %2823 = vxpose.xlu0.b32.cont [10/16] 0.0, 128
        %2824 = vxpose.xlu0.b32.cont [11/16] 0.0, 128
        %2825 = vxpose.xlu0.b32.cont [12/16] 0.0, 128
        %2826 = vxpose.xlu0.b32.cont [13/16] 0.0, 128
        %2827 = vxpose.xlu0.b32.cont [14/16] 0.0, 128
        %2828 = vxpose.xlu0.b32.cont [15/16] 0.0, 128
        %2829 = vxpose.xlu0.b32.end [16/16] 0.0, 128
        %v2830 = vpop.trf.xlu0
        %v2831 = vpop.trf.xlu0
        %v2832 = vpop.trf.xlu0
        %v2833 = vpop.trf.xlu0
        %v2834 = vpop.trf.xlu0
        %v2835 = vpop.trf.xlu0
        %v2836 = vpop.trf.xlu0
        %v2837 = vpop.trf.xlu0
        %v2838 = vpop.trf.xlu0
        %v2839 = vpop.trf.xlu0
        %v2840 = vpop.trf.xlu0
        %v2841 = vpop.trf.xlu0
        %v2842 = vpop.trf.xlu0
        %v2843 = vpop.trf.xlu0
        %v2844 = vpop.trf.xlu0
        %v2845 = vpop.trf.xlu0
        %v2846 = vld [vmem:[#allocation7] sm:$0xff]
        %v2847 = vld [vmem:[#allocation7 + $0x8] sm:$0xff]
        %v2849 = vsel %vm351, %v1582, 0
        %v2852 = vsel %vm351, %v1583, 0
        %v2855 = vsel %vm351, %v1614, 0
        %v2858 = vsel %vm351, %v1615, 0
        %v2861 = vsel %vm351, %v1646, 0
        %v2864 = vsel %vm351, %v1647, 0
        %v2867 = vsel %vm351, %v1678, 0
        %v2870 = vsel %vm351, %v1679, 0
        %v2873 = vsel %vm351, %v1710, 0
        %v2876 = vsel %vm351, %v1711, 0
        %v2879 = vsel %vm351, %v1742, 0
        %v2882 = vsel %vm351, %v1743, 0
        %v2885 = vsel %vm351, %v1774, 0
        %v2888 = vsel %vm351, %v1775, 0
        %v2891 = vsel %vm351, %v1806, 0
        %v2894 = vsel %vm351, %v1807, 0
        %v2897 = vsel %vm351, %v1838, 0
        %v2900 = vsel %vm351, %v1839, 0
        %v2903 = vsel %vm351, %v1870, 0
        %v2906 = vsel %vm351, %v1871, 0
        %v2909 = vsel %vm351, %v1902, 0
        %v2912 = vsel %vm351, %v1903, 0
        %v2915 = vsel %vm351, %v1934, 0
        %v2918 = vsel %vm351, %v1935, 0
        %v2921 = vsel %vm351, %v1966, 0
        %v2924 = vsel %vm351, %v1967, 0
        %v2927 = vsel %vm351, %v1998, 0
        %v2930 = vsel %vm351, %v1999, 0
        %v2933 = vsel %vm351, %v2030, 0
        %v2936 = vsel %vm351, %v2031, 0
        %v2939 = vsel %vm351, %v2062, 0
        %v2942 = vsel %vm351, %v2063, 0
        %v2945 = vsel %vm351, %v2094, 0
        %v2948 = vsel %vm351, %v2095, 0
        %v2951 = vsel %vm351, %v2126, 0
        %v2954 = vsel %vm351, %v2127, 0
        %v2957 = vsel %vm351, %v2158, 0
        %v2960 = vsel %vm351, %v2159, 0
        %v2963 = vsel %vm351, %v2190, 0
        %v2966 = vsel %vm351, %v2191, 0
        %v2969 = vsel %vm351, %v2222, 0
        %v2972 = vsel %vm351, %v2223, 0
        %v2975 = vsel %vm351, %v2254, 0
        %v2978 = vsel %vm351, %v2255, 0
        %v2981 = vsel %vm351, %v2286, 0
        %v2984 = vsel %vm351, %v2287, 0
        %v2987 = vsel %vm351, %v2318, 0
        %v2990 = vsel %vm351, %v2319, 0
        %v2993 = vsel %vm351, %v2350, 0
        %v2996 = vsel %vm351, %v2351, 0
        %v2999 = vsel %vm351, %v2382, 0
        %v3002 = vsel %vm351, %v2383, 0
        %v3005 = vsel %vm351, %v2414, 0
        %v3008 = vsel %vm351, %v2415, 0
        %v3011 = vsel %vm351, %v2446, 0
        %v3014 = vsel %vm351, %v2447, 0
        %v3017 = vsel %vm351, %v2478, 0
        %v3020 = vsel %vm351, %v2479, 0
        %v3023 = vsel %vm351, %v2510, 0
        %v3026 = vsel %vm351, %v2511, 0
        %v3029 = vsel %vm351, %v2542, 0
        %v3032 = vsel %vm351, %v2543, 0
        %v3035 = vsel %vm351, %v2574, 0
        %v3038 = vsel %vm351, %v2575, 0
        %v3041 = vsel %vm351, %v2606, 0
        %v3044 = vsel %vm351, %v2607, 0
        %v3047 = vsel %vm351, %v2638, 0
        %v3050 = vsel %vm351, %v2639, 0
        %v3053 = vsel %vm351, %v2670, 0
        %v3056 = vsel %vm351, %v2671, 0
        %v3059 = vsel %vm351, %v2702, 0
        %v3062 = vsel %vm351, %v2703, 0
        %v3065 = vsel %vm351, %v2734, 0
        %v3068 = vsel %vm351, %v2735, 0
        %v3071 = vsel %vm351, %v2766, 0
        %v3074 = vsel %vm351, %v2767, 0
        %v3077 = vsel %vm351, %v2798, 0
        %v3080 = vsel %vm351, %v2799, 0
        %v3083 = vsel %vm351, %v2830, 0
        %v3086 = vsel %vm351, %v2831, 0
        %3088 = vmatprep.subr.mxu0 0.0
        %3089 = vmatpush1.msra.mxu0 %v2846
        %3090 = vmatprep.subr.mxu0 0.0
        %3091 = vmatpush1.msra.mxu0 %v2847
        %3092 = vmatprep.subr.mxu0 0.0
        %3093 = vmatpush1.msra.mxu0 0.0
        %3094 = vmatprep.subr.mxu0 0.0
        %3095 = vmatpush1.msra.mxu0 0.0
        %3096 = vmatprep.subr.mxu0 0.0
        %3097 = vmatpush1.msra.mxu0 0.0
        %3098 = vmatprep.subr.mxu0 0.0
        %3099 = vmatpush1.msra.mxu0 0.0
        %3100 = vmatprep.subr.mxu0 0.0
        %3101 = vmatpush1.msra.mxu0 0.0
        %3102 = vmatprep.subr.mxu0 0.0
        %3103 = vmatpush1.msra.mxu0 0.0
        %3104 = vmatprep.subr.mxu0 0.0
        %3105 = vmatpush1.msra.mxu0 0.0
        %3106 = vmatprep.subr.mxu0 0.0
        %3107 = vmatpush1.msra.mxu0 0.0
        %3108 = vmatprep.subr.mxu0 0.0
        %3109 = vmatpush1.msra.mxu0 0.0
        %3110 = vmatprep.subr.mxu0 0.0
        %3111 = vmatpush1.msra.mxu0 0.0
        %3112 = vmatprep.subr.mxu0 0.0
        %3113 = vmatpush1.msra.mxu0 0.0
        %3114 = vmatprep.subr.mxu0 0.0
        %3115 = vmatpush1.msra.mxu0 0.0
        %3116 = vmatprep.subr.mxu0 0.0
        %3117 = vmatpush1.msra.mxu0 0.0
        %3118 = vmatprep.subr.mxu0 0.0
        %3119 = vmatpush1.msra.mxu0 0.0
        %3120 = vmatprep.subr.mxu0 0.0
        %3121 = vmatpush1.msra.mxu0 0.0
        %3122 = vmatprep.subr.mxu0 0.0
        %3123 = vmatpush1.msra.mxu0 0.0
        %3124 = vmatprep.subr.mxu0 0.0
        %3125 = vmatpush1.msra.mxu0 0.0
        %3126 = vmatprep.subr.mxu0 0.0
        %3127 = vmatpush1.msra.mxu0 0.0
        %3128 = vmatprep.subr.mxu0 0.0
        %3129 = vmatpush1.msra.mxu0 0.0
        %3130 = vmatprep.subr.mxu0 0.0
        %3131 = vmatpush1.msra.mxu0 0.0
        %3132 = vmatprep.subr.mxu0 0.0
        %3133 = vmatpush1.msra.mxu0 0.0
        %3134 = vmatprep.subr.mxu0 0.0
        %3135 = vmatpush1.msra.mxu0 0.0
        %3136 = vmatprep.subr.mxu0 0.0
        %3137 = vmatpush1.msra.mxu0 0.0
        %3138 = vmatprep.subr.mxu0 0.0
        %3139 = vmatpush1.msra.mxu0 0.0
        %3140 = vmatprep.subr.mxu0 0.0
        %3141 = vmatpush1.msra.mxu0 0.0
        %3142 = vmatprep.subr.mxu0 0.0
        %3143 = vmatpush1.msra.mxu0 0.0
        %3144 = vmatprep.subr.mxu0 0.0
        %3145 = vmatpush1.msra.mxu0 0.0
        %3146 = vmatprep.subr.mxu0 0.0
        %3147 = vmatpush1.msra.mxu0 0.0
        %3148 = vmatprep.subr.mxu0 0.0
        %3149 = vmatpush1.msra.mxu0 0.0
        %3150 = vmatprep.subr.mxu0 0.0
        %3151 = vmatpush1.msra.mxu0 0.0
        %3152 = vmatprep.mubr.f32.mxu0 0.0
        %3153 = vmatmul.mubr.f32.gmra.mrb[0].mxu0 %v2849
        %v3154 = vpop.f32.mrb[0].mxu0
        %v3155 = vadd.f32 0.0, %v3154
        %v3156 = vpop.f32.mrb[0].mxu0
        %3157 = vmatprep.mubr.f32.mxu0 0.0
        %3158 = vmatmul.mubr.f32.gmra.mrb[0].mxu0 %v2852
        %v3159 = vpop.f32.mrb[0].mxu0
        %v3160 = vadd.f32 0.0, %v3159
        %v3161 = vpop.f32.mrb[0].mxu0
        %3162 = vmatprep.mubr.f32.mxu0 0.0
        %3163 = vmatmul.mubr.f32.gmra.mrb[0].mxu0 %v2855
        %v3164 = vpop.f32.mrb[0].mxu0
        %v3165 = vadd.f32 0.0, %v3164
        %v3166 = vpop.f32.mrb[0].mxu0
        %3167 = vmatprep.mubr.f32.mxu0 0.0
        %3168 = vmatmul.mubr.f32.gmra.mrb[0].mxu0 %v2858
        %v3169 = vpop.f32.mrb[0].mxu0
        %v3170 = vadd.f32 0.0, %v3169
        %v3171 = vpop.f32.mrb[0].mxu0
        %3172 = vmatprep.mubr.f32.mxu0 0.0
        %3173 = vmatmul.mubr.f32.gmra.mrb[0].mxu0 %v2861
        %v3174 = vpop.f32.mrb[0].mxu0
        %v3175 = vadd.f32 0.0, %v3174
        %v3176 = vpop.f32.mrb[0].mxu0
        %3177 = vmatprep.mubr.f32.mxu0 0.0
        %3178 = vmatmul.mubr.f32.gmra.mrb[0].mxu0 %v2864
        %v3179 = vpop.f32.mrb[0].mxu0
        %v3180 = vadd.f32 0.0, %v3179
        %v3181 = vpop.f32.mrb[0].mxu0
        %3182 = vmatprep.mubr.f32.mxu0 0.0
        %3183 = vmatmul.mubr.f32.gmra.mrb[0].mxu0 %v2867
        %v3184 = vpop.f32.mrb[0].mxu0
        %v3185 = vadd.f32 0.0, %v3184
        %v3186 = vpop.f32.mrb[0].mxu0
        %3187 = vmatprep.mubr.f32.mxu0 0.0
        %3188 = vmatmul.mubr.f32.gmra.mrb[0].mxu0 %v2870
        %v3189 = vpop.f32.mrb[0].mxu0
        %v3190 = vadd.f32 0.0, %v3189
        %v3191 = vpop.f32.mrb[0].mxu0
        %3192 = vmatprep.mubr.f32.mxu0 0.0
        %3193 = vmatmul.mubr.f32.gmra.mrb[0].mxu0 %v2873
        %v3194 = vpop.f32.mrb[0].mxu0
        %v3195 = vadd.f32 0.0, %v3194
        %v3196 = vpop.f32.mrb[0].mxu0
        %3197 = vmatprep.mubr.f32.mxu0 0.0
        %3198 = vmatmul.mubr.f32.gmra.mrb[0].mxu0 %v2876
        %v3199 = vpop.f32.mrb[0].mxu0
        %v3200 = vadd.f32 0.0, %v3199
        %v3201 = vpop.f32.mrb[0].mxu0
        %3202 = vmatprep.mubr.f32.mxu0 0.0
        %3203 = vmatmul.mubr.f32.gmra.mrb[0].mxu0 %v2879
        %v3204 = vpop.f32.mrb[0].mxu0
        %v3205 = vadd.f32 0.0, %v3204
        %v3206 = vpop.f32.mrb[0].mxu0
        %3207 = vmatprep.mubr.f32.mxu0 0.0
        %3208 = vmatmul.mubr.f32.gmra.mrb[0].mxu0 %v2882
        %v3209 = vpop.f32.mrb[0].mxu0
        %v3210 = vadd.f32 0.0, %v3209
        %v3211 = vpop.f32.mrb[0].mxu0
        %3212 = vmatprep.mubr.f32.mxu0 0.0
        %3213 = vmatmul.mubr.f32.gmra.mrb[0].mxu0 %v2885
        %v3214 = vpop.f32.mrb[0].mxu0
        %v3215 = vadd.f32 0.0, %v3214
        %v3216 = vpop.f32.mrb[0].mxu0
        %3217 = vmatprep.mubr.f32.mxu0 0.0
        %3218 = vmatmul.mubr.f32.gmra.mrb[0].mxu0 %v2888
        %v3219 = vpop.f32.mrb[0].mxu0
        %v3220 = vadd.f32 0.0, %v3219
        %v3221 = vpop.f32.mrb[0].mxu0
        %3222 = vmatprep.mubr.f32.mxu0 0.0
        %3223 = vmatmul.mubr.f32.gmra.mrb[0].mxu0 %v2891
        %v3224 = vpop.f32.mrb[0].mxu0
        %v3225 = vadd.f32 0.0, %v3224
        %v3226 = vpop.f32.mrb[0].mxu0
        %3227 = vmatprep.mubr.f32.mxu0 0.0
        %3228 = vmatmul.mubr.f32.gmra.mrb[0].mxu0 %v2894
        %v3229 = vpop.f32.mrb[0].mxu0
        %v3230 = vadd.f32 0.0, %v3229
        %v3231 = vpop.f32.mrb[0].mxu0
        %3232 = vmatprep.mubr.f32.mxu0 0.0
        %3233 = vmatmul.mubr.f32.gmra.mrb[0].mxu0 %v2897
        %v3234 = vpop.f32.mrb[0].mxu0
        %v3235 = vadd.f32 0.0, %v3234
        %v3236 = vpop.f32.mrb[0].mxu0
        %3237 = vmatprep.mubr.f32.mxu0 0.0
        %3238 = vmatmul.mubr.f32.gmra.mrb[0].mxu0 %v2900
        %v3239 = vpop.f32.mrb[0].mxu0
        %v3240 = vadd.f32 0.0, %v3239
        %v3241 = vpop.f32.mrb[0].mxu0
        %3242 = vmatprep.mubr.f32.mxu0 0.0
        %3243 = vmatmul.mubr.f32.gmra.mrb[0].mxu0 %v2903
        %v3244 = vpop.f32.mrb[0].mxu0
        %v3245 = vadd.f32 0.0, %v3244
        %v3246 = vpop.f32.mrb[0].mxu0
        %3247 = vmatprep.mubr.f32.mxu0 0.0
        %3248 = vmatmul.mubr.f32.gmra.mrb[0].mxu0 %v2906
        %v3249 = vpop.f32.mrb[0].mxu0
        %v3250 = vadd.f32 0.0, %v3249
        %v3251 = vpop.f32.mrb[0].mxu0
        %3252 = vmatprep.mubr.f32.mxu0 0.0
        %3253 = vmatmul.mubr.f32.gmra.mrb[0].mxu0 %v2909
        %v3254 = vpop.f32.mrb[0].mxu0
        %v3255 = vadd.f32 0.0, %v3254
        %v3256 = vpop.f32.mrb[0].mxu0
        %3257 = vmatprep.mubr.f32.mxu0 0.0
        %3258 = vmatmul.mubr.f32.gmra.mrb[0].mxu0 %v2912
        %v3259 = vpop.f32.mrb[0].mxu0
        %v3260 = vadd.f32 0.0, %v3259
        %v3261 = vpop.f32.mrb[0].mxu0
        %3262 = vmatprep.mubr.f32.mxu0 0.0
        %3263 = vmatmul.mubr.f32.gmra.mrb[0].mxu0 %v2915
        %v3264 = vpop.f32.mrb[0].mxu0
        %v3265 = vadd.f32 0.0, %v3264
        %v3266 = vpop.f32.mrb[0].mxu0
        %3267 = vmatprep.mubr.f32.mxu0 0.0
        %3268 = vmatmul.mubr.f32.gmra.mrb[0].mxu0 %v2918
        %v3269 = vpop.f32.mrb[0].mxu0
        %v3270 = vadd.f32 0.0, %v3269
        %v3271 = vpop.f32.mrb[0].mxu0
        %3272 = vmatprep.mubr.f32.mxu0 0.0
        %3273 = vmatmul.mubr.f32.gmra.mrb[0].mxu0 %v2921
        %v3274 = vpop.f32.mrb[0].mxu0
        %v3275 = vadd.f32 0.0, %v3274
        %v3276 = vpop.f32.mrb[0].mxu0
        %3277 = vmatprep.mubr.f32.mxu0 0.0
        %3278 = vmatmul.mubr.f32.gmra.mrb[0].mxu0 %v2924
        %v3279 = vpop.f32.mrb[0].mxu0
        %v3280 = vadd.f32 0.0, %v3279
        %v3281 = vpop.f32.mrb[0].mxu0
        %3282 = vmatprep.mubr.f32.mxu0 0.0
        %3283 = vmatmul.mubr.f32.gmra.mrb[0].mxu0 %v2927
        %v3284 = vpop.f32.mrb[0].mxu0
        %v3285 = vadd.f32 0.0, %v3284
        %v3286 = vpop.f32.mrb[0].mxu0
        %3287 = vmatprep.mubr.f32.mxu0 0.0
        %3288 = vmatmul.mubr.f32.gmra.mrb[0].mxu0 %v2930
        %v3289 = vpop.f32.mrb[0].mxu0
        %v3290 = vadd.f32 0.0, %v3289
        %v3291 = vpop.f32.mrb[0].mxu0
        %3292 = vmatprep.mubr.f32.mxu0 0.0
        %3293 = vmatmul.mubr.f32.gmra.mrb[0].mxu0 %v2933
        %v3294 = vpop.f32.mrb[0].mxu0
        %v3295 = vadd.f32 0.0, %v3294
        %v3296 = vpop.f32.mrb[0].mxu0
        %3297 = vmatprep.mubr.f32.mxu0 0.0
        %3298 = vmatmul.mubr.f32.gmra.mrb[0].mxu0 %v2936
        %v3299 = vpop.f32.mrb[0].mxu0
        %v3300 = vadd.f32 0.0, %v3299
        %v3301 = vpop.f32.mrb[0].mxu0
        %3302 = vmatprep.mubr.f32.mxu0 0.0
        %3303 = vmatmul.mubr.f32.gmra.mrb[0].mxu0 %v2939
        %v3304 = vpop.f32.mrb[0].mxu0
        %v3305 = vadd.f32 0.0, %v3304
        %v3306 = vpop.f32.mrb[0].mxu0
        %3307 = vmatprep.mubr.f32.mxu0 0.0
        %3308 = vmatmul.mubr.f32.gmra.mrb[0].mxu0 %v2942
        %v3309 = vpop.f32.mrb[0].mxu0
        %v3310 = vadd.f32 0.0, %v3309
        %v3311 = vpop.f32.mrb[0].mxu0
        %3312 = vmatprep.mubr.f32.mxu0 0.0
        %3313 = vmatmul.mubr.f32.gmra.mrb[0].mxu0 %v2945
        %v3314 = vpop.f32.mrb[0].mxu0
        %v3315 = vadd.f32 0.0, %v3314
        %v3316 = vpop.f32.mrb[0].mxu0
        %3317 = vmatprep.mubr.f32.mxu0 0.0
        %3318 = vmatmul.mubr.f32.gmra.mrb[0].mxu0 %v2948
        %v3319 = vpop.f32.mrb[0].mxu0
        %v3320 = vadd.f32 0.0, %v3319
        %v3321 = vpop.f32.mrb[0].mxu0
        %3322 = vmatprep.mubr.f32.mxu0 0.0
        %3323 = vmatmul.mubr.f32.gmra.mrb[0].mxu0 %v2951
        %v3324 = vpop.f32.mrb[0].mxu0
        %v3325 = vadd.f32 0.0, %v3324
        %v3326 = vpop.f32.mrb[0].mxu0
        %3327 = vmatprep.mubr.f32.mxu0 0.0
        %3328 = vmatmul.mubr.f32.gmra.mrb[0].mxu0 %v2954
        %v3329 = vpop.f32.mrb[0].mxu0
        %v3330 = vadd.f32 0.0, %v3329
        %v3331 = vpop.f32.mrb[0].mxu0
        %3332 = vmatprep.mubr.f32.mxu0 0.0
        %3333 = vmatmul.mubr.f32.gmra.mrb[0].mxu0 %v2957
        %v3334 = vpop.f32.mrb[0].mxu0
        %v3335 = vadd.f32 0.0, %v3334
        %v3336 = vpop.f32.mrb[0].mxu0
        %3337 = vmatprep.mubr.f32.mxu0 0.0
        %3338 = vmatmul.mubr.f32.gmra.mrb[0].mxu0 %v2960
        %v3339 = vpop.f32.mrb[0].mxu0
        %v3340 = vadd.f32 0.0, %v3339
        %v3341 = vpop.f32.mrb[0].mxu0
        %3342 = vmatprep.mubr.f32.mxu0 0.0
        %3343 = vmatmul.mubr.f32.gmra.mrb[0].mxu0 %v2963
        %v3344 = vpop.f32.mrb[0].mxu0
        %v3345 = vadd.f32 0.0, %v3344
        %v3346 = vpop.f32.mrb[0].mxu0
        %3347 = vmatprep.mubr.f32.mxu0 0.0
        %3348 = vmatmul.mubr.f32.gmra.mrb[0].mxu0 %v2966
        %v3349 = vpop.f32.mrb[0].mxu0
        %v3350 = vadd.f32 0.0, %v3349
        %v3351 = vpop.f32.mrb[0].mxu0
        %3352 = vmatprep.mubr.f32.mxu0 0.0
        %3353 = vmatmul.mubr.f32.gmra.mrb[0].mxu0 %v2969
        %v3354 = vpop.f32.mrb[0].mxu0
        %v3355 = vadd.f32 0.0, %v3354
        %v3356 = vpop.f32.mrb[0].mxu0
        %3357 = vmatprep.mubr.f32.mxu0 0.0
        %3358 = vmatmul.mubr.f32.gmra.mrb[0].mxu0 %v2972
        %v3359 = vpop.f32.mrb[0].mxu0
        %v3360 = vadd.f32 0.0, %v3359
        %v3361 = vpop.f32.mrb[0].mxu0
        %3362 = vmatprep.mubr.f32.mxu0 0.0
        %3363 = vmatmul.mubr.f32.gmra.mrb[0].mxu0 %v2975
        %v3364 = vpop.f32.mrb[0].mxu0
        %v3365 = vadd.f32 0.0, %v3364
        %v3366 = vpop.f32.mrb[0].mxu0
        %3367 = vmatprep.mubr.f32.mxu0 0.0
        %3368 = vmatmul.mubr.f32.gmra.mrb[0].mxu0 %v2978
        %v3369 = vpop.f32.mrb[0].mxu0
        %v3370 = vadd.f32 0.0, %v3369
        %v3371 = vpop.f32.mrb[0].mxu0
        %3372 = vmatprep.mubr.f32.mxu0 0.0
        %3373 = vmatmul.mubr.f32.gmra.mrb[0].mxu0 %v2981
        %v3374 = vpop.f32.mrb[0].mxu0
        %v3375 = vadd.f32 0.0, %v3374
        %v3376 = vpop.f32.mrb[0].mxu0
        %3377 = vmatprep.mubr.f32.mxu0 0.0
        %3378 = vmatmul.mubr.f32.gmra.mrb[0].mxu0 %v2984
        %v3379 = vpop.f32.mrb[0].mxu0
        %v3380 = vadd.f32 0.0, %v3379
        %v3381 = vpop.f32.mrb[0].mxu0
        %3382 = vmatprep.mubr.f32.mxu0 0.0
        %3383 = vmatmul.mubr.f32.gmra.mrb[0].mxu0 %v2987
        %v3384 = vpop.f32.mrb[0].mxu0
        %v3385 = vadd.f32 0.0, %v3384
        %v3386 = vpop.f32.mrb[0].mxu0
        %3387 = vmatprep.mubr.f32.mxu0 0.0
        %3388 = vmatmul.mubr.f32.gmra.mrb[0].mxu0 %v2990
        %v3389 = vpop.f32.mrb[0].mxu0
        %v3390 = vadd.f32 0.0, %v3389
        %v3391 = vpop.f32.mrb[0].mxu0
        %3392 = vmatprep.mubr.f32.mxu0 0.0
        %3393 = vmatmul.mubr.f32.gmra.mrb[0].mxu0 %v2993
        %v3394 = vpop.f32.mrb[0].mxu0
        %v3395 = vadd.f32 0.0, %v3394
        %v3396 = vpop.f32.mrb[0].mxu0
        %3397 = vmatprep.mubr.f32.mxu0 0.0
        %3398 = vmatmul.mubr.f32.gmra.mrb[0].mxu0 %v2996
        %v3399 = vpop.f32.mrb[0].mxu0
        %v3400 = vadd.f32 0.0, %v3399
        %v3401 = vpop.f32.mrb[0].mxu0
        %3402 = vmatprep.mubr.f32.mxu0 0.0
        %3403 = vmatmul.mubr.f32.gmra.mrb[0].mxu0 %v2999
        %v3404 = vpop.f32.mrb[0].mxu0
        %v3405 = vadd.f32 0.0, %v3404
        %v3406 = vpop.f32.mrb[0].mxu0
        %3407 = vmatprep.mubr.f32.mxu0 0.0
        %3408 = vmatmul.mubr.f32.gmra.mrb[0].mxu0 %v3002
        %v3409 = vpop.f32.mrb[0].mxu0
        %v3410 = vadd.f32 0.0, %v3409
        %v3411 = vpop.f32.mrb[0].mxu0
        %3412 = vmatprep.mubr.f32.mxu0 0.0
        %3413 = vmatmul.mubr.f32.gmra.mrb[0].mxu0 %v3005
        %v3414 = vpop.f32.mrb[0].mxu0
        %v3415 = vadd.f32 0.0, %v3414
        %v3416 = vpop.f32.mrb[0].mxu0
        %3417 = vmatprep.mubr.f32.mxu0 0.0
        %3418 = vmatmul.mubr.f32.gmra.mrb[0].mxu0 %v3008
        %v3419 = vpop.f32.mrb[0].mxu0
        %v3420 = vadd.f32 0.0, %v3419
        %v3421 = vpop.f32.mrb[0].mxu0
        %3422 = vmatprep.mubr.f32.mxu0 0.0
        %3423 = vmatmul.mubr.f32.gmra.mrb[0].mxu0 %v3011
        %v3424 = vpop.f32.mrb[0].mxu0
        %v3425 = vadd.f32 0.0, %v3424
        %v3426 = vpop.f32.mrb[0].mxu0
        %3427 = vmatprep.mubr.f32.mxu0 0.0
        %3428 = vmatmul.mubr.f32.gmra.mrb[0].mxu0 %v3014
        %v3429 = vpop.f32.mrb[0].mxu0
        %v3430 = vadd.f32 0.0, %v3429
        %v3431 = vpop.f32.mrb[0].mxu0
        %3432 = vmatprep.mubr.f32.mxu0 0.0
        %3433 = vmatmul.mubr.f32.gmra.mrb[0].mxu0 %v3017
        %v3434 = vpop.f32.mrb[0].mxu0
        %v3435 = vadd.f32 0.0, %v3434
        %v3436 = vpop.f32.mrb[0].mxu0
        %3437 = vmatprep.mubr.f32.mxu0 0.0
        %3438 = vmatmul.mubr.f32.gmra.mrb[0].mxu0 %v3020
        %v3439 = vpop.f32.mrb[0].mxu0
        %v3440 = vadd.f32 0.0, %v3439
        %v3441 = vpop.f32.mrb[0].mxu0
        %3442 = vmatprep.mubr.f32.mxu0 0.0
        %3443 = vmatmul.mubr.f32.gmra.mrb[0].mxu0 %v3023
        %v3444 = vpop.f32.mrb[0].mxu0
        %v3445 = vadd.f32 0.0, %v3444
        %v3446 = vpop.f32.mrb[0].mxu0
        %3447 = vmatprep.mubr.f32.mxu0 0.0
        %3448 = vmatmul.mubr.f32.gmra.mrb[0].mxu0 %v3026
        %v3449 = vpop.f32.mrb[0].mxu0
        %v3450 = vadd.f32 0.0, %v3449
        %v3451 = vpop.f32.mrb[0].mxu0
        %3452 = vmatprep.mubr.f32.mxu0 0.0
        %3453 = vmatmul.mubr.f32.gmra.mrb[0].mxu0 %v3029
        %v3454 = vpop.f32.mrb[0].mxu0
        %v3455 = vadd.f32 0.0, %v3454
        %v3456 = vpop.f32.mrb[0].mxu0
        %3457 = vmatprep.mubr.f32.mxu0 0.0
        %3458 = vmatmul.mubr.f32.gmra.mrb[0].mxu0 %v3032
        %v3459 = vpop.f32.mrb[0].mxu0
        %v3460 = vadd.f32 0.0, %v3459
        %v3461 = vpop.f32.mrb[0].mxu0
        %3462 = vmatprep.mubr.f32.mxu0 0.0
        %3463 = vmatmul.mubr.f32.gmra.mrb[0].mxu0 %v3035
        %v3464 = vpop.f32.mrb[0].mxu0
        %v3465 = vadd.f32 0.0, %v3464
        %v3466 = vpop.f32.mrb[0].mxu0
        %3467 = vmatprep.mubr.f32.mxu0 0.0
        %3468 = vmatmul.mubr.f32.gmra.mrb[0].mxu0 %v3038
        %v3469 = vpop.f32.mrb[0].mxu0
        %v3470 = vadd.f32 0.0, %v3469
        %v3471 = vpop.f32.mrb[0].mxu0
        %3472 = vmatprep.mubr.f32.mxu0 0.0
        %3473 = vmatmul.mubr.f32.gmra.mrb[0].mxu0 %v3041
        %v3474 = vpop.f32.mrb[0].mxu0
        %v3475 = vadd.f32 0.0, %v3474
        %v3476 = vpop.f32.mrb[0].mxu0
        %3477 = vmatprep.mubr.f32.mxu0 0.0
        %3478 = vmatmul.mubr.f32.gmra.mrb[0].mxu0 %v3044
        %v3479 = vpop.f32.mrb[0].mxu0
        %v3480 = vadd.f32 0.0, %v3479
        %v3481 = vpop.f32.mrb[0].mxu0
        %3482 = vmatprep.mubr.f32.mxu0 0.0
        %3483 = vmatmul.mubr.f32.gmra.mrb[0].mxu0 %v3047
        %v3484 = vpop.f32.mrb[0].mxu0
        %v3485 = vadd.f32 0.0, %v3484
        %v3486 = vpop.f32.mrb[0].mxu0
        %3487 = vmatprep.mubr.f32.mxu0 0.0
        %3488 = vmatmul.mubr.f32.gmra.mrb[0].mxu0 %v3050
        %v3489 = vpop.f32.mrb[0].mxu0
        %v3490 = vadd.f32 0.0, %v3489
        %v3491 = vpop.f32.mrb[0].mxu0
        %3492 = vmatprep.mubr.f32.mxu0 0.0
        %3493 = vmatmul.mubr.f32.gmra.mrb[0].mxu0 %v3053
        %v3494 = vpop.f32.mrb[0].mxu0
        %v3495 = vadd.f32 0.0, %v3494
        %v3496 = vpop.f32.mrb[0].mxu0
        %3497 = vmatprep.mubr.f32.mxu0 0.0
        %3498 = vmatmul.mubr.f32.gmra.mrb[0].mxu0 %v3056
        %v3499 = vpop.f32.mrb[0].mxu0
        %v3500 = vadd.f32 0.0, %v3499
        %v3501 = vpop.f32.mrb[0].mxu0
        %3502 = vmatprep.mubr.f32.mxu0 0.0
        %3503 = vmatmul.mubr.f32.gmra.mrb[0].mxu0 %v3059
        %v3504 = vpop.f32.mrb[0].mxu0
        %v3505 = vadd.f32 0.0, %v3504
        %v3506 = vpop.f32.mrb[0].mxu0
        %3507 = vmatprep.mubr.f32.mxu0 0.0
        %3508 = vmatmul.mubr.f32.gmra.mrb[0].mxu0 %v3062
        %v3509 = vpop.f32.mrb[0].mxu0
        %v3510 = vadd.f32 0.0, %v3509
        %v3511 = vpop.f32.mrb[0].mxu0
        %3512 = vmatprep.mubr.f32.mxu0 0.0
        %3513 = vmatmul.mubr.f32.gmra.mrb[0].mxu0 %v3065
        %v3514 = vpop.f32.mrb[0].mxu0
        %v3515 = vadd.f32 0.0, %v3514
        %v3516 = vpop.f32.mrb[0].mxu0
        %3517 = vmatprep.mubr.f32.mxu0 0.0
        %3518 = vmatmul.mubr.f32.gmra.mrb[0].mxu0 %v3068
        %v3519 = vpop.f32.mrb[0].mxu0
        %v3520 = vadd.f32 0.0, %v3519
        %v3521 = vpop.f32.mrb[0].mxu0
        %3522 = vmatprep.mubr.f32.mxu0 0.0
        %3523 = vmatmul.mubr.f32.gmra.mrb[0].mxu0 %v3071
        %v3524 = vpop.f32.mrb[0].mxu0
        %v3525 = vadd.f32 0.0, %v3524
        %v3526 = vpop.f32.mrb[0].mxu0
        %3527 = vmatprep.mubr.f32.mxu0 0.0
        %3528 = vmatmul.mubr.f32.gmra.mrb[0].mxu0 %v3074
        %v3529 = vpop.f32.mrb[0].mxu0
        %v3530 = vadd.f32 0.0, %v3529
        %v3531 = vpop.f32.mrb[0].mxu0
        %3532 = vmatprep.mubr.f32.mxu0 0.0
        %3533 = vmatmul.mubr.f32.gmra.mrb[0].mxu0 %v3077
        %v3534 = vpop.f32.mrb[0].mxu0
        %v3535 = vadd.f32 0.0, %v3534
        %v3536 = vpop.f32.mrb[0].mxu0
        %3537 = vmatprep.mubr.f32.mxu0 0.0
        %3538 = vmatmul.mubr.f32.gmra.mrb[0].mxu0 %v3080
        %v3539 = vpop.f32.mrb[0].mxu0
        %v3540 = vadd.f32 0.0, %v3539
        %v3541 = vpop.f32.mrb[0].mxu0
        %3542 = vmatprep.mubr.f32.mxu0 0.0
        %3543 = vmatmul.mubr.f32.gmra.mrb[0].mxu0 %v3083
        %v3544 = vpop.f32.mrb[0].mxu0
        %v3545 = vadd.f32 0.0, %v3544
        %v3546 = vpop.f32.mrb[0].mxu0
        %3547 = vmatprep.mubr.f32.mxu0 0.0
        %3548 = vmatmul.mubr.f32.gmra.mrb[0].mxu0 %v3086
        %v3549 = vpop.f32.mrb[0].mxu0
        %v3550 = vadd.f32 0.0, %v3549
        %v3551 = vpop.f32.mrb[0].mxu0
        %3552 = vdwg.mxu0
        %v3553 = vmul.f32 %v3155, %v3235
        %v3554 = vmul.f32 %v3160, %v3240
        %v3555 = vmul.f32 %v3165, %v3245
        %v3556 = vmul.f32 %v3170, %v3250
        %v3557 = vmul.f32 %v3175, %v3255
        %v3558 = vmul.f32 %v3180, %v3260
        %v3559 = vmul.f32 %v3185, %v3265
        %v3560 = vmul.f32 %v3190, %v3270
        %v3561 = vmul.f32 %v3195, %v3275
        %v3562 = vmul.f32 %v3200, %v3280
        %v3563 = vmul.f32 %v3205, %v3285
        %v3564 = vmul.f32 %v3210, %v3290
        %v3565 = vmul.f32 %v3215, %v3295
        %v3566 = vmul.f32 %v3220, %v3300
        %v3567 = vmul.f32 %v3225, %v3305
        %v3568 = vmul.f32 %v3230, %v3310
        %v3569 = vmul.f32 %v3155, %v3155
        %v3570 = vmul.f32 %v3160, %v3160
        %v3571 = vmul.f32 %v3165, %v3165
        %v3572 = vmul.f32 %v3170, %v3170
        %v3573 = vmul.f32 %v3175, %v3175
        %v3574 = vmul.f32 %v3180, %v3180
        %v3575 = vmul.f32 %v3185, %v3185
        %v3576 = vmul.f32 %v3190, %v3190
        %v3577 = vmul.f32 %v3195, %v3195
        %v3578 = vmul.f32 %v3200, %v3200
        %v3579 = vmul.f32 %v3205, %v3205
        %v3580 = vmul.f32 %v3210, %v3210
        %v3581 = vmul.f32 %v3215, %v3215
        %v3582 = vmul.f32 %v3220, %v3220
        %v3583 = vmul.f32 %v3225, %v3225
        %v3584 = vmul.f32 %v3230, %v3230
        %v3585 = vmul.f32 %v3235, %v3235
        %v3586 = vmul.f32 %v3240, %v3240
        %v3587 = vmul.f32 %v3245, %v3245
        %v3588 = vmul.f32 %v3250, %v3250
        %v3589 = vmul.f32 %v3255, %v3255
        %v3590 = vmul.f32 %v3260, %v3260
        %v3591 = vmul.f32 %v3265, %v3265
        %v3592 = vmul.f32 %v3270, %v3270
        %v3593 = vmul.f32 %v3275, %v3275
        %v3594 = vmul.f32 %v3280, %v3280
        %v3595 = vmul.f32 %v3285, %v3285
        %v3596 = vmul.f32 %v3290, %v3290
        %v3597 = vmul.f32 %v3295, %v3295
        %v3598 = vmul.f32 %v3300, %v3300
        %v3599 = vmul.f32 %v3305, %v3305
        %v3600 = vmul.f32 %v3310, %v3310
        %v3601 = vmul.f32 %v3553, 2.0
        %v3602 = vmul.f32 %v3554, 2.0
        %v3603 = vmul.f32 %v3555, 2.0
        %v3604 = vmul.f32 %v3556, 2.0
        %v3605 = vmul.f32 %v3557, 2.0
        %v3606 = vmul.f32 %v3558, 2.0
        %v3607 = vmul.f32 %v3559, 2.0
        %v3608 = vmul.f32 %v3560, 2.0
        %v3609 = vmul.f32 %v3561, 2.0
        %v3610 = vmul.f32 %v3562, 2.0
        %v3611 = vmul.f32 %v3563, 2.0
        %v3612 = vmul.f32 %v3564, 2.0
        %v3613 = vmul.f32 %v3565, 2.0
        %v3614 = vmul.f32 %v3566, 2.0
        %v3615 = vmul.f32 %v3567, 2.0
        %v3616 = vmul.f32 %v3568, 2.0
        %v3617 = vadd.f32 %v3601, 0.0001
        %v3618 = vadd.f32 %v3602, 0.0001
        %v3619 = vadd.f32 %v3603, 0.0001
        %v3620 = vadd.f32 %v3604, 0.0001
        %v3621 = vadd.f32 %v3605, 0.0001
        %v3622 = vadd.f32 %v3606, 0.0001
        %v3623 = vadd.f32 %v3607, 0.0001
        %v3624 = vadd.f32 %v3608, 0.0001
        %v3625 = vadd.f32 %v3609, 0.0001
        %v3626 = vadd.f32 %v3610, 0.0001
        %v3627 = vadd.f32 %v3611, 0.0001
        %v3628 = vadd.f32 %v3612, 0.0001
        %v3629 = vadd.f32 %v3613, 0.0001
        %v3630 = vadd.f32 %v3614, 0.0001
        %v3631 = vadd.f32 %v3615, 0.0001
        %v3632 = vadd.f32 %v3616, 0.0001
        %v3633 = vsub.f32 %v3475, %v3553
        %v3634 = vsub.f32 %v3480, %v3554
        %v3635 = vsub.f32 %v3485, %v3555
        %v3636 = vsub.f32 %v3490, %v3556
        %v3637 = vsub.f32 %v3495, %v3557
        %v3638 = vsub.f32 %v3500, %v3558
        %v3639 = vsub.f32 %v3505, %v3559
        %v3640 = vsub.f32 %v3510, %v3560
        %v3641 = vsub.f32 %v3515, %v3561
        %v3642 = vsub.f32 %v3520, %v3562
        %v3643 = vsub.f32 %v3525, %v3563
        %v3644 = vsub.f32 %v3530, %v3564
        %v3645 = vsub.f32 %v3535, %v3565
        %v3646 = vsub.f32 %v3540, %v3566
        %v3647 = vsub.f32 %v3545, %v3567
        %v3648 = vsub.f32 %v3550, %v3568
        %v3649 = vmul.f32 %v3633, 2.0
        %v3650 = vmul.f32 %v3634, 2.0
        %v3651 = vmul.f32 %v3635, 2.0
        %v3652 = vmul.f32 %v3636, 2.0
        %v3653 = vmul.f32 %v3637, 2.0
        %v3654 = vmul.f32 %v3638, 2.0
        %v3655 = vmul.f32 %v3639, 2.0
        %v3656 = vmul.f32 %v3640, 2.0
        %v3657 = vmul.f32 %v3641, 2.0
        %v3658 = vmul.f32 %v3642, 2.0
        %v3659 = vmul.f32 %v3643, 2.0
        %v3660 = vmul.f32 %v3644, 2.0
        %v3661 = vmul.f32 %v3645, 2.0
        %v3662 = vmul.f32 %v3646, 2.0
        %v3663 = vmul.f32 %v3647, 2.0
        %v3664 = vmul.f32 %v3648, 2.0
        %v3665 = vadd.f32 %v3649, 0.0009
        %v3666 = vadd.f32 %v3650, 0.0009
        %v3667 = vadd.f32 %v3651, 0.0009
        %v3668 = vadd.f32 %v3652, 0.0009
        %v3669 = vadd.f32 %v3653, 0.0009
        %v3670 = vadd.f32 %v3654, 0.0009
        %v3671 = vadd.f32 %v3655, 0.0009
        %v3672 = vadd.f32 %v3656, 0.0009
        %v3673 = vadd.f32 %v3657, 0.0009
        %v3674 = vadd.f32 %v3658, 0.0009
        %v3675 = vadd.f32 %v3659, 0.0009
        %v3676 = vadd.f32 %v3660, 0.0009
        %v3677 = vadd.f32 %v3661, 0.0009
        %v3678 = vadd.f32 %v3662, 0.0009
        %v3679 = vadd.f32 %v3663, 0.0009
        %v3680 = vadd.f32 %v3664, 0.0009
        %v3681 = vmul.f32 %v3617, %v3665
        %v3682 = vmul.f32 %v3618, %v3666
        %v3683 = vmul.f32 %v3619, %v3667
        %v3684 = vmul.f32 %v3620, %v3668
        %v3685 = vmul.f32 %v3621, %v3669
        %v3686 = vmul.f32 %v3622, %v3670
        %v3687 = vmul.f32 %v3623, %v3671
        %v3688 = vmul.f32 %v3624, %v3672
        %v3689 = vmul.f32 %v3625, %v3673
        %v3690 = vmul.f32 %v3626, %v3674
        %v3691 = vmul.f32 %v3627, %v3675
        %v3692 = vmul.f32 %v3628, %v3676
        %v3693 = vmul.f32 %v3629, %v3677
        %v3694 = vmul.f32 %v3630, %v3678
        %v3695 = vmul.f32 %v3631, %v3679
        %v3696 = vmul.f32 %v3632, %v3680
        %v3697 = vadd.f32 %v3569, %v3585
        %v3698 = vadd.f32 %v3570, %v3586
        %v3699 = vadd.f32 %v3571, %v3587
        %v3700 = vadd.f32 %v3572, %v3588
        %v3701 = vadd.f32 %v3573, %v3589
        %v3702 = vadd.f32 %v3574, %v3590
        %v3703 = vadd.f32 %v3575, %v3591
        %v3704 = vadd.f32 %v3576, %v3592
        %v3705 = vadd.f32 %v3577, %v3593
        %v3706 = vadd.f32 %v3578, %v3594
        %v3707 = vadd.f32 %v3579, %v3595
        %v3708 = vadd.f32 %v3580, %v3596
        %v3709 = vadd.f32 %v3581, %v3597
        %v3710 = vadd.f32 %v3582, %v3598
        %v3711 = vadd.f32 %v3583, %v3599
        %v3712 = vadd.f32 %v3584, %v3600
        %v3713 = vadd.f32 %v3697, 0.0001
        %v3714 = vadd.f32 %v3698, 0.0001
        %v3715 = vadd.f32 %v3699, 0.0001
        %v3716 = vadd.f32 %v3700, 0.0001
        %v3717 = vadd.f32 %v3701, 0.0001
        %v3718 = vadd.f32 %v3702, 0.0001
        %v3719 = vadd.f32 %v3703, 0.0001
        %v3720 = vadd.f32 %v3704, 0.0001
        %v3721 = vadd.f32 %v3705, 0.0001
        %v3722 = vadd.f32 %v3706, 0.0001
        %v3723 = vadd.f32 %v3707, 0.0001
        %v3724 = vadd.f32 %v3708, 0.0001
        %v3725 = vadd.f32 %v3709, 0.0001
        %v3726 = vadd.f32 %v3710, 0.0001
        %v3727 = vadd.f32 %v3711, 0.0001
        %v3728 = vadd.f32 %v3712, 0.0001
        %v3729 = vsub.f32 %v3315, %v3569
        %v3730 = vsub.f32 %v3320, %v3570
        %v3731 = vsub.f32 %v3325, %v3571
        %v3732 = vsub.f32 %v3330, %v3572
        %v3733 = vsub.f32 %v3335, %v3573
        %v3734 = vsub.f32 %v3340, %v3574
        %v3735 = vsub.f32 %v3345, %v3575
        %v3736 = vsub.f32 %v3350, %v3576
        %v3737 = vsub.f32 %v3355, %v3577
        %v3738 = vsub.f32 %v3360, %v3578
        %v3739 = vsub.f32 %v3365, %v3579
        %v3740 = vsub.f32 %v3370, %v3580
        %v3741 = vsub.f32 %v3375, %v3581
        %v3742 = vsub.f32 %v3380, %v3582
        %v3743 = vsub.f32 %v3385, %v3583
        %v3744 = vsub.f32 %v3390, %v3584
        %v3745 = vsub.f32 %v3395, %v3585
        %v3746 = vsub.f32 %v3400, %v3586
        %v3747 = vsub.f32 %v3405, %v3587
        %v3748 = vsub.f32 %v3410, %v3588
        %v3749 = vsub.f32 %v3415, %v3589
        %v3750 = vsub.f32 %v3420, %v3590
        %v3751 = vsub.f32 %v3425, %v3591
        %v3752 = vsub.f32 %v3430, %v3592
        %v3753 = vsub.f32 %v3435, %v3593
        %v3754 = vsub.f32 %v3440, %v3594
        %v3755 = vsub.f32 %v3445, %v3595
        %v3756 = vsub.f32 %v3450, %v3596
        %v3757 = vsub.f32 %v3455, %v3597
        %v3758 = vsub.f32 %v3460, %v3598
        %v3759 = vsub.f32 %v3465, %v3599
        %v3760 = vsub.f32 %v3470, %v3600
        %v3761 = vadd.f32 %v3729, %v3745
        %v3762 = vadd.f32 %v3730, %v3746
        %v3763 = vadd.f32 %v3731, %v3747
        %v3764 = vadd.f32 %v3732, %v3748
        %v3765 = vadd.f32 %v3733, %v3749
        %v3766 = vadd.f32 %v3734, %v3750
        %v3767 = vadd.f32 %v3735, %v3751
        %v3768 = vadd.f32 %v3736, %v3752
        %v3769 = vadd.f32 %v3737, %v3753
        %v3770 = vadd.f32 %v3738, %v3754
        %v3771 = vadd.f32 %v3739, %v3755
        %v3772 = vadd.f32 %v3740, %v3756
        %v3773 = vadd.f32 %v3741, %v3757
        %v3774 = vadd.f32 %v3742, %v3758
        %v3775 = vadd.f32 %v3743, %v3759
        %v3776 = vadd.f32 %v3744, %v3760
        %v3777 = vadd.f32 %v3761, 0.0009
        %v3778 = vadd.f32 %v3762, 0.0009
        %v3779 = vadd.f32 %v3763, 0.0009
        %v3780 = vadd.f32 %v3764, 0.0009
        %v3781 = vadd.f32 %v3765, 0.0009
        %v3782 = vadd.f32 %v3766, 0.0009
        %v3783 = vadd.f32 %v3767, 0.0009
        %v3784 = vadd.f32 %v3768, 0.0009
        %v3785 = vadd.f32 %v3769, 0.0009
        %v3786 = vadd.f32 %v3770, 0.0009
        %v3787 = vadd.f32 %v3771, 0.0009
        %v3788 = vadd.f32 %v3772, 0.0009
        %v3789 = vadd.f32 %v3773, 0.0009
        %v3790 = vadd.f32 %v3774, 0.0009
        %v3791 = vadd.f32 %v3775, 0.0009
        %v3792 = vadd.f32 %v3776, 0.0009
        %v3793 = vmul.f32 %v3713, %v3777
        %v3794 = vmul.f32 %v3714, %v3778
        %v3795 = vmul.f32 %v3715, %v3779
        %v3796 = vmul.f32 %v3716, %v3780
        %v3797 = vmul.f32 %v3717, %v3781
        %v3798 = vmul.f32 %v3718, %v3782
        %v3799 = vmul.f32 %v3719, %v3783
        %v3800 = vmul.f32 %v3720, %v3784
        %v3801 = vmul.f32 %v3721, %v3785
        %v3802 = vmul.f32 %v3722, %v3786
        %v3803 = vmul.f32 %v3723, %v3787
        %v3804 = vmul.f32 %v3724, %v3788
        %v3805 = vmul.f32 %v3725, %v3789
        %v3806 = vmul.f32 %v3726, %v3790
        %v3807 = vmul.f32 %v3727, %v3791
        %v3808 = vmul.f32 %v3728, %v3792
        %v3809 = vrcp.pop %v3793
        %v3810 = vrcp.pop %v3794
        %v3811 = vrcp.pop %v3795
        %v3812 = vrcp.pop %v3796
        %v3813 = vrcp.pop %v3797
        %v3814 = vrcp.pop %v3798
        %v3815 = vrcp.pop %v3799
        %v3816 = vrcp.pop %v3800
        %v3817 = vrcp.pop %v3801
        %v3818 = vrcp.pop %v3802
        %v3819 = vrcp.pop %v3803
        %v3820 = vrcp.pop %v3804
        %v3821 = vrcp.pop %v3805
        %v3822 = vrcp.pop %v3806
        %v3823 = vrcp.pop %v3807
        %v3824 = vrcp.pop %v3808
        %v3825 = vmul.f32 %v3681, %v3809
        %v3826 = vmul.f32 %v3682, %v3810
        %v3827 = vmul.f32 %v3683, %v3811
        %v3828 = vmul.f32 %v3684, %v3812
        %v3829 = vmul.f32 %v3685, %v3813
        %v3830 = vmul.f32 %v3686, %v3814
        %v3831 = vmul.f32 %v3687, %v3815
        %v3832 = vmul.f32 %v3688, %v3816
        %v3833 = vmul.f32 %v3689, %v3817
        %v3834 = vmul.f32 %v3690, %v3818
        %v3835 = vmul.f32 %v3691, %v3819
        %v3836 = vmul.f32 %v3692, %v3820
        %v3837 = vmul.f32 %v3693, %v3821
        %v3838 = vmul.f32 %v3694, %v3822
        %v3839 = vmul.f32 %v3695, %v3823
        %v3840 = vmul.f32 %v3696, %v3824
        %v3841 = vsel %vm351, %v3825, 0.0
        %v3842 = vsel %vm351, %v3826, 0.0
        %v3843 = vadd.f32 %v3841, %v3842
        %v3844 = vsel %vm351, %v3827, 0.0
        %v3845 = vadd.f32 %v3843, %v3844
        %v3846 = vsel %vm351, %v3828, 0.0
        %v3847 = vadd.f32 %v3845, %v3846
        %v3848 = vsel %vm351, %v3829, 0.0
        %v3849 = vadd.f32 %v3847, %v3848
        %v3850 = vsel %vm351, %v3830, 0.0
        %v3851 = vadd.f32 %v3849, %v3850
        %v3852 = vsel %vm351, %v3831, 0.0
        %v3853 = vadd.f32 %v3851, %v3852
        %v3854 = vsel %vm351, %v3832, 0.0
        %v3855 = vadd.f32 %v3853, %v3854
        %v3856 = vsel %vm351, %v3833, 0.0
        %v3857 = vadd.f32 %v3855, %v3856
        %v3858 = vsel %vm351, %v3834, 0.0
        %v3859 = vadd.f32 %v3857, %v3858
        %v3860 = vsel %vm351, %v3835, 0.0
        %v3861 = vadd.f32 %v3859, %v3860
        %v3862 = vsel %vm351, %v3836, 0.0
        %v3863 = vadd.f32 %v3861, %v3862
        %v3864 = vsel %vm351, %v3837, 0.0
        %v3865 = vadd.f32 %v3863, %v3864
        %v3866 = vsel %vm351, %v3838, 0.0
        %v3867 = vadd.f32 %v3865, %v3866
        %v3868 = vsel %vm351, %v3839, 0.0
        %v3869 = vadd.f32 %v3867, %v3868
        %v3870 = vsel %vm351, %v3840, 0.0
        %v3871 = vadd.f32 %v3869, %v3870
        %3872 = vadd.xlane.f32.xlu0 %v3871
        %v3873 = vpop.xlane.xlu0 %3872
        %v3874 = vrot.slane %v3873, 4
        %v3875 = vadd.f32 %v3873, %v3874
        %v3876 = vrot.slane %v3875, 2
        %v3877 = vadd.f32 %v3875, %v3876
        %v3878 = vrot.slane %v3877, 1
        %v3879 = vadd.f32 %v3877, %v3878
        %s3880 = vtos %v3879
        %s3881 = smul.f32 %s3880, 0.00024414063
        %s3882 = ssub.f32 %s826, %s3881
        %v3883 = vstv %s3882
        %vm3884 = vcmask 0
        %3885 = vst.msk [vmem:[%s286] sm:$0x1] %vm3884, %v3883
        %p3886 = scmp.lt.s32.totalorder %s22, 1
        %s3887 = scalar_select %p3886, %s22, 1
        %s3888 = scalar_lea.vmem %s4, %s3887
        // Predicated region
        $region53: #{tpu_custom_call.1} parent=35 // pred_check
          %p3889 = pneg %p134
        $region54: #{tpu_custom_call.1} parent=35 // pred_check_branch
          %3891 = sbr.rel (%p3889) target = $region56
        $region55: #{tpu_custom_call.1} parent=35 // pred_region
          _
        $region56: #{tpu_custom_call.1} parent=35 // pred_fallthru
          _
      $region36: #{tpu_custom_call.1} parent=5 // pred_fallthru
        _
      %p3892 = scmp.le.s32.totalorder 2, %s17
      // Predicated region
      $region57: #{tpu_custom_call.1} parent=5 // pred_check
        %p3893 = pneg %p3892
      $region58: #{tpu_custom_call.1} parent=5 // pred_check_branch
        %3895 = sbr.rel (%p3893) target = $region60
      $region59: #{tpu_custom_call.1} parent=5 // pred_region
        %s3896 = ssub.s32 %s17, 2
        // Predicated region
        $region61: #{tpu_custom_call.1} parent=59 // pred_check
          %p3897 = pneg %p140
        $region62: #{tpu_custom_call.1} parent=59 // pred_check_branch
          %3899 = sbr.rel (%p3897) target = $region64
        $region63: #{tpu_custom_call.1} parent=59 // pred_region
          %p3900 = scmp.lt.s32.totalorder %s23, 1
          %s3901 = scalar_select %p3900, %s23, 1
          %s3902 = scalar_lea.vmem %s4, %s3901
        $region64: #{tpu_custom_call.1} parent=59 // pred_fallthru
          _
      $region60: #{tpu_custom_call.1} parent=5 // pred_fallthru
        _
    $region6: #{tpu_custom_call.1} parent=1 // loop_footer
      %s21 = sadd.s32 1, %s17
    $region7: #{tpu_custom_call.1} parent=1 // loop_footer_branch
      %16 = sbr.rel target = $region3
    $region8: #{tpu_custom_call.1} parent=1 // loop_exit
      _
    %3903 = vsyncpa [#allocation3], 1
    %s3904 = scalar_lea.sflag [#allocation3], 1
    %3905 = vsyncpa %s3904, 1
    %3906 = vsyncpa [#allocation5], 1
    %s3907 = scalar_lea.sflag [#allocation5], 1
    %3908 = vsyncpa %s3907, 1
    %3909 = vsyncpa [#allocation8], 1

</llo_original>
